<compile_context>
chip_gen: v6e
topology: v6e:2x2x1
jax: 0.10.0
libtpu: 0.0.40
codegen_flags: <defaults>
</compile_context>

<pallas_src>
import math
from functools import partial

import jax
import jax.numpy as jnp
from jax import lax
from jax.experimental import pallas as pl
from jax.experimental.pallas import tpu as pltpu

# ---------------- hyperparameters (small, consistent with the module) ----------
INPUT_SIZE = 16
HIDDEN_SIZE = 32
NUM_LAYERS = 2
NUM_HEADS = 4
BATCH = 2
SEQ = 8
BN_EPS = 1e-5

F = INPUT_SIZE
H = HIDDEN_SIZE
H3 = 3 * H

# ---- row offsets inside the packed 96-lane GRU/QKV slab (all 8-row aligned) ---
_OFF_WX0 = 0                    # (F, 3H)  layer-0 input weights (BN folded)
_OFF_WH0 = _OFF_WX0 + F         # (H, 3H)  layer-0 recurrent weights
_OFF_WX1 = _OFF_WH0 + H         # (H, 3H)
_OFF_WH1 = _OFF_WX1 + H         # (H, 3H)
_OFF_WQKV = _OFF_WH1 + H        # (H, 3H)  fused QKV (q-scale folded)
_OFF_BX0 = _OFF_WQKV + H        # 1 row each, 8-row aligned slots
_OFF_BH0 = _OFF_BX0 + 8
_OFF_BX1 = _OFF_BH0 + 8
_OFF_BH1 = _OFF_BX1 + 8
_OFF_BQKV = _OFF_BH1 + 8
_SLAB_ROWS = _OFF_BQKV + 8      # 184

# ---- row offsets inside the packed 32-lane attention-out / FC slab ------------
_OFF_WO = 0                     # (H, H)
_OFF_W1 = _OFF_WO + H           # (H, H)   cols [0:H//2] hold fc1 (BN folded)
_OFF_W2 = _OFF_W1 + H           # (H, H)   rows [0:H//2], col 0 hold fc2
_OFF_BO = _OFF_W2 + H
_OFF_B1 = _OFF_BO + 8
_OFF_B2 = _OFF_B1 + 8
_HEAD_ROWS = _OFF_B2 + 8        # 120


def _full_spec(shape):
    """Whole-array block for a rank-1 grid."""
    n = len(shape)
    return pl.BlockSpec(shape, lambda i, _n=n: (0,) * _n)


# ======================= fully fused forward kernel ===========================
def _fused_forward_kernel(x_ref, slab_ref, head_ref, out_ref, attnw_ref,
                          hs0_ref, hs1_ref, *, num_heads, seq, batch):
    S, B = seq, batch
    hd = H // num_heads

    # ------------- unpack the two packed weight slabs (static slices) ----------
    wx0 = slab_ref[_OFF_WX0:_OFF_WX0 + F, :]        # (F, 3H)
    wh0 = slab_ref[_OFF_WH0:_OFF_WH0 + H, :]        # (H, 3H)
    wx1 = slab_ref[_OFF_WX1:_OFF_WX1 + H, :]        # (H, 3H)
    wh1 = slab_ref[_OFF_WH1:_OFF_WH1 + H, :]        # (H, 3H)
    wqkv = slab_ref[_OFF_WQKV:_OFF_WQKV + H, :]     # (H, 3H)
    bx0 = slab_ref[_OFF_BX0:_OFF_BX0 + 1, :]
    bh0 = slab_ref[_OFF_BH0:_OFF_BH0 + 1, :]
    bx1 = slab_ref[_OFF_BX1:_OFF_BX1 + 1, :]
    bh1 = slab_ref[_OFF_BH1:_OFF_BH1 + 1, :]
    bqkv = slab_ref[_OFF_BQKV:_OFF_BQKV + 1, :]

    wo = head_ref[_OFF_WO:_OFF_WO + H, :]           # (H, H)
    w1p = head_ref[_OFF_W1:_OFF_W1 + H, :]          # (H, H) zero-padded cols
    w2p = head_ref[_OFF_W2:_OFF_W2 + H, :]          # (H, H) zero-padded
    bo = head_ref[_OFF_BO:_OFF_BO + 1, :]
    b1p = head_ref[_OFF_B1:_OFF_B1 + 1, :]
    b2p = head_ref[_OFF_B2:_OFF_B2 + 1, :]

    # -------------------- 2-layer GRU, recurrence unrolled ---------------------
    # Input projection for all timesteps = ONE lane-dense matmul per layer.
    # Per step: ONE recurrent matmul (B,H)@(H,3H) + one fused r/z sigmoid.
    def run_gru_layer(x_flat, wx, bx, wh, bh, store):
        gx = jnp.dot(x_flat, wx, preferred_element_type=jnp.float32) + bx  # (S*B,3H)
        h = jnp.zeros((B, H), jnp.float32)
        for t in range(S):                       # static unroll, serial chain
            gxt = gx[t * B:(t + 1) * B, :]       # (B, 3H)
            gh = jnp.dot(h, wh, preferred_element_type=jnp.float32) + bh
            rz = jax.nn.sigmoid(gxt[:, 0:2 * H] + gh[:, 0:2 * H])   # fused r|z
            r = rz[:, 0:H]
            z = rz[:, H:2 * H]
            n = jnp.tanh(gxt[:, 2 * H:] + r * gh[:, 2 * H:])
            h = (1.0 - z) * n + z * h
            store(t, h)

    def store0(t, h):                            # time-major flat (S*B, H)
        hs0_ref[t * B:(t + 1) * B, :] = h

    def store1(t, h):                            # batch-major (B, S, H)
        hs1_ref[:, t:t + 1, :] = h.reshape(B, 1, H)

    # TODO(synk): inter-layer GRU dropout / attention dropout / fc dropout are
    # training-only; identity in eval mode.
    run_gru_layer(x_ref[...], wx0, bx0, wh0, bh0, store0)       # layer 0
    run_gru_layer(hs0_ref[...], wx1, bx1, wh1, bh1, store1)     # layer 1

    # --------- multi-head self-attention (weights averaged over heads) ---------
    hs_all = hs1_ref[...]                                        # (B, S, H)
    qkv_flat = jnp.dot(hs_all.reshape(B * S, H), wqkv,
                       preferred_element_type=jnp.float32) + bqkv  # (B*S, 3H)
    qkv = qkv_flat.reshape(B, S, H3)

    lane = lax.broadcasted_iota(jnp.int32, (1, H), 1)
    inv_heads = 1.0 / num_heads
    attnw_blocks = []
    ctx_rows = []
    for b in range(B):                            # B = 2, static unroll
        qkv_b = qkv[b]                            # (S, 3H)
        q = qkv_b[:, 0:H]                         # 1/sqrt(hd) already folded in
        k = qkv_b[:, H:2 * H]
        v = qkv_b[:, 2 * H:3 * H]
        w_acc = jnp.zeros((S, S), jnp.float32)
        ctx = jnp.zeros((1, H), jnp.float32)
        for hi in range(num_heads):               # full-width masked heads
            m = jnp.where((lane >= hi * hd) & (lane < (hi + 1) * hd), 1.0, 0.0)
            sc = lax.dot_general(q * m, k, (((1,), (1,)), ((), ())),
                                 preferred_element_type=jnp.float32)   # (S, S)
            sc = sc - jnp.max(sc, axis=-1, keepdims=True)
            e = jnp.exp(sc)
            p = e * pl.reciprocal(jnp.sum(e, axis=-1, keepdims=True), approx=True)
            w_acc = w_acc + p
            # only the last query row feeds the classifier head
            ctx = ctx + jnp.dot(p[S - 1:S, :], v * m,
                                preferred_element_type=jnp.float32)    # (1, H)
        attnw_blocks.append(w_acc * inv_heads)
        ctx_rows.append(ctx)

    attnw_ref[...] = jnp.stack(attnw_blocks, axis=0)             # (B, S, S)
    ctx_all = jnp.concatenate(ctx_rows, axis=0)                  # (B, H)

    # ------------- classifier head (fc BatchNorm folded into w1/b1) ------------
    attn_last = jnp.dot(ctx_all, wo, preferred_element_type=jnp.float32) + bo
    h1 = jnp.maximum(
        jnp.dot(attn_last, w1p, preferred_element_type=jnp.float32) + b1p, 0.0)
    out_full = jnp.dot(h1, w2p, preferred_element_type=jnp.float32) + b2p
    out_ref[...] = out_full[:, 0:1]


# ============================== parameters =====================================
def init_params(key):
    keys = iter(jax.random.split(key, 24))

    def u(k, shape, bound):
        return jax.random.uniform(k, shape, jnp.float32, -bound, bound)

    p = {}
    # input BatchNorm1d (eval-mode running stats)
    p["bn1_gamma"] = 1.0 + 0.1 * jax.random.normal(next(keys), (INPUT_SIZE,), jnp.float32)
    p["bn1_beta"] = 0.1 * jax.random.normal(next(keys), (INPUT_SIZE,), jnp.float32)
    p["bn1_mean"] = 0.1 * jax.random.normal(next(keys), (INPUT_SIZE,), jnp.float32)
    p["bn1_var"] = 0.5 + jax.random.uniform(next(keys), (INPUT_SIZE,), jnp.float32)

    kg = 1.0 / math.sqrt(HIDDEN_SIZE)
    for l in range(NUM_LAYERS):
        d_in = INPUT_SIZE if l == 0 else HIDDEN_SIZE
        p[f"gru_w_ih_{l}"] = u(next(keys), (3 * HIDDEN_SIZE, d_in), kg)
        p[f"gru_w_hh_{l}"] = u(next(keys), (3 * HIDDEN_SIZE, HIDDEN_SIZE), kg)
        p[f"gru_b_ih_{l}"] = u(next(keys), (3 * HIDDEN_SIZE,), kg)
        p[f"gru_b_hh_{l}"] = u(next(keys), (3 * HIDDEN_SIZE,), kg)

    ka = 1.0 / math.sqrt(HIDDEN_SIZE)
    p["attn_in_w"] = u(next(keys), (3 * HIDDEN_SIZE, HIDDEN_SIZE), ka)
    p["attn_in_b"] = u(next(keys), (3 * HIDDEN_SIZE,), ka)
    p["attn_out_w"] = u(next(keys), (HIDDEN_SIZE, HIDDEN_SIZE), ka)
    p["attn_out_b"] = u(next(keys), (HIDDEN_SIZE,), ka)

    # fc BatchNorm1d (eval-mode running stats)
    p["bn2_gamma"] = 1.0 + 0.1 * jax.random.normal(next(keys), (HIDDEN_SIZE,), jnp.float32)
    p["bn2_beta"] = 0.1 * jax.random.normal(next(keys), (HIDDEN_SIZE,), jnp.float32)
    p["bn2_mean"] = 0.1 * jax.random.normal(next(keys), (HIDDEN_SIZE,), jnp.float32)
    p["bn2_var"] = 0.5 + jax.random.uniform(next(keys), (HIDDEN_SIZE,), jnp.float32)

    p["fc1_w"] = u(next(keys), (HIDDEN_SIZE // 2, HIDDEN_SIZE), kg)
    p["fc1_b"] = u(next(keys), (HIDDEN_SIZE // 2,), kg)
    kf = 1.0 / math.sqrt(HIDDEN_SIZE // 2)
    p["fc2_w"] = u(next(keys), (1, HIDDEN_SIZE // 2), kf)
    p["fc2_b"] = u(next(keys), (1,), kf)
    return p


# ============================== full forward ===================================
def forward(params, x):
    B, S, _ = x.shape
    assert NUM_LAYERS == 2  # kernel is structured for the module's 2 GRU layers

    # ---- fold eval-mode BatchNorm1d (input) into layer-0 GRU input weights ----
    scale1 = params["bn1_gamma"] / jnp.sqrt(params["bn1_var"] + BN_EPS)
    shift1 = params["bn1_beta"] - params["bn1_mean"] * scale1

    def gru_layer_mats(l, fold_scale=None, fold_shift=None):
        wx = params[f"gru_w_ih_{l}"].T          # (D, 3H), columns r|z|n
        bx = params[f"gru_b_ih_{l}"]            # (3H,)
        if fold_scale is not None:              # BN fold: (x*s+t)@W
            bx = bx + fold_shift @ wx
            wx = fold_scale[:, None] * wx
        wh = params[f"gru_w_hh_{l}"].T          # (H, 3H)
        bh = params[f"gru_b_hh_{l}"]            # (3H,)
        return wx, bx.reshape(1, H3), wh, bh.reshape(1, H3)

    wx0, bx0, wh0, bh0 = gru_layer_mats(0, scale1, shift1)
    wx1, bx1, wh1, bh1 = gru_layer_mats(1)

    # ---- fused QKV, pre-transposed, with 1/sqrt(head_dim) folded into Q -------
    hd = H // NUM_HEADS
    qscale = 1.0 / math.sqrt(hd)
    wqkv = params["attn_in_w"].T                          # (H, 3H) q|k|v
    wqkv = wqkv.at[:, 0:H].multiply(qscale)
    bqkv = params["attn_in_b"].at[0:H].multiply(qscale).reshape(1, H3)
    wo = params["attn_out_w"].T                           # (H, H)
    bo = params["attn_out_b"]                             # (H,)

    # ---- fold eval-mode BatchNorm1d (fc) into fc1 ------------------------------
    scale2 = params["bn2_gamma"] / jnp.sqrt(params["bn2_var"] + BN_EPS)
    shift2 = params["bn2_beta"] - params["bn2_mean"] * scale2
    w1t = params["fc1_w"].T                               # (H, H//2)
    b1 = params["fc1_b"] + shift2 @ w1t                   # (H//2,)
    w1 = scale2[:, None] * w1t                            # (H, H//2)
    w2 = params["fc2_w"].T                                # (H//2, 1)
    b2 = params["fc2_b"]                                  # (1,)

    # ---- pack everything into two lane-dense slabs (3 input DMAs incl. x) -----
    slab = jnp.zeros((_SLAB_ROWS, H3), jnp.float32)
    slab = slab.at[_OFF_WX0:_OFF_WX0 + F, :].set(wx0)
    slab = slab.at[_OFF_WH0:_OFF_WH0 + H, :].set(wh0)
    slab = slab.at[_OFF_WX1:_OFF_WX1 + H, :].set(wx1)
    slab = slab.at[_OFF_WH1:_OFF_WH1 + H, :].set(wh1)
    slab = slab.at[_OFF_WQKV:_OFF_WQKV + H, :].set(wqkv)
    slab = slab.at[_OFF_BX0, :].set(bx0[0])
    slab = slab.at[_OFF_BH0, :].set(bh0[0])
    slab = slab.at[_OFF_BX1, :].set(bx1[0])
    slab = slab.at[_OFF_BH1, :].set(bh1[0])
    slab = slab.at[_OFF_BQKV, :].set(bqkv[0])

    head = jnp.zeros((_HEAD_ROWS, H), jnp.float32)
    head = head.at[_OFF_WO:_OFF_WO + H, :].set(wo)
    head = head.at[_OFF_W1:_OFF_W1 + H, 0:H // 2].set(w1)
    head = head.at[_OFF_W2:_OFF_W2 + H // 2, 0:1].set(w2)
    head = head.at[_OFF_BO, :].set(bo)
    head = head.at[_OFF_B1, 0:H // 2].set(b1)
    head = head.at[_OFF_B2, 0].set(b2[0])

    # time-major flattened input (S*B, F); input BN is folded into wx0/bx0.
    x_flat = jnp.transpose(x, (1, 0, 2)).reshape(S * B, F)

    out, attn_w = pl.pallas_call(
        partial(_fused_forward_kernel, num_heads=NUM_HEADS, seq=S, batch=B),
        grid=(1,),
        out_shape=(jax.ShapeDtypeStruct((B, 1), jnp.float32),
                   jax.ShapeDtypeStruct((B, S, S), jnp.float32)),
        in_specs=[_full_spec(x_flat.shape),
                  _full_spec(slab.shape),
                  _full_spec(head.shape)],
        out_specs=(_full_spec((B, 1)), _full_spec((B, S, S))),
        scratch_shapes=[pltpu.VMEM((S * B, H), jnp.float32),   # layer-0 outputs
                        pltpu.VMEM((B, S, H), jnp.float32)],   # layer-1 outputs
        compiler_params=pltpu.CompilerParams(dimension_semantics=("arbitrary",)),
    )(x_flat, slab, head)
    return out[:, 0], attn_w


# ====================== pure-JAX reference (correctness) =======================
def _ref_gru_layer(x, w_ih, w_hh, b_ih, b_hh):
    B, S, D = x.shape
    Hh = w_hh.shape[1]

    def step(h, x_t):
        gx = x_t @ w_ih.T + b_ih
        gh = h @ w_hh.T + b_hh
        r = jax.nn.sigmoid(gx[:, :Hh] + gh[:, :Hh])
        z = jax.nn.sigmoid(gx[:, Hh:2 * Hh] + gh[:, Hh:2 * Hh])
        n = jnp.tanh(gx[:, 2 * Hh:] + r * gh[:, 2 * Hh:])
        h_new = (1.0 - z) * n + z * h
        return h_new, h_new

    _, hs = lax.scan(step, jnp.zeros((B, Hh), jnp.float32), jnp.transpose(x, (1, 0, 2)))
    return jnp.transpose(hs, (1, 0, 2))


def reference_forward(params, x):
    B, S, _ = x.shape
    Hh = HIDDEN_SIZE
    scale1 = params["bn1_gamma"] / jnp.sqrt(params["bn1_var"] + BN_EPS)
    shift1 = params["bn1_beta"] - params["bn1_mean"] * scale1
    h = x * scale1 + shift1
    for l in range(NUM_LAYERS):
        h = _ref_gru_layer(h, params[f"gru_w_ih_{l}"], params[f"gru_w_hh_{l}"],
                           params[f"gru_b_ih_{l}"], params[f"gru_b_hh_{l}"])
    wq, wk, wv = (params["attn_in_w"][0:Hh], params["attn_in_w"][Hh:2 * Hh],
                  params["attn_in_w"][2 * Hh:3 * Hh])
    bq, bk, bv = (params["attn_in_b"][0:Hh], params["attn_in_b"][Hh:2 * Hh],
                  params["attn_in_b"][2 * Hh:3 * Hh])
    hd = Hh // NUM_HEADS
    q = (h @ wq.T + bq).reshape(B, S, NUM_HEADS, hd).transpose(0, 2, 1, 3) / math.sqrt(hd)
    k = (h @ wk.T + bk).reshape(B, S, NUM_HEADS, hd).transpose(0, 2, 1, 3)
    v = (h @ wv.T + bv).reshape(B, S, NUM_HEADS, hd).transpose(0, 2, 1, 3)
    s = jnp.einsum("bhqd,bhkd->bhqk", q, k)
    p = jax.nn.softmax(s, axis=-1)
    ctx = jnp.einsum("bhqk,bhkd->bhqd", p, v).transpose(0, 2, 1, 3).reshape(B, S, Hh)
    attn_out = ctx @ params["attn_out_w"].T + params["attn_out_b"]
    context = attn_out[:, -1, :]
    scale2 = params["bn2_gamma"] / jnp.sqrt(params["bn2_var"] + BN_EPS)
    shift2 = params["bn2_beta"] - params["bn2_mean"] * scale2
    c = context * scale2 + shift2
    h1 = jnp.maximum(c @ params["fc1_w"].T + params["fc1_b"], 0.0)
    out = h1 @ params["fc2_w"].T + params["fc2_b"]
    return out[:, 0], p.mean(axis=1)


# ==================================== main =====================================
if __name__ == "__main__":
    key = jax.random.PRNGKey(0)
    pkey, xkey = jax.random.split(key)
    params = init_params(pkey)
    x = jax.random.normal(xkey, (BATCH, SEQ, INPUT_SIZE), jnp.float32)

    fwd = jax.jit(forward)
    out, attn_w = fwd(params, x)
    jax.block_until_ready((out, attn_w))

    assert out.shape == (BATCH,)
    assert attn_w.shape == (BATCH, SEQ, SEQ)

    with jax.default_matmul_precision("highest"):
        ref_out, ref_w = reference_forward(params, x)
    jax.block_until_ready((ref_out, ref_w))

    assert jnp.allclose(out, ref_out, atol=5e-3, rtol=5e-3)
    assert jnp.allclose(attn_w, ref_w, atol=5e-3, rtol=5e-3)

    print("KERNEL_OK")
</pallas_src>

<mosaic_0001>
module attributes {stable_mosaic.version = 11 : i64} {
  func.func @_fused_forward_kernel(%arg0: i32, %arg1: memref<16x16xf32, #tpu.memory_space<vmem>>, %arg2: memref<184x96xf32, #tpu.memory_space<vmem>>, %arg3: memref<120x32xf32, #tpu.memory_space<vmem>>, %arg4: memref<2x1xf32, #tpu.memory_space<vmem>>, %arg5: memref<2x8x8xf32, #tpu.memory_space<vmem>>, %arg6: memref<16x32xf32, #tpu.memory_space<vmem>>, %arg7: memref<2x8x32xf32, #tpu.memory_space<vmem>>) attributes {dimension_semantics = [#tpu.dimension_semantics<arbitrary>], iteration_bounds = array<i64: 1>, scalar_prefetch = 0 : i64, scratch_operands = 2 : i64, tpu.core_type = #tpu.core_type<tc>, window_params = [{pipeline_mode = #tpu.pipeline_mode<synchronous>, transform_indices = @transform_0, window_bounds = array<i64: 16, 16>}, {pipeline_mode = #tpu.pipeline_mode<synchronous>, transform_indices = @transform_1, window_bounds = array<i64: 184, 96>}, {pipeline_mode = #tpu.pipeline_mode<synchronous>, transform_indices = @transform_2, window_bounds = array<i64: 120, 32>}, {pipeline_mode = #tpu.pipeline_mode<synchronous>, transform_indices = @transform_3, window_bounds = array<i64: 2, 1>}, {pipeline_mode = #tpu.pipeline_mode<synchronous>, transform_indices = @transform_4, window_bounds = array<i64: 2, 8, 8>}]} {
    %c0 = arith.constant 0 : index
    %c0_0 = arith.constant 0 : index
    %0 = vector.load %arg2[%c0, %c0_0] : memref<184x96xf32, #tpu.memory_space<vmem>>, vector<16x96xf32>
    %c16 = arith.constant 16 : index
    %c0_1 = arith.constant 0 : index
    %1 = vector.load %arg2[%c16, %c0_1] : memref<184x96xf32, #tpu.memory_space<vmem>>, vector<32x96xf32>
    %c48 = arith.constant 48 : index
    %c0_2 = arith.constant 0 : index
    %2 = vector.load %arg2[%c48, %c0_2] : memref<184x96xf32, #tpu.memory_space<vmem>>, vector<32x96xf32>
    %c80 = arith.constant 80 : index
    %c0_3 = arith.constant 0 : index
    %3 = vector.load %arg2[%c80, %c0_3] : memref<184x96xf32, #tpu.memory_space<vmem>>, vector<32x96xf32>
    %c112 = arith.constant 112 : index
    %c0_4 = arith.constant 0 : index
    %4 = vector.load %arg2[%c112, %c0_4] : memref<184x96xf32, #tpu.memory_space<vmem>>, vector<32x96xf32>
    %c144 = arith.constant 144 : index
    %c0_5 = arith.constant 0 : index
    %5 = vector.load %arg2[%c144, %c0_5] : memref<184x96xf32, #tpu.memory_space<vmem>>, vector<1x96xf32>
    %c152 = arith.constant 152 : index
    %c0_6 = arith.constant 0 : index
    %6 = vector.load %arg2[%c152, %c0_6] : memref<184x96xf32, #tpu.memory_space<vmem>>, vector<1x96xf32>
    %c160 = arith.constant 160 : index
    %c0_7 = arith.constant 0 : index
    %7 = vector.load %arg2[%c160, %c0_7] : memref<184x96xf32, #tpu.memory_space<vmem>>, vector<1x96xf32>
    %c168 = arith.constant 168 : index
    %c0_8 = arith.constant 0 : index
    %8 = vector.load %arg2[%c168, %c0_8] : memref<184x96xf32, #tpu.memory_space<vmem>>, vector<1x96xf32>
    %c176 = arith.constant 176 : index
    %c0_9 = arith.constant 0 : index
    %9 = vector.load %arg2[%c176, %c0_9] : memref<184x96xf32, #tpu.memory_space<vmem>>, vector<1x96xf32>
    %c0_10 = arith.constant 0 : index
    %c0_11 = arith.constant 0 : index
    %10 = vector.load %arg3[%c0_10, %c0_11] : memref<120x32xf32, #tpu.memory_space<vmem>>, vector<32x32xf32>
    %c32 = arith.constant 32 : index
    %c0_12 = arith.constant 0 : index
    %11 = vector.load %arg3[%c32, %c0_12] : memref<120x32xf32, #tpu.memory_space<vmem>>, vector<32x32xf32>
    %c64 = arith.constant 64 : index
    %c0_13 = arith.constant 0 : index
    %12 = vector.load %arg3[%c64, %c0_13] : memref<120x32xf32, #tpu.memory_space<vmem>>, vector<32x32xf32>
    %c96 = arith.constant 96 : index
    %c0_14 = arith.constant 0 : index
    %13 = vector.load %arg3[%c96, %c0_14] : memref<120x32xf32, #tpu.memory_space<vmem>>, vector<1x32xf32>
    %c104 = arith.constant 104 : index
    %c0_15 = arith.constant 0 : index
    %14 = vector.load %arg3[%c104, %c0_15] : memref<120x32xf32, #tpu.memory_space<vmem>>, vector<1x32xf32>
    %c112_16 = arith.constant 112 : index
    %c0_17 = arith.constant 0 : index
    %15 = vector.load %arg3[%c112_16, %c0_17] : memref<120x32xf32, #tpu.memory_space<vmem>>, vector<1x32xf32>
    %c0_18 = arith.constant 0 : index
    %c0_19 = arith.constant 0 : index
    %16 = vector.load %arg1[%c0_18, %c0_19] : memref<16x16xf32, #tpu.memory_space<vmem>>, vector<16x16xf32>
    %cst = arith.constant dense<0.000000e+00> : vector<16x96xf32>
    %17 = tpu.matmul %16, %0, %cst {dimension_numbers = #tpu.dot_dimension_numbers<[1], [0], [0], [1], [0, 0, 1, 1], [], []>} : vector<16x16xf32>, vector<16x96xf32>, vector<16x96xf32> -> vector<16x96xf32>
    %18 = vector.broadcast %5 : vector<1x96xf32> to vector<16x96xf32>
    %19 = arith.addf %17, %18 : vector<16x96xf32>
    %cst_20 = arith.constant 0.000000e+00 : f32
    %20 = vector.broadcast %cst_20 : f32 to vector<2x32xf32>
    %21 = vector.extract_strided_slice %19 {offsets = [0, 0], sizes = [2, 96], strides = [1, 1]} : vector<16x96xf32> to vector<2x96xf32>
    %cst_21 = arith.constant dense<0.000000e+00> : vector<2x96xf32>
    %22 = tpu.matmul %20, %1, %cst_21 {dimension_numbers = #tpu.dot_dimension_numbers<[1], [0], [0], [1], [0, 0, 1, 1], [], []>} : vector<2x32xf32>, vector<32x96xf32>, vector<2x96xf32> -> vector<2x96xf32>
    %23 = vector.broadcast %6 : vector<1x96xf32> to vector<2x96xf32>
    %24 = arith.addf %22, %23 : vector<2x96xf32>
    %25 = vector.extract_strided_slice %21 {offsets = [0, 0], sizes = [2, 64], strides = [1, 1]} : vector<2x96xf32> to vector<2x64xf32>
    %26 = vector.extract_strided_slice %24 {offsets = [0, 0], sizes = [2, 64], strides = [1, 1]} : vector<2x96xf32> to vector<2x64xf32>
    %27 = arith.addf %25, %26 : vector<2x64xf32>
    %28 = arith.negf %27 : vector<2x64xf32>
    %29 = math.exp %28 : vector<2x64xf32>
    %cst_22 = arith.constant 1.000000e+00 : f32
    %30 = vector.broadcast %cst_22 : f32 to vector<2x64xf32>
    %31 = arith.addf %30, %29 : vector<2x64xf32>
    %32 = arith.divf %30, %31 : vector<2x64xf32>
    %33 = vector.extract_strided_slice %32 {offsets = [0, 0], sizes = [2, 32], strides = [1, 1]} : vector<2x64xf32> to vector<2x32xf32>
    %34 = vector.extract_strided_slice %32 {offsets = [0, 32], sizes = [2, 32], strides = [1, 1]} : vector<2x64xf32> to vector<2x32xf32>
    %35 = vector.extract_strided_slice %21 {offsets = [0, 64], sizes = [2, 32], strides = [1, 1]} : vector<2x96xf32> to vector<2x32xf32>
    %36 = vector.extract_strided_slice %24 {offsets = [0, 64], sizes = [2, 32], strides = [1, 1]} : vector<2x96xf32> to vector<2x32xf32>
    %37 = arith.mulf %33, %36 : vector<2x32xf32>
    %38 = arith.addf %35, %37 : vector<2x32xf32>
    %39 = math.tanh %38 : vector<2x32xf32>
    %cst_23 = arith.constant 1.000000e+00 : f32
    %40 = vector.broadcast %cst_23 : f32 to vector<2x32xf32>
    %41 = arith.subf %40, %34 : vector<2x32xf32>
    %42 = arith.mulf %41, %39 : vector<2x32xf32>
    %43 = arith.mulf %34, %20 : vector<2x32xf32>
    %44 = arith.addf %42, %43 : vector<2x32xf32>
    %c0_24 = arith.constant 0 : index
    %c0_25 = arith.constant 0 : index
    %45 = vector.load %arg6[%c0_24, %c0_25] : memref<16x32xf32, #tpu.memory_space<vmem>>, vector<2x32xf32>
    tpu.vector_store %arg6[%c0_24, %c0_25], %44 {strides = array<i32>} : memref<16x32xf32, #tpu.memory_space<vmem>>, vector<2x32xf32>,
    %46 = vector.extract_strided_slice %19 {offsets = [2, 0], sizes = [2, 96], strides = [1, 1]} : vector<16x96xf32> to vector<2x96xf32>
    %cst_26 = arith.constant dense<0.000000e+00> : vector<2x96xf32>
    %47 = tpu.matmul %44, %1, %cst_26 {dimension_numbers = #tpu.dot_dimension_numbers<[1], [0], [0], [1], [0, 0, 1, 1], [], []>} : vector<2x32xf32>, vector<32x96xf32>, vector<2x96xf32> -> vector<2x96xf32>
    %48 = vector.broadcast %6 : vector<1x96xf32> to vector<2x96xf32>
    %49 = arith.addf %47, %48 : vector<2x96xf32>
    %50 = vector.extract_strided_slice %46 {offsets = [0, 0], sizes = [2, 64], strides = [1, 1]} : vector<2x96xf32> to vector<2x64xf32>
    %51 = vector.extract_strided_slice %49 {offsets = [0, 0], sizes = [2, 64], strides = [1, 1]} : vector<2x96xf32> to vector<2x64xf32>
    %52 = arith.addf %50, %51 : vector<2x64xf32>
    %53 = arith.negf %52 : vector<2x64xf32>
    %54 = math.exp %53 : vector<2x64xf32>
    %cst_27 = arith.constant 1.000000e+00 : f32
    %55 = vector.broadcast %cst_27 : f32 to vector<2x64xf32>
    %56 = arith.addf %55, %54 : vector<2x64xf32>
    %57 = arith.divf %55, %56 : vector<2x64xf32>
    %58 = vector.extract_strided_slice %57 {offsets = [0, 0], sizes = [2, 32], strides = [1, 1]} : vector<2x64xf32> to vector<2x32xf32>
    %59 = vector.extract_strided_slice %57 {offsets = [0, 32], sizes = [2, 32], strides = [1, 1]} : vector<2x64xf32> to vector<2x32xf32>
    %60 = vector.extract_strided_slice %46 {offsets = [0, 64], sizes = [2, 32], strides = [1, 1]} : vector<2x96xf32> to vector<2x32xf32>
    %61 = vector.extract_strided_slice %49 {offsets = [0, 64], sizes = [2, 32], strides = [1, 1]} : vector<2x96xf32> to vector<2x32xf32>
    %62 = arith.mulf %58, %61 : vector<2x32xf32>
    %63 = arith.addf %60, %62 : vector<2x32xf32>
    %64 = math.tanh %63 : vector<2x32xf32>
    %cst_28 = arith.constant 1.000000e+00 : f32
    %65 = vector.broadcast %cst_28 : f32 to vector<2x32xf32>
    %66 = arith.subf %65, %59 : vector<2x32xf32>
    %67 = arith.mulf %66, %64 : vector<2x32xf32>
    %68 = arith.mulf %59, %44 : vector<2x32xf32>
    %69 = arith.addf %67, %68 : vector<2x32xf32>
    %c2 = arith.constant 2 : index
    %c0_29 = arith.constant 0 : index
    %70 = vector.load %arg6[%c2, %c0_29] : memref<16x32xf32, #tpu.memory_space<vmem>>, vector<2x32xf32>
    tpu.vector_store %arg6[%c2, %c0_29], %69 {strides = array<i32>} : memref<16x32xf32, #tpu.memory_space<vmem>>, vector<2x32xf32>,
    %71 = vector.extract_strided_slice %19 {offsets = [4, 0], sizes = [2, 96], strides = [1, 1]} : vector<16x96xf32> to vector<2x96xf32>
    %cst_30 = arith.constant dense<0.000000e+00> : vector<2x96xf32>
    %72 = tpu.matmul %69, %1, %cst_30 {dimension_numbers = #tpu.dot_dimension_numbers<[1], [0], [0], [1], [0, 0, 1, 1], [], []>} : vector<2x32xf32>, vector<32x96xf32>, vector<2x96xf32> -> vector<2x96xf32>
    %73 = vector.broadcast %6 : vector<1x96xf32> to vector<2x96xf32>
    %74 = arith.addf %72, %73 : vector<2x96xf32>
    %75 = vector.extract_strided_slice %71 {offsets = [0, 0], sizes = [2, 64], strides = [1, 1]} : vector<2x96xf32> to vector<2x64xf32>
    %76 = vector.extract_strided_slice %74 {offsets = [0, 0], sizes = [2, 64], strides = [1, 1]} : vector<2x96xf32> to vector<2x64xf32>
    %77 = arith.addf %75, %76 : vector<2x64xf32>
    %78 = arith.negf %77 : vector<2x64xf32>
    %79 = math.exp %78 : vector<2x64xf32>
    %cst_31 = arith.constant 1.000000e+00 : f32
    %80 = vector.broadcast %cst_31 : f32 to vector<2x64xf32>
    %81 = arith.addf %80, %79 : vector<2x64xf32>
    %82 = arith.divf %80, %81 : vector<2x64xf32>
    %83 = vector.extract_strided_slice %82 {offsets = [0, 0], sizes = [2, 32], strides = [1, 1]} : vector<2x64xf32> to vector<2x32xf32>
    %84 = vector.extract_strided_slice %82 {offsets = [0, 32], sizes = [2, 32], strides = [1, 1]} : vector<2x64xf32> to vector<2x32xf32>
    %85 = vector.extract_strided_slice %71 {offsets = [0, 64], sizes = [2, 32], strides = [1, 1]} : vector<2x96xf32> to vector<2x32xf32>
    %86 = vector.extract_strided_slice %74 {offsets = [0, 64], sizes = [2, 32], strides = [1, 1]} : vector<2x96xf32> to vector<2x32xf32>
    %87 = arith.mulf %83, %86 : vector<2x32xf32>
    %88 = arith.addf %85, %87 : vector<2x32xf32>
    %89 = math.tanh %88 : vector<2x32xf32>
    %cst_32 = arith.constant 1.000000e+00 : f32
    %90 = vector.broadcast %cst_32 : f32 to vector<2x32xf32>
    %91 = arith.subf %90, %84 : vector<2x32xf32>
    %92 = arith.mulf %91, %89 : vector<2x32xf32>
    %93 = arith.mulf %84, %69 : vector<2x32xf32>
    %94 = arith.addf %92, %93 : vector<2x32xf32>
    %c4 = arith.constant 4 : index
    %c0_33 = arith.constant 0 : index
    %95 = vector.load %arg6[%c4, %c0_33] : memref<16x32xf32, #tpu.memory_space<vmem>>, vector<2x32xf32>
    tpu.vector_store %arg6[%c4, %c0_33], %94 {strides = array<i32>} : memref<16x32xf32, #tpu.memory_space<vmem>>, vector<2x32xf32>,
    %96 = vector.extract_strided_slice %19 {offsets = [6, 0], sizes = [2, 96], strides = [1, 1]} : vector<16x96xf32> to vector<2x96xf32>
    %cst_34 = arith.constant dense<0.000000e+00> : vector<2x96xf32>
    %97 = tpu.matmul %94, %1, %cst_34 {dimension_numbers = #tpu.dot_dimension_numbers<[1], [0], [0], [1], [0, 0, 1, 1], [], []>} : vector<2x32xf32>, vector<32x96xf32>, vector<2x96xf32> -> vector<2x96xf32>
    %98 = vector.broadcast %6 : vector<1x96xf32> to vector<2x96xf32>
    %99 = arith.addf %97, %98 : vector<2x96xf32>
    %100 = vector.extract_strided_slice %96 {offsets = [0, 0], sizes = [2, 64], strides = [1, 1]} : vector<2x96xf32> to vector<2x64xf32>
    %101 = vector.extract_strided_slice %99 {offsets = [0, 0], sizes = [2, 64], strides = [1, 1]} : vector<2x96xf32> to vector<2x64xf32>
    %102 = arith.addf %100, %101 : vector<2x64xf32>
    %103 = arith.negf %102 : vector<2x64xf32>
    %104 = math.exp %103 : vector<2x64xf32>
    %cst_35 = arith.constant 1.000000e+00 : f32
    %105 = vector.broadcast %cst_35 : f32 to vector<2x64xf32>
    %106 = arith.addf %105, %104 : vector<2x64xf32>
    %107 = arith.divf %105, %106 : vector<2x64xf32>
    %108 = vector.extract_strided_slice %107 {offsets = [0, 0], sizes = [2, 32], strides = [1, 1]} : vector<2x64xf32> to vector<2x32xf32>
    %109 = vector.extract_strided_slice %107 {offsets = [0, 32], sizes = [2, 32], strides = [1, 1]} : vector<2x64xf32> to vector<2x32xf32>
    %110 = vector.extract_strided_slice %96 {offsets = [0, 64], sizes = [2, 32], strides = [1, 1]} : vector<2x96xf32> to vector<2x32xf32>
    %111 = vector.extract_strided_slice %99 {offsets = [0, 64], sizes = [2, 32], strides = [1, 1]} : vector<2x96xf32> to vector<2x32xf32>
    %112 = arith.mulf %108, %111 : vector<2x32xf32>
    %113 = arith.addf %110, %112 : vector<2x32xf32>
    %114 = math.tanh %113 : vector<2x32xf32>
    %cst_36 = arith.constant 1.000000e+00 : f32
    %115 = vector.broadcast %cst_36 : f32 to vector<2x32xf32>
    %116 = arith.subf %115, %109 : vector<2x32xf32>
    %117 = arith.mulf %116, %114 : vector<2x32xf32>
    %118 = arith.mulf %109, %94 : vector<2x32xf32>
    %119 = arith.addf %117, %118 : vector<2x32xf32>
    %c6 = arith.constant 6 : index
    %c0_37 = arith.constant 0 : index
    %120 = vector.load %arg6[%c6, %c0_37] : memref<16x32xf32, #tpu.memory_space<vmem>>, vector<2x32xf32>
    tpu.vector_store %arg6[%c6, %c0_37], %119 {strides = array<i32>} : memref<16x32xf32, #tpu.memory_space<vmem>>, vector<2x32xf32>,
    %121 = vector.extract_strided_slice %19 {offsets = [8, 0], sizes = [2, 96], strides = [1, 1]} : vector<16x96xf32> to vector<2x96xf32>
    %cst_38 = arith.constant dense<0.000000e+00> : vector<2x96xf32>
    %122 = tpu.matmul %119, %1, %cst_38 {dimension_numbers = #tpu.dot_dimension_numbers<[1], [0], [0], [1], [0, 0, 1, 1], [], []>} : vector<2x32xf32>, vector<32x96xf32>, vector<2x96xf32> -> vector<2x96xf32>
    %123 = vector.broadcast %6 : vector<1x96xf32> to vector<2x96xf32>
    %124 = arith.addf %122, %123 : vector<2x96xf32>
    %125 = vector.extract_strided_slice %121 {offsets = [0, 0], sizes = [2, 64], strides = [1, 1]} : vector<2x96xf32> to vector<2x64xf32>
    %126 = vector.extract_strided_slice %124 {offsets = [0, 0], sizes = [2, 64], strides = [1, 1]} : vector<2x96xf32> to vector<2x64xf32>
    %127 = arith.addf %125, %126 : vector<2x64xf32>
    %128 = arith.negf %127 : vector<2x64xf32>
    %129 = math.exp %128 : vector<2x64xf32>
    %cst_39 = arith.constant 1.000000e+00 : f32
    %130 = vector.broadcast %cst_39 : f32 to vector<2x64xf32>
    %131 = arith.addf %130, %129 : vector<2x64xf32>
    %132 = arith.divf %130, %131 : vector<2x64xf32>
    %133 = vector.extract_strided_slice %132 {offsets = [0, 0], sizes = [2, 32], strides = [1, 1]} : vector<2x64xf32> to vector<2x32xf32>
    %134 = vector.extract_strided_slice %132 {offsets = [0, 32], sizes = [2, 32], strides = [1, 1]} : vector<2x64xf32> to vector<2x32xf32>
    %135 = vector.extract_strided_slice %121 {offsets = [0, 64], sizes = [2, 32], strides = [1, 1]} : vector<2x96xf32> to vector<2x32xf32>
    %136 = vector.extract_strided_slice %124 {offsets = [0, 64], sizes = [2, 32], strides = [1, 1]} : vector<2x96xf32> to vector<2x32xf32>
    %137 = arith.mulf %133, %136 : vector<2x32xf32>
    %138 = arith.addf %135, %137 : vector<2x32xf32>
    %139 = math.tanh %138 : vector<2x32xf32>
    %cst_40 = arith.constant 1.000000e+00 : f32
    %140 = vector.broadcast %cst_40 : f32 to vector<2x32xf32>
    %141 = arith.subf %140, %134 : vector<2x32xf32>
    %142 = arith.mulf %141, %139 : vector<2x32xf32>
    %143 = arith.mulf %134, %119 : vector<2x32xf32>
    %144 = arith.addf %142, %143 : vector<2x32xf32>
    %c8 = arith.constant 8 : index
    %c0_41 = arith.constant 0 : index
    %145 = vector.load %arg6[%c8, %c0_41] : memref<16x32xf32, #tpu.memory_space<vmem>>, vector<2x32xf32>
    tpu.vector_store %arg6[%c8, %c0_41], %144 {strides = array<i32>} : memref<16x32xf32, #tpu.memory_space<vmem>>, vector<2x32xf32>,
    %146 = vector.extract_strided_slice %19 {offsets = [10, 0], sizes = [2, 96], strides = [1, 1]} : vector<16x96xf32> to vector<2x96xf32>
    %cst_42 = arith.constant dense<0.000000e+00> : vector<2x96xf32>
    %147 = tpu.matmul %144, %1, %cst_42 {dimension_numbers = #tpu.dot_dimension_numbers<[1], [0], [0], [1], [0, 0, 1, 1], [], []>} : vector<2x32xf32>, vector<32x96xf32>, vector<2x96xf32> -> vector<2x96xf32>
    %148 = vector.broadcast %6 : vector<1x96xf32> to vector<2x96xf32>
    %149 = arith.addf %147, %148 : vector<2x96xf32>
    %150 = vector.extract_strided_slice %146 {offsets = [0, 0], sizes = [2, 64], strides = [1, 1]} : vector<2x96xf32> to vector<2x64xf32>
    %151 = vector.extract_strided_slice %149 {offsets = [0, 0], sizes = [2, 64], strides = [1, 1]} : vector<2x96xf32> to vector<2x64xf32>
    %152 = arith.addf %150, %151 : vector<2x64xf32>
    %153 = arith.negf %152 : vector<2x64xf32>
    %154 = math.exp %153 : vector<2x64xf32>
    %cst_43 = arith.constant 1.000000e+00 : f32
    %155 = vector.broadcast %cst_43 : f32 to vector<2x64xf32>
    %156 = arith.addf %155, %154 : vector<2x64xf32>
    %157 = arith.divf %155, %156 : vector<2x64xf32>
    %158 = vector.extract_strided_slice %157 {offsets = [0, 0], sizes = [2, 32], strides = [1, 1]} : vector<2x64xf32> to vector<2x32xf32>
    %159 = vector.extract_strided_slice %157 {offsets = [0, 32], sizes = [2, 32], strides = [1, 1]} : vector<2x64xf32> to vector<2x32xf32>
    %160 = vector.extract_strided_slice %146 {offsets = [0, 64], sizes = [2, 32], strides = [1, 1]} : vector<2x96xf32> to vector<2x32xf32>
    %161 = vector.extract_strided_slice %149 {offsets = [0, 64], sizes = [2, 32], strides = [1, 1]} : vector<2x96xf32> to vector<2x32xf32>
    %162 = arith.mulf %158, %161 : vector<2x32xf32>
    %163 = arith.addf %160, %162 : vector<2x32xf32>
    %164 = math.tanh %163 : vector<2x32xf32>
    %cst_44 = arith.constant 1.000000e+00 : f32
    %165 = vector.broadcast %cst_44 : f32 to vector<2x32xf32>
    %166 = arith.subf %165, %159 : vector<2x32xf32>
    %167 = arith.mulf %166, %164 : vector<2x32xf32>
    %168 = arith.mulf %159, %144 : vector<2x32xf32>
    %169 = arith.addf %167, %168 : vector<2x32xf32>
    %c10 = arith.constant 10 : index
    %c0_45 = arith.constant 0 : index
    %170 = vector.load %arg6[%c10, %c0_45] : memref<16x32xf32, #tpu.memory_space<vmem>>, vector<2x32xf32>
    tpu.vector_store %arg6[%c10, %c0_45], %169 {strides = array<i32>} : memref<16x32xf32, #tpu.memory_space<vmem>>, vector<2x32xf32>,
    %171 = vector.extract_strided_slice %19 {offsets = [12, 0], sizes = [2, 96], strides = [1, 1]} : vector<16x96xf32> to vector<2x96xf32>
    %cst_46 = arith.constant dense<0.000000e+00> : vector<2x96xf32>
    %172 = tpu.matmul %169, %1, %cst_46 {dimension_numbers = #tpu.dot_dimension_numbers<[1], [0], [0], [1], [0, 0, 1, 1], [], []>} : vector<2x32xf32>, vector<32x96xf32>, vector<2x96xf32> -> vector<2x96xf32>
    %173 = vector.broadcast %6 : vector<1x96xf32> to vector<2x96xf32>
    %174 = arith.addf %172, %173 : vector<2x96xf32>
    %175 = vector.extract_strided_slice %171 {offsets = [0, 0], sizes = [2, 64], strides = [1, 1]} : vector<2x96xf32> to vector<2x64xf32>
    %176 = vector.extract_strided_slice %174 {offsets = [0, 0], sizes = [2, 64], strides = [1, 1]} : vector<2x96xf32> to vector<2x64xf32>
    %177 = arith.addf %175, %176 : vector<2x64xf32>
    %178 = arith.negf %177 : vector<2x64xf32>
    %179 = math.exp %178 : vector<2x64xf32>
    %cst_47 = arith.constant 1.000000e+00 : f32
    %180 = vector.broadcast %cst_47 : f32 to vector<2x64xf32>
    %181 = arith.addf %180, %179 : vector<2x64xf32>
    %182 = arith.divf %180, %181 : vector<2x64xf32>
    %183 = vector.extract_strided_slice %182 {offsets = [0, 0], sizes = [2, 32], strides = [1, 1]} : vector<2x64xf32> to vector<2x32xf32>
    %184 = vector.extract_strided_slice %182 {offsets = [0, 32], sizes = [2, 32], strides = [1, 1]} : vector<2x64xf32> to vector<2x32xf32>
    %185 = vector.extract_strided_slice %171 {offsets = [0, 64], sizes = [2, 32], strides = [1, 1]} : vector<2x96xf32> to vector<2x32xf32>
    %186 = vector.extract_strided_slice %174 {offsets = [0, 64], sizes = [2, 32], strides = [1, 1]} : vector<2x96xf32> to vector<2x32xf32>
    %187 = arith.mulf %183, %186 : vector<2x32xf32>
    %188 = arith.addf %185, %187 : vector<2x32xf32>
    %189 = math.tanh %188 : vector<2x32xf32>
    %cst_48 = arith.constant 1.000000e+00 : f32
    %190 = vector.broadcast %cst_48 : f32 to vector<2x32xf32>
    %191 = arith.subf %190, %184 : vector<2x32xf32>
    %192 = arith.mulf %191, %189 : vector<2x32xf32>
    %193 = arith.mulf %184, %169 : vector<2x32xf32>
    %194 = arith.addf %192, %193 : vector<2x32xf32>
    %c12 = arith.constant 12 : index
    %c0_49 = arith.constant 0 : index
    %195 = vector.load %arg6[%c12, %c0_49] : memref<16x32xf32, #tpu.memory_space<vmem>>, vector<2x32xf32>
    tpu.vector_store %arg6[%c12, %c0_49], %194 {strides = array<i32>} : memref<16x32xf32, #tpu.memory_space<vmem>>, vector<2x32xf32>,
    %196 = vector.extract_strided_slice %19 {offsets = [14, 0], sizes = [2, 96], strides = [1, 1]} : vector<16x96xf32> to vector<2x96xf32>
    %cst_50 = arith.constant dense<0.000000e+00> : vector<2x96xf32>
    %197 = tpu.matmul %194, %1, %cst_50 {dimension_numbers = #tpu.dot_dimension_numbers<[1], [0], [0], [1], [0, 0, 1, 1], [], []>} : vector<2x32xf32>, vector<32x96xf32>, vector<2x96xf32> -> vector<2x96xf32>
    %198 = vector.broadcast %6 : vector<1x96xf32> to vector<2x96xf32>
    %199 = arith.addf %197, %198 : vector<2x96xf32>
    %200 = vector.extract_strided_slice %196 {offsets = [0, 0], sizes = [2, 64], strides = [1, 1]} : vector<2x96xf32> to vector<2x64xf32>
    %201 = vector.extract_strided_slice %199 {offsets = [0, 0], sizes = [2, 64], strides = [1, 1]} : vector<2x96xf32> to vector<2x64xf32>
    %202 = arith.addf %200, %201 : vector<2x64xf32>
    %203 = arith.negf %202 : vector<2x64xf32>
    %204 = math.exp %203 : vector<2x64xf32>
    %cst_51 = arith.constant 1.000000e+00 : f32
    %205 = vector.broadcast %cst_51 : f32 to vector<2x64xf32>
    %206 = arith.addf %205, %204 : vector<2x64xf32>
    %207 = arith.divf %205, %206 : vector<2x64xf32>
    %208 = vector.extract_strided_slice %207 {offsets = [0, 0], sizes = [2, 32], strides = [1, 1]} : vector<2x64xf32> to vector<2x32xf32>
    %209 = vector.extract_strided_slice %207 {offsets = [0, 32], sizes = [2, 32], strides = [1, 1]} : vector<2x64xf32> to vector<2x32xf32>
    %210 = vector.extract_strided_slice %196 {offsets = [0, 64], sizes = [2, 32], strides = [1, 1]} : vector<2x96xf32> to vector<2x32xf32>
    %211 = vector.extract_strided_slice %199 {offsets = [0, 64], sizes = [2, 32], strides = [1, 1]} : vector<2x96xf32> to vector<2x32xf32>
    %212 = arith.mulf %208, %211 : vector<2x32xf32>
    %213 = arith.addf %210, %212 : vector<2x32xf32>
    %214 = math.tanh %213 : vector<2x32xf32>
    %cst_52 = arith.constant 1.000000e+00 : f32
    %215 = vector.broadcast %cst_52 : f32 to vector<2x32xf32>
    %216 = arith.subf %215, %209 : vector<2x32xf32>
    %217 = arith.mulf %216, %214 : vector<2x32xf32>
    %218 = arith.mulf %209, %194 : vector<2x32xf32>
    %219 = arith.addf %217, %218 : vector<2x32xf32>
    %c14 = arith.constant 14 : index
    %c0_53 = arith.constant 0 : index
    %220 = vector.load %arg6[%c14, %c0_53] : memref<16x32xf32, #tpu.memory_space<vmem>>, vector<2x32xf32>
    tpu.vector_store %arg6[%c14, %c0_53], %219 {strides = array<i32>} : memref<16x32xf32, #tpu.memory_space<vmem>>, vector<2x32xf32>,
    %c0_54 = arith.constant 0 : index
    %c0_55 = arith.constant 0 : index
    %221 = vector.load %arg6[%c0_54, %c0_55] : memref<16x32xf32, #tpu.memory_space<vmem>>, vector<16x32xf32>
    %cst_56 = arith.constant dense<0.000000e+00> : vector<16x96xf32>
    %222 = tpu.matmul %221, %2, %cst_56 {dimension_numbers = #tpu.dot_dimension_numbers<[1], [0], [0], [1], [0, 0, 1, 1], [], []>} : vector<16x32xf32>, vector<32x96xf32>, vector<16x96xf32> -> vector<16x96xf32>
    %223 = vector.broadcast %7 : vector<1x96xf32> to vector<16x96xf32>
    %224 = arith.addf %222, %223 : vector<16x96xf32>
    %cst_57 = arith.constant 0.000000e+00 : f32
    %225 = vector.broadcast %cst_57 : f32 to vector<2x32xf32>
    %226 = vector.extract_strided_slice %224 {offsets = [0, 0], sizes = [2, 96], strides = [1, 1]} : vector<16x96xf32> to vector<2x96xf32>
    %cst_58 = arith.constant dense<0.000000e+00> : vector<2x96xf32>
    %227 = tpu.matmul %225, %3, %cst_58 {dimension_numbers = #tpu.dot_dimension_numbers<[1], [0], [0], [1], [0, 0, 1, 1], [], []>} : vector<2x32xf32>, vector<32x96xf32>, vector<2x96xf32> -> vector<2x96xf32>
    %228 = vector.broadcast %8 : vector<1x96xf32> to vector<2x96xf32>
    %229 = arith.addf %227, %228 : vector<2x96xf32>
    %230 = vector.extract_strided_slice %226 {offsets = [0, 0], sizes = [2, 64], strides = [1, 1]} : vector<2x96xf32> to vector<2x64xf32>
    %231 = vector.extract_strided_slice %229 {offsets = [0, 0], sizes = [2, 64], strides = [1, 1]} : vector<2x96xf32> to vector<2x64xf32>
    %232 = arith.addf %230, %231 : vector<2x64xf32>
    %233 = arith.negf %232 : vector<2x64xf32>
    %234 = math.exp %233 : vector<2x64xf32>
    %cst_59 = arith.constant 1.000000e+00 : f32
    %235 = vector.broadcast %cst_59 : f32 to vector<2x64xf32>
    %236 = arith.addf %235, %234 : vector<2x64xf32>
    %237 = arith.divf %235, %236 : vector<2x64xf32>
    %238 = vector.extract_strided_slice %237 {offsets = [0, 0], sizes = [2, 32], strides = [1, 1]} : vector<2x64xf32> to vector<2x32xf32>
    %239 = vector.extract_strided_slice %237 {offsets = [0, 32], sizes = [2, 32], strides = [1, 1]} : vector<2x64xf32> to vector<2x32xf32>
    %240 = vector.extract_strided_slice %226 {offsets = [0, 64], sizes = [2, 32], strides = [1, 1]} : vector<2x96xf32> to vector<2x32xf32>
    %241 = vector.extract_strided_slice %229 {offsets = [0, 64], sizes = [2, 32], strides = [1, 1]} : vector<2x96xf32> to vector<2x32xf32>
    %242 = arith.mulf %238, %241 : vector<2x32xf32>
    %243 = arith.addf %240, %242 : vector<2x32xf32>
    %244 = math.tanh %243 : vector<2x32xf32>
    %cst_60 = arith.constant 1.000000e+00 : f32
    %245 = vector.broadcast %cst_60 : f32 to vector<2x32xf32>
    %246 = arith.subf %245, %239 : vector<2x32xf32>
    %247 = arith.mulf %246, %244 : vector<2x32xf32>
    %248 = arith.mulf %239, %225 : vector<2x32xf32>
    %249 = arith.addf %247, %248 : vector<2x32xf32>
    %250 = vector.shape_cast %249 : vector<2x32xf32> to vector<2x1x32xf32>
    %c0_61 = arith.constant 0 : index
    %c0_62 = arith.constant 0 : index
    %c0_63 = arith.constant 0 : index
    %251 = vector.load %arg7[%c0_61, %c0_62, %c0_63] : memref<2x8x32xf32, #tpu.memory_space<vmem>>, vector<2x1x32xf32>
    tpu.vector_store %arg7[%c0_61, %c0_62, %c0_63], %250 {strides = array<i32>} : memref<2x8x32xf32, #tpu.memory_space<vmem>>, vector<2x1x32xf32>,
    %252 = vector.extract_strided_slice %224 {offsets = [2, 0], sizes = [2, 96], strides = [1, 1]} : vector<16x96xf32> to vector<2x96xf32>
    %cst_64 = arith.constant dense<0.000000e+00> : vector<2x96xf32>
    %253 = tpu.matmul %249, %3, %cst_64 {dimension_numbers = #tpu.dot_dimension_numbers<[1], [0], [0], [1], [0, 0, 1, 1], [], []>} : vector<2x32xf32>, vector<32x96xf32>, vector<2x96xf32> -> vector<2x96xf32>
    %254 = vector.broadcast %8 : vector<1x96xf32> to vector<2x96xf32>
    %255 = arith.addf %253, %254 : vector<2x96xf32>
    %256 = vector.extract_strided_slice %252 {offsets = [0, 0], sizes = [2, 64], strides = [1, 1]} : vector<2x96xf32> to vector<2x64xf32>
    %257 = vector.extract_strided_slice %255 {offsets = [0, 0], sizes = [2, 64], strides = [1, 1]} : vector<2x96xf32> to vector<2x64xf32>
    %258 = arith.addf %256, %257 : vector<2x64xf32>
    %259 = arith.negf %258 : vector<2x64xf32>
    %260 = math.exp %259 : vector<2x64xf32>
    %cst_65 = arith.constant 1.000000e+00 : f32
    %261 = vector.broadcast %cst_65 : f32 to vector<2x64xf32>
    %262 = arith.addf %261, %260 : vector<2x64xf32>
    %263 = arith.divf %261, %262 : vector<2x64xf32>
    %264 = vector.extract_strided_slice %263 {offsets = [0, 0], sizes = [2, 32], strides = [1, 1]} : vector<2x64xf32> to vector<2x32xf32>
    %265 = vector.extract_strided_slice %263 {offsets = [0, 32], sizes = [2, 32], strides = [1, 1]} : vector<2x64xf32> to vector<2x32xf32>
    %266 = vector.extract_strided_slice %252 {offsets = [0, 64], sizes = [2, 32], strides = [1, 1]} : vector<2x96xf32> to vector<2x32xf32>
    %267 = vector.extract_strided_slice %255 {offsets = [0, 64], sizes = [2, 32], strides = [1, 1]} : vector<2x96xf32> to vector<2x32xf32>
    %268 = arith.mulf %264, %267 : vector<2x32xf32>
    %269 = arith.addf %266, %268 : vector<2x32xf32>
    %270 = math.tanh %269 : vector<2x32xf32>
    %cst_66 = arith.constant 1.000000e+00 : f32
    %271 = vector.broadcast %cst_66 : f32 to vector<2x32xf32>
    %272 = arith.subf %271, %265 : vector<2x32xf32>
    %273 = arith.mulf %272, %270 : vector<2x32xf32>
    %274 = arith.mulf %265, %249 : vector<2x32xf32>
    %275 = arith.addf %273, %274 : vector<2x32xf32>
    %276 = vector.shape_cast %275 : vector<2x32xf32> to vector<2x1x32xf32>
    %c0_67 = arith.constant 0 : index
    %c1 = arith.constant 1 : index
    %c0_68 = arith.constant 0 : index
    %277 = vector.load %arg7[%c0_67, %c1, %c0_68] : memref<2x8x32xf32, #tpu.memory_space<vmem>>, vector<2x1x32xf32>
    tpu.vector_store %arg7[%c0_67, %c1, %c0_68], %276 {strides = array<i32>} : memref<2x8x32xf32, #tpu.memory_space<vmem>>, vector<2x1x32xf32>,
    %278 = vector.extract_strided_slice %224 {offsets = [4, 0], sizes = [2, 96], strides = [1, 1]} : vector<16x96xf32> to vector<2x96xf32>
    %cst_69 = arith.constant dense<0.000000e+00> : vector<2x96xf32>
    %279 = tpu.matmul %275, %3, %cst_69 {dimension_numbers = #tpu.dot_dimension_numbers<[1], [0], [0], [1], [0, 0, 1, 1], [], []>} : vector<2x32xf32>, vector<32x96xf32>, vector<2x96xf32> -> vector<2x96xf32>
    %280 = vector.broadcast %8 : vector<1x96xf32> to vector<2x96xf32>
    %281 = arith.addf %279, %280 : vector<2x96xf32>
    %282 = vector.extract_strided_slice %278 {offsets = [0, 0], sizes = [2, 64], strides = [1, 1]} : vector<2x96xf32> to vector<2x64xf32>
    %283 = vector.extract_strided_slice %281 {offsets = [0, 0], sizes = [2, 64], strides = [1, 1]} : vector<2x96xf32> to vector<2x64xf32>
    %284 = arith.addf %282, %283 : vector<2x64xf32>
    %285 = arith.negf %284 : vector<2x64xf32>
    %286 = math.exp %285 : vector<2x64xf32>
    %cst_70 = arith.constant 1.000000e+00 : f32
    %287 = vector.broadcast %cst_70 : f32 to vector<2x64xf32>
    %288 = arith.addf %287, %286 : vector<2x64xf32>
    %289 = arith.divf %287, %288 : vector<2x64xf32>
    %290 = vector.extract_strided_slice %289 {offsets = [0, 0], sizes = [2, 32], strides = [1, 1]} : vector<2x64xf32> to vector<2x32xf32>
    %291 = vector.extract_strided_slice %289 {offsets = [0, 32], sizes = [2, 32], strides = [1, 1]} : vector<2x64xf32> to vector<2x32xf32>
    %292 = vector.extract_strided_slice %278 {offsets = [0, 64], sizes = [2, 32], strides = [1, 1]} : vector<2x96xf32> to vector<2x32xf32>
    %293 = vector.extract_strided_slice %281 {offsets = [0, 64], sizes = [2, 32], strides = [1, 1]} : vector<2x96xf32> to vector<2x32xf32>
    %294 = arith.mulf %290, %293 : vector<2x32xf32>
    %295 = arith.addf %292, %294 : vector<2x32xf32>
    %296 = math.tanh %295 : vector<2x32xf32>
    %cst_71 = arith.constant 1.000000e+00 : f32
    %297 = vector.broadcast %cst_71 : f32 to vector<2x32xf32>
    %298 = arith.subf %297, %291 : vector<2x32xf32>
    %299 = arith.mulf %298, %296 : vector<2x32xf32>
    %300 = arith.mulf %291, %275 : vector<2x32xf32>
    %301 = arith.addf %299, %300 : vector<2x32xf32>
    %302 = vector.shape_cast %301 : vector<2x32xf32> to vector<2x1x32xf32>
    %c0_72 = arith.constant 0 : index
    %c2_73 = arith.constant 2 : index
    %c0_74 = arith.constant 0 : index
    %303 = vector.load %arg7[%c0_72, %c2_73, %c0_74] : memref<2x8x32xf32, #tpu.memory_space<vmem>>, vector<2x1x32xf32>
    tpu.vector_store %arg7[%c0_72, %c2_73, %c0_74], %302 {strides = array<i32>} : memref<2x8x32xf32, #tpu.memory_space<vmem>>, vector<2x1x32xf32>,
    %304 = vector.extract_strided_slice %224 {offsets = [6, 0], sizes = [2, 96], strides = [1, 1]} : vector<16x96xf32> to vector<2x96xf32>
    %cst_75 = arith.constant dense<0.000000e+00> : vector<2x96xf32>
    %305 = tpu.matmul %301, %3, %cst_75 {dimension_numbers = #tpu.dot_dimension_numbers<[1], [0], [0], [1], [0, 0, 1, 1], [], []>} : vector<2x32xf32>, vector<32x96xf32>, vector<2x96xf32> -> vector<2x96xf32>
    %306 = vector.broadcast %8 : vector<1x96xf32> to vector<2x96xf32>
    %307 = arith.addf %305, %306 : vector<2x96xf32>
    %308 = vector.extract_strided_slice %304 {offsets = [0, 0], sizes = [2, 64], strides = [1, 1]} : vector<2x96xf32> to vector<2x64xf32>
    %309 = vector.extract_strided_slice %307 {offsets = [0, 0], sizes = [2, 64], strides = [1, 1]} : vector<2x96xf32> to vector<2x64xf32>
    %310 = arith.addf %308, %309 : vector<2x64xf32>
    %311 = arith.negf %310 : vector<2x64xf32>
    %312 = math.exp %311 : vector<2x64xf32>
    %cst_76 = arith.constant 1.000000e+00 : f32
    %313 = vector.broadcast %cst_76 : f32 to vector<2x64xf32>
    %314 = arith.addf %313, %312 : vector<2x64xf32>
    %315 = arith.divf %313, %314 : vector<2x64xf32>
    %316 = vector.extract_strided_slice %315 {offsets = [0, 0], sizes = [2, 32], strides = [1, 1]} : vector<2x64xf32> to vector<2x32xf32>
    %317 = vector.extract_strided_slice %315 {offsets = [0, 32], sizes = [2, 32], strides = [1, 1]} : vector<2x64xf32> to vector<2x32xf32>
    %318 = vector.extract_strided_slice %304 {offsets = [0, 64], sizes = [2, 32], strides = [1, 1]} : vector<2x96xf32> to vector<2x32xf32>
    %319 = vector.extract_strided_slice %307 {offsets = [0, 64], sizes = [2, 32], strides = [1, 1]} : vector<2x96xf32> to vector<2x32xf32>
    %320 = arith.mulf %316, %319 : vector<2x32xf32>
    %321 = arith.addf %318, %320 : vector<2x32xf32>
    %322 = math.tanh %321 : vector<2x32xf32>
    %cst_77 = arith.constant 1.000000e+00 : f32
    %323 = vector.broadcast %cst_77 : f32 to vector<2x32xf32>
    %324 = arith.subf %323, %317 : vector<2x32xf32>
    %325 = arith.mulf %324, %322 : vector<2x32xf32>
    %326 = arith.mulf %317, %301 : vector<2x32xf32>
    %327 = arith.addf %325, %326 : vector<2x32xf32>
    %328 = vector.shape_cast %327 : vector<2x32xf32> to vector<2x1x32xf32>
    %c0_78 = arith.constant 0 : index
    %c3 = arith.constant 3 : index
    %c0_79 = arith.constant 0 : index
    %329 = vector.load %arg7[%c0_78, %c3, %c0_79] : memref<2x8x32xf32, #tpu.memory_space<vmem>>, vector<2x1x32xf32>
    tpu.vector_store %arg7[%c0_78, %c3, %c0_79], %328 {strides = array<i32>} : memref<2x8x32xf32, #tpu.memory_space<vmem>>, vector<2x1x32xf32>,
    %330 = vector.extract_strided_slice %224 {offsets = [8, 0], sizes = [2, 96], strides = [1, 1]} : vector<16x96xf32> to vector<2x96xf32>
    %cst_80 = arith.constant dense<0.000000e+00> : vector<2x96xf32>
    %331 = tpu.matmul %327, %3, %cst_80 {dimension_numbers = #tpu.dot_dimension_numbers<[1], [0], [0], [1], [0, 0, 1, 1], [], []>} : vector<2x32xf32>, vector<32x96xf32>, vector<2x96xf32> -> vector<2x96xf32>
    %332 = vector.broadcast %8 : vector<1x96xf32> to vector<2x96xf32>
    %333 = arith.addf %331, %332 : vector<2x96xf32>
    %334 = vector.extract_strided_slice %330 {offsets = [0, 0], sizes = [2, 64], strides = [1, 1]} : vector<2x96xf32> to vector<2x64xf32>
    %335 = vector.extract_strided_slice %333 {offsets = [0, 0], sizes = [2, 64], strides = [1, 1]} : vector<2x96xf32> to vector<2x64xf32>
    %336 = arith.addf %334, %335 : vector<2x64xf32>
    %337 = arith.negf %336 : vector<2x64xf32>
    %338 = math.exp %337 : vector<2x64xf32>
    %cst_81 = arith.constant 1.000000e+00 : f32
    %339 = vector.broadcast %cst_81 : f32 to vector<2x64xf32>
    %340 = arith.addf %339, %338 : vector<2x64xf32>
    %341 = arith.divf %339, %340 : vector<2x64xf32>
    %342 = vector.extract_strided_slice %341 {offsets = [0, 0], sizes = [2, 32], strides = [1, 1]} : vector<2x64xf32> to vector<2x32xf32>
    %343 = vector.extract_strided_slice %341 {offsets = [0, 32], sizes = [2, 32], strides = [1, 1]} : vector<2x64xf32> to vector<2x32xf32>
    %344 = vector.extract_strided_slice %330 {offsets = [0, 64], sizes = [2, 32], strides = [1, 1]} : vector<2x96xf32> to vector<2x32xf32>
    %345 = vector.extract_strided_slice %333 {offsets = [0, 64], sizes = [2, 32], strides = [1, 1]} : vector<2x96xf32> to vector<2x32xf32>
    %346 = arith.mulf %342, %345 : vector<2x32xf32>
    %347 = arith.addf %344, %346 : vector<2x32xf32>
    %348 = math.tanh %347 : vector<2x32xf32>
    %cst_82 = arith.constant 1.000000e+00 : f32
    %349 = vector.broadcast %cst_82 : f32 to vector<2x32xf32>
    %350 = arith.subf %349, %343 : vector<2x32xf32>
    %351 = arith.mulf %350, %348 : vector<2x32xf32>
    %352 = arith.mulf %343, %327 : vector<2x32xf32>
    %353 = arith.addf %351, %352 : vector<2x32xf32>
    %354 = vector.shape_cast %353 : vector<2x32xf32> to vector<2x1x32xf32>
    %c0_83 = arith.constant 0 : index
    %c4_84 = arith.constant 4 : index
    %c0_85 = arith.constant 0 : index
    %355 = vector.load %arg7[%c0_83, %c4_84, %c0_85] : memref<2x8x32xf32, #tpu.memory_space<vmem>>, vector<2x1x32xf32>
    tpu.vector_store %arg7[%c0_83, %c4_84, %c0_85], %354 {strides = array<i32>} : memref<2x8x32xf32, #tpu.memory_space<vmem>>, vector<2x1x32xf32>,
    %356 = vector.extract_strided_slice %224 {offsets = [10, 0], sizes = [2, 96], strides = [1, 1]} : vector<16x96xf32> to vector<2x96xf32>
    %cst_86 = arith.constant dense<0.000000e+00> : vector<2x96xf32>
    %357 = tpu.matmul %353, %3, %cst_86 {dimension_numbers = #tpu.dot_dimension_numbers<[1], [0], [0], [1], [0, 0, 1, 1], [], []>} : vector<2x32xf32>, vector<32x96xf32>, vector<2x96xf32> -> vector<2x96xf32>
    %358 = vector.broadcast %8 : vector<1x96xf32> to vector<2x96xf32>
    %359 = arith.addf %357, %358 : vector<2x96xf32>
    %360 = vector.extract_strided_slice %356 {offsets = [0, 0], sizes = [2, 64], strides = [1, 1]} : vector<2x96xf32> to vector<2x64xf32>
    %361 = vector.extract_strided_slice %359 {offsets = [0, 0], sizes = [2, 64], strides = [1, 1]} : vector<2x96xf32> to vector<2x64xf32>
    %362 = arith.addf %360, %361 : vector<2x64xf32>
    %363 = arith.negf %362 : vector<2x64xf32>
    %364 = math.exp %363 : vector<2x64xf32>
    %cst_87 = arith.constant 1.000000e+00 : f32
    %365 = vector.broadcast %cst_87 : f32 to vector<2x64xf32>
    %366 = arith.addf %365, %364 : vector<2x64xf32>
    %367 = arith.divf %365, %366 : vector<2x64xf32>
    %368 = vector.extract_strided_slice %367 {offsets = [0, 0], sizes = [2, 32], strides = [1, 1]} : vector<2x64xf32> to vector<2x32xf32>
    %369 = vector.extract_strided_slice %367 {offsets = [0, 32], sizes = [2, 32], strides = [1, 1]} : vector<2x64xf32> to vector<2x32xf32>
    %370 = vector.extract_strided_slice %356 {offsets = [0, 64], sizes = [2, 32], strides = [1, 1]} : vector<2x96xf32> to vector<2x32xf32>
    %371 = vector.extract_strided_slice %359 {offsets = [0, 64], sizes = [2, 32], strides = [1, 1]} : vector<2x96xf32> to vector<2x32xf32>
    %372 = arith.mulf %368, %371 : vector<2x32xf32>
    %373 = arith.addf %370, %372 : vector<2x32xf32>
    %374 = math.tanh %373 : vector<2x32xf32>
    %cst_88 = arith.constant 1.000000e+00 : f32
    %375 = vector.broadcast %cst_88 : f32 to vector<2x32xf32>
    %376 = arith.subf %375, %369 : vector<2x32xf32>
    %377 = arith.mulf %376, %374 : vector<2x32xf32>
    %378 = arith.mulf %369, %353 : vector<2x32xf32>
    %379 = arith.addf %377, %378 : vector<2x32xf32>
    %380 = vector.shape_cast %379 : vector<2x32xf32> to vector<2x1x32xf32>
    %c0_89 = arith.constant 0 : index
    %c5 = arith.constant 5 : index
    %c0_90 = arith.constant 0 : index
    %381 = vector.load %arg7[%c0_89, %c5, %c0_90] : memref<2x8x32xf32, #tpu.memory_space<vmem>>, vector<2x1x32xf32>
    tpu.vector_store %arg7[%c0_89, %c5, %c0_90], %380 {strides = array<i32>} : memref<2x8x32xf32, #tpu.memory_space<vmem>>, vector<2x1x32xf32>,
    %382 = vector.extract_strided_slice %224 {offsets = [12, 0], sizes = [2, 96], strides = [1, 1]} : vector<16x96xf32> to vector<2x96xf32>
    %cst_91 = arith.constant dense<0.000000e+00> : vector<2x96xf32>
    %383 = tpu.matmul %379, %3, %cst_91 {dimension_numbers = #tpu.dot_dimension_numbers<[1], [0], [0], [1], [0, 0, 1, 1], [], []>} : vector<2x32xf32>, vector<32x96xf32>, vector<2x96xf32> -> vector<2x96xf32>
    %384 = vector.broadcast %8 : vector<1x96xf32> to vector<2x96xf32>
    %385 = arith.addf %383, %384 : vector<2x96xf32>
    %386 = vector.extract_strided_slice %382 {offsets = [0, 0], sizes = [2, 64], strides = [1, 1]} : vector<2x96xf32> to vector<2x64xf32>
    %387 = vector.extract_strided_slice %385 {offsets = [0, 0], sizes = [2, 64], strides = [1, 1]} : vector<2x96xf32> to vector<2x64xf32>
    %388 = arith.addf %386, %387 : vector<2x64xf32>
    %389 = arith.negf %388 : vector<2x64xf32>
    %390 = math.exp %389 : vector<2x64xf32>
    %cst_92 = arith.constant 1.000000e+00 : f32
    %391 = vector.broadcast %cst_92 : f32 to vector<2x64xf32>
    %392 = arith.addf %391, %390 : vector<2x64xf32>
    %393 = arith.divf %391, %392 : vector<2x64xf32>
    %394 = vector.extract_strided_slice %393 {offsets = [0, 0], sizes = [2, 32], strides = [1, 1]} : vector<2x64xf32> to vector<2x32xf32>
    %395 = vector.extract_strided_slice %393 {offsets = [0, 32], sizes = [2, 32], strides = [1, 1]} : vector<2x64xf32> to vector<2x32xf32>
    %396 = vector.extract_strided_slice %382 {offsets = [0, 64], sizes = [2, 32], strides = [1, 1]} : vector<2x96xf32> to vector<2x32xf32>
    %397 = vector.extract_strided_slice %385 {offsets = [0, 64], sizes = [2, 32], strides = [1, 1]} : vector<2x96xf32> to vector<2x32xf32>
    %398 = arith.mulf %394, %397 : vector<2x32xf32>
    %399 = arith.addf %396, %398 : vector<2x32xf32>
    %400 = math.tanh %399 : vector<2x32xf32>
    %cst_93 = arith.constant 1.000000e+00 : f32
    %401 = vector.broadcast %cst_93 : f32 to vector<2x32xf32>
    %402 = arith.subf %401, %395 : vector<2x32xf32>
    %403 = arith.mulf %402, %400 : vector<2x32xf32>
    %404 = arith.mulf %395, %379 : vector<2x32xf32>
    %405 = arith.addf %403, %404 : vector<2x32xf32>
    %406 = vector.shape_cast %405 : vector<2x32xf32> to vector<2x1x32xf32>
    %c0_94 = arith.constant 0 : index
    %c6_95 = arith.constant 6 : index
    %c0_96 = arith.constant 0 : index
    %407 = vector.load %arg7[%c0_94, %c6_95, %c0_96] : memref<2x8x32xf32, #tpu.memory_space<vmem>>, vector<2x1x32xf32>
    tpu.vector_store %arg7[%c0_94, %c6_95, %c0_96], %406 {strides = array<i32>} : memref<2x8x32xf32, #tpu.memory_space<vmem>>, vector<2x1x32xf32>,
    %408 = vector.extract_strided_slice %224 {offsets = [14, 0], sizes = [2, 96], strides = [1, 1]} : vector<16x96xf32> to vector<2x96xf32>
    %cst_97 = arith.constant dense<0.000000e+00> : vector<2x96xf32>
    %409 = tpu.matmul %405, %3, %cst_97 {dimension_numbers = #tpu.dot_dimension_numbers<[1], [0], [0], [1], [0, 0, 1, 1], [], []>} : vector<2x32xf32>, vector<32x96xf32>, vector<2x96xf32> -> vector<2x96xf32>
    %410 = vector.broadcast %8 : vector<1x96xf32> to vector<2x96xf32>
    %411 = arith.addf %409, %410 : vector<2x96xf32>
    %412 = vector.extract_strided_slice %408 {offsets = [0, 0], sizes = [2, 64], strides = [1, 1]} : vector<2x96xf32> to vector<2x64xf32>
    %413 = vector.extract_strided_slice %411 {offsets = [0, 0], sizes = [2, 64], strides = [1, 1]} : vector<2x96xf32> to vector<2x64xf32>
    %414 = arith.addf %412, %413 : vector<2x64xf32>
    %415 = arith.negf %414 : vector<2x64xf32>
    %416 = math.exp %415 : vector<2x64xf32>
    %cst_98 = arith.constant 1.000000e+00 : f32
    %417 = vector.broadcast %cst_98 : f32 to vector<2x64xf32>
    %418 = arith.addf %417, %416 : vector<2x64xf32>
    %419 = arith.divf %417, %418 : vector<2x64xf32>
    %420 = vector.extract_strided_slice %419 {offsets = [0, 0], sizes = [2, 32], strides = [1, 1]} : vector<2x64xf32> to vector<2x32xf32>
    %421 = vector.extract_strided_slice %419 {offsets = [0, 32], sizes = [2, 32], strides = [1, 1]} : vector<2x64xf32> to vector<2x32xf32>
    %422 = vector.extract_strided_slice %408 {offsets = [0, 64], sizes = [2, 32], strides = [1, 1]} : vector<2x96xf32> to vector<2x32xf32>
    %423 = vector.extract_strided_slice %411 {offsets = [0, 64], sizes = [2, 32], strides = [1, 1]} : vector<2x96xf32> to vector<2x32xf32>
    %424 = arith.mulf %420, %423 : vector<2x32xf32>
    %425 = arith.addf %422, %424 : vector<2x32xf32>
    %426 = math.tanh %425 : vector<2x32xf32>
    %cst_99 = arith.constant 1.000000e+00 : f32
    %427 = vector.broadcast %cst_99 : f32 to vector<2x32xf32>
    %428 = arith.subf %427, %421 : vector<2x32xf32>
    %429 = arith.mulf %428, %426 : vector<2x32xf32>
    %430 = arith.mulf %421, %405 : vector<2x32xf32>
    %431 = arith.addf %429, %430 : vector<2x32xf32>
    %432 = vector.shape_cast %431 : vector<2x32xf32> to vector<2x1x32xf32>
    %c0_100 = arith.constant 0 : index
    %c7 = arith.constant 7 : index
    %c0_101 = arith.constant 0 : index
    %433 = vector.load %arg7[%c0_100, %c7, %c0_101] : memref<2x8x32xf32, #tpu.memory_space<vmem>>, vector<2x1x32xf32>
    tpu.vector_store %arg7[%c0_100, %c7, %c0_101], %432 {strides = array<i32>} : memref<2x8x32xf32, #tpu.memory_space<vmem>>, vector<2x1x32xf32>,
    %c0_102 = arith.constant 0 : index
    %c0_103 = arith.constant 0 : index
    %c0_104 = arith.constant 0 : index
    %434 = vector.load %arg7[%c0_102, %c0_103, %c0_104] : memref<2x8x32xf32, #tpu.memory_space<vmem>>, vector<2x8x32xf32>
    %435 = vector.shape_cast %434 : vector<2x8x32xf32> to vector<16x32xf32>
    %cst_105 = arith.constant dense<0.000000e+00> : vector<16x96xf32>
    %436 = tpu.matmul %435, %4, %cst_105 {dimension_numbers = #tpu.dot_dimension_numbers<[1], [0], [0], [1], [0, 0, 1, 1], [], []>} : vector<16x32xf32>, vector<32x96xf32>, vector<16x96xf32> -> vector<16x96xf32>
    %437 = vector.broadcast %9 : vector<1x96xf32> to vector<16x96xf32>
    %438 = arith.addf %436, %437 : vector<16x96xf32>
    %439 = vector.shape_cast %438 : vector<16x96xf32> to vector<2x8x96xf32>
    %440 = tpu.iota {dimensions = array<i32: 1>} : vector<1x32xi32>
    %441 = vector.extract_strided_slice %439 {offsets = [0, 0, 0], sizes = [1, 8, 96], strides = [1, 1, 1]} : vector<2x8x96xf32> to vector<1x8x96xf32>
    %442 = vector.shape_cast %441 : vector<1x8x96xf32> to vector<8x96xf32>
    %443 = vector.extract_strided_slice %442 {offsets = [0, 0], sizes = [8, 32], strides = [1, 1]} : vector<8x96xf32> to vector<8x32xf32>
    %444 = vector.extract_strided_slice %442 {offsets = [0, 32], sizes = [8, 32], strides = [1, 1]} : vector<8x96xf32> to vector<8x32xf32>
    %445 = vector.extract_strided_slice %442 {offsets = [0, 64], sizes = [8, 32], strides = [1, 1]} : vector<8x96xf32> to vector<8x32xf32>
    %cst_106 = arith.constant 0.000000e+00 : f32
    %446 = vector.broadcast %cst_106 : f32 to vector<8x8xf32>
    %cst_107 = arith.constant 0.000000e+00 : f32
    %447 = vector.broadcast %cst_107 : f32 to vector<1x32xf32>
    %c0_i32 = arith.constant 0 : i32
    %448 = vector.broadcast %c0_i32 : i32 to vector<1x32xi32>
    %449 = arith.cmpi sge, %440, %448 : vector<1x32xi32>
    %c8_i32 = arith.constant 8 : i32
    %450 = vector.broadcast %c8_i32 : i32 to vector<1x32xi32>
    %451 = arith.cmpi slt, %440, %450 : vector<1x32xi32>
    %452 = arith.andi %449, %451 : vector<1x32xi1>
    %cst_108 = arith.constant 1.000000e+00 : f32
    %cst_109 = arith.constant 0.000000e+00 : f32
    %453 = vector.broadcast %cst_108 : f32 to vector<1x32xf32>
    %454 = vector.broadcast %cst_109 : f32 to vector<1x32xf32>
    %455 = arith.select %452, %453, %454 : vector<1x32xi1>, vector<1x32xf32>
    %456 = vector.broadcast %455 : vector<1x32xf32> to vector<8x32xf32>
    %457 = arith.mulf %443, %456 : vector<8x32xf32>
    %cst_110 = arith.constant dense<0.000000e+00> : vector<8x8xf32>
    %458 = tpu.matmul %457, %444, %cst_110 {dimension_numbers = #tpu.dot_dimension_numbers<[1], [1], [0], [0], [0, 0, 1, 0], [], []>} : vector<8x32xf32>, vector<8x32xf32>, vector<8x8xf32> -> vector<8x8xf32>
    %cst_111 = arith.constant dense<0xFF800000> : vector<8xf32>
    %459 = vector.multi_reduction <maximumf>, %458, %cst_111 [1] : vector<8x8xf32> to vector<8xf32>
    %460 = vector.shape_cast %459 : vector<8xf32> to vector<8x1xf32>
    %461 = vector.broadcast %460 : vector<8x1xf32> to vector<8x8xf32>
    %462 = arith.subf %458, %461 : vector<8x8xf32>
    %463 = math.exp %462 : vector<8x8xf32>
    %cst_112 = arith.constant dense<0.000000e+00> : vector<8xf32>
    %464 = vector.multi_reduction <add>, %463, %cst_112 [1] : vector<8x8xf32> to vector<8xf32>
    %465 = vector.shape_cast %464 : vector<8xf32> to vector<8x1xf32>
    %466 = tpu.reciprocal %465 {approx = true} : vector<8x1xf32> -> vector<8x1xf32>
    %467 = vector.broadcast %466 : vector<8x1xf32> to vector<8x8xf32>
    %468 = arith.mulf %463, %467 : vector<8x8xf32>
    %469 = arith.addf %446, %468 : vector<8x8xf32>
    %470 = vector.extract_strided_slice %468 {offsets = [7, 0], sizes = [1, 8], strides = [1, 1]} : vector<8x8xf32> to vector<1x8xf32>
    %471 = vector.broadcast %455 : vector<1x32xf32> to vector<8x32xf32>
    %472 = arith.mulf %445, %471 : vector<8x32xf32>
    %cst_113 = arith.constant dense<0.000000e+00> : vector<1x32xf32>
    %473 = tpu.matmul %470, %472, %cst_113 {dimension_numbers = #tpu.dot_dimension_numbers<[1], [0], [0], [1], [0, 0, 1, 1], [], []>} : vector<1x8xf32>, vector<8x32xf32>, vector<1x32xf32> -> vector<1x32xf32>
    %474 = arith.addf %447, %473 : vector<1x32xf32>
    %c8_i32_114 = arith.constant 8 : i32
    %475 = vector.broadcast %c8_i32_114 : i32 to vector<1x32xi32>
    %476 = arith.cmpi sge, %440, %475 : vector<1x32xi32>
    %c16_i32 = arith.constant 16 : i32
    %477 = vector.broadcast %c16_i32 : i32 to vector<1x32xi32>
    %478 = arith.cmpi slt, %440, %477 : vector<1x32xi32>
    %479 = arith.andi %476, %478 : vector<1x32xi1>
    %cst_115 = arith.constant 1.000000e+00 : f32
    %cst_116 = arith.constant 0.000000e+00 : f32
    %480 = vector.broadcast %cst_115 : f32 to vector<1x32xf32>
    %481 = vector.broadcast %cst_116 : f32 to vector<1x32xf32>
    %482 = arith.select %479, %480, %481 : vector<1x32xi1>, vector<1x32xf32>
    %483 = vector.broadcast %482 : vector<1x32xf32> to vector<8x32xf32>
    %484 = arith.mulf %443, %483 : vector<8x32xf32>
    %cst_117 = arith.constant dense<0.000000e+00> : vector<8x8xf32>
    %485 = tpu.matmul %484, %444, %cst_117 {dimension_numbers = #tpu.dot_dimension_numbers<[1], [1], [0], [0], [0, 0, 1, 0], [], []>} : vector<8x32xf32>, vector<8x32xf32>, vector<8x8xf32> -> vector<8x8xf32>
    %cst_118 = arith.constant dense<0xFF800000> : vector<8xf32>
    %486 = vector.multi_reduction <maximumf>, %485, %cst_118 [1] : vector<8x8xf32> to vector<8xf32>
    %487 = vector.shape_cast %486 : vector<8xf32> to vector<8x1xf32>
    %488 = vector.broadcast %487 : vector<8x1xf32> to vector<8x8xf32>
    %489 = arith.subf %485, %488 : vector<8x8xf32>
    %490 = math.exp %489 : vector<8x8xf32>
    %cst_119 = arith.constant dense<0.000000e+00> : vector<8xf32>
    %491 = vector.multi_reduction <add>, %490, %cst_119 [1] : vector<8x8xf32> to vector<8xf32>
    %492 = vector.shape_cast %491 : vector<8xf32> to vector<8x1xf32>
    %493 = tpu.reciprocal %492 {approx = true} : vector<8x1xf32> -> vector<8x1xf32>
    %494 = vector.broadcast %493 : vector<8x1xf32> to vector<8x8xf32>
    %495 = arith.mulf %490, %494 : vector<8x8xf32>
    %496 = arith.addf %469, %495 : vector<8x8xf32>
    %497 = vector.extract_strided_slice %495 {offsets = [7, 0], sizes = [1, 8], strides = [1, 1]} : vector<8x8xf32> to vector<1x8xf32>
    %498 = vector.broadcast %482 : vector<1x32xf32> to vector<8x32xf32>
    %499 = arith.mulf %445, %498 : vector<8x32xf32>
    %cst_120 = arith.constant dense<0.000000e+00> : vector<1x32xf32>
    %500 = tpu.matmul %497, %499, %cst_120 {dimension_numbers = #tpu.dot_dimension_numbers<[1], [0], [0], [1], [0, 0, 1, 1], [], []>} : vector<1x8xf32>, vector<8x32xf32>, vector<1x32xf32> -> vector<1x32xf32>
    %501 = arith.addf %474, %500 : vector<1x32xf32>
    %c16_i32_121 = arith.constant 16 : i32
    %502 = vector.broadcast %c16_i32_121 : i32 to vector<1x32xi32>
    %503 = arith.cmpi sge, %440, %502 : vector<1x32xi32>
    %c24_i32 = arith.constant 24 : i32
    %504 = vector.broadcast %c24_i32 : i32 to vector<1x32xi32>
    %505 = arith.cmpi slt, %440, %504 : vector<1x32xi32>
    %506 = arith.andi %503, %505 : vector<1x32xi1>
    %cst_122 = arith.constant 1.000000e+00 : f32
    %cst_123 = arith.constant 0.000000e+00 : f32
    %507 = vector.broadcast %cst_122 : f32 to vector<1x32xf32>
    %508 = vector.broadcast %cst_123 : f32 to vector<1x32xf32>
    %509 = arith.select %506, %507, %508 : vector<1x32xi1>, vector<1x32xf32>
    %510 = vector.broadcast %509 : vector<1x32xf32> to vector<8x32xf32>
    %511 = arith.mulf %443, %510 : vector<8x32xf32>
    %cst_124 = arith.constant dense<0.000000e+00> : vector<8x8xf32>
    %512 = tpu.matmul %511, %444, %cst_124 {dimension_numbers = #tpu.dot_dimension_numbers<[1], [1], [0], [0], [0, 0, 1, 0], [], []>} : vector<8x32xf32>, vector<8x32xf32>, vector<8x8xf32> -> vector<8x8xf32>
    %cst_125 = arith.constant dense<0xFF800000> : vector<8xf32>
    %513 = vector.multi_reduction <maximumf>, %512, %cst_125 [1] : vector<8x8xf32> to vector<8xf32>
    %514 = vector.shape_cast %513 : vector<8xf32> to vector<8x1xf32>
    %515 = vector.broadcast %514 : vector<8x1xf32> to vector<8x8xf32>
    %516 = arith.subf %512, %515 : vector<8x8xf32>
    %517 = math.exp %516 : vector<8x8xf32>
    %cst_126 = arith.constant dense<0.000000e+00> : vector<8xf32>
    %518 = vector.multi_reduction <add>, %517, %cst_126 [1] : vector<8x8xf32> to vector<8xf32>
    %519 = vector.shape_cast %518 : vector<8xf32> to vector<8x1xf32>
    %520 = tpu.reciprocal %519 {approx = true} : vector<8x1xf32> -> vector<8x1xf32>
    %521 = vector.broadcast %520 : vector<8x1xf32> to vector<8x8xf32>
    %522 = arith.mulf %517, %521 : vector<8x8xf32>
    %523 = arith.addf %496, %522 : vector<8x8xf32>
    %524 = vector.extract_strided_slice %522 {offsets = [7, 0], sizes = [1, 8], strides = [1, 1]} : vector<8x8xf32> to vector<1x8xf32>
    %525 = vector.broadcast %509 : vector<1x32xf32> to vector<8x32xf32>
    %526 = arith.mulf %445, %525 : vector<8x32xf32>
    %cst_127 = arith.constant dense<0.000000e+00> : vector<1x32xf32>
    %527 = tpu.matmul %524, %526, %cst_127 {dimension_numbers = #tpu.dot_dimension_numbers<[1], [0], [0], [1], [0, 0, 1, 1], [], []>} : vector<1x8xf32>, vector<8x32xf32>, vector<1x32xf32> -> vector<1x32xf32>
    %528 = arith.addf %501, %527 : vector<1x32xf32>
    %c24_i32_128 = arith.constant 24 : i32
    %529 = vector.broadcast %c24_i32_128 : i32 to vector<1x32xi32>
    %530 = arith.cmpi sge, %440, %529 : vector<1x32xi32>
    %c32_i32 = arith.constant 32 : i32
    %531 = vector.broadcast %c32_i32 : i32 to vector<1x32xi32>
    %532 = arith.cmpi slt, %440, %531 : vector<1x32xi32>
    %533 = arith.andi %530, %532 : vector<1x32xi1>
    %cst_129 = arith.constant 1.000000e+00 : f32
    %cst_130 = arith.constant 0.000000e+00 : f32
    %534 = vector.broadcast %cst_129 : f32 to vector<1x32xf32>
    %535 = vector.broadcast %cst_130 : f32 to vector<1x32xf32>
    %536 = arith.select %533, %534, %535 : vector<1x32xi1>, vector<1x32xf32>
    %537 = vector.broadcast %536 : vector<1x32xf32> to vector<8x32xf32>
    %538 = arith.mulf %443, %537 : vector<8x32xf32>
    %cst_131 = arith.constant dense<0.000000e+00> : vector<8x8xf32>
    %539 = tpu.matmul %538, %444, %cst_131 {dimension_numbers = #tpu.dot_dimension_numbers<[1], [1], [0], [0], [0, 0, 1, 0], [], []>} : vector<8x32xf32>, vector<8x32xf32>, vector<8x8xf32> -> vector<8x8xf32>
    %cst_132 = arith.constant dense<0xFF800000> : vector<8xf32>
    %540 = vector.multi_reduction <maximumf>, %539, %cst_132 [1] : vector<8x8xf32> to vector<8xf32>
    %541 = vector.shape_cast %540 : vector<8xf32> to vector<8x1xf32>
    %542 = vector.broadcast %541 : vector<8x1xf32> to vector<8x8xf32>
    %543 = arith.subf %539, %542 : vector<8x8xf32>
    %544 = math.exp %543 : vector<8x8xf32>
    %cst_133 = arith.constant dense<0.000000e+00> : vector<8xf32>
    %545 = vector.multi_reduction <add>, %544, %cst_133 [1] : vector<8x8xf32> to vector<8xf32>
    %546 = vector.shape_cast %545 : vector<8xf32> to vector<8x1xf32>
    %547 = tpu.reciprocal %546 {approx = true} : vector<8x1xf32> -> vector<8x1xf32>
    %548 = vector.broadcast %547 : vector<8x1xf32> to vector<8x8xf32>
    %549 = arith.mulf %544, %548 : vector<8x8xf32>
    %550 = arith.addf %523, %549 : vector<8x8xf32>
    %551 = vector.extract_strided_slice %549 {offsets = [7, 0], sizes = [1, 8], strides = [1, 1]} : vector<8x8xf32> to vector<1x8xf32>
    %552 = vector.broadcast %536 : vector<1x32xf32> to vector<8x32xf32>
    %553 = arith.mulf %445, %552 : vector<8x32xf32>
    %cst_134 = arith.constant dense<0.000000e+00> : vector<1x32xf32>
    %554 = tpu.matmul %551, %553, %cst_134 {dimension_numbers = #tpu.dot_dimension_numbers<[1], [0], [0], [1], [0, 0, 1, 1], [], []>} : vector<1x8xf32>, vector<8x32xf32>, vector<1x32xf32> -> vector<1x32xf32>
    %555 = arith.addf %528, %554 : vector<1x32xf32>
    %cst_135 = arith.constant 2.500000e-01 : f32
    %556 = vector.broadcast %cst_135 : f32 to vector<8x8xf32>
    %557 = arith.mulf %550, %556 : vector<8x8xf32>
    %558 = vector.extract_strided_slice %439 {offsets = [1, 0, 0], sizes = [1, 8, 96], strides = [1, 1, 1]} : vector<2x8x96xf32> to vector<1x8x96xf32>
    %559 = vector.shape_cast %558 : vector<1x8x96xf32> to vector<8x96xf32>
    %560 = vector.extract_strided_slice %559 {offsets = [0, 0], sizes = [8, 32], strides = [1, 1]} : vector<8x96xf32> to vector<8x32xf32>
    %561 = vector.extract_strided_slice %559 {offsets = [0, 32], sizes = [8, 32], strides = [1, 1]} : vector<8x96xf32> to vector<8x32xf32>
    %562 = vector.extract_strided_slice %559 {offsets = [0, 64], sizes = [8, 32], strides = [1, 1]} : vector<8x96xf32> to vector<8x32xf32>
    %cst_136 = arith.constant 0.000000e+00 : f32
    %563 = vector.broadcast %cst_136 : f32 to vector<8x8xf32>
    %cst_137 = arith.constant 0.000000e+00 : f32
    %564 = vector.broadcast %cst_137 : f32 to vector<1x32xf32>
    %c0_i32_138 = arith.constant 0 : i32
    %565 = vector.broadcast %c0_i32_138 : i32 to vector<1x32xi32>
    %566 = arith.cmpi sge, %440, %565 : vector<1x32xi32>
    %c8_i32_139 = arith.constant 8 : i32
    %567 = vector.broadcast %c8_i32_139 : i32 to vector<1x32xi32>
    %568 = arith.cmpi slt, %440, %567 : vector<1x32xi32>
    %569 = arith.andi %566, %568 : vector<1x32xi1>
    %cst_140 = arith.constant 1.000000e+00 : f32
    %cst_141 = arith.constant 0.000000e+00 : f32
    %570 = vector.broadcast %cst_140 : f32 to vector<1x32xf32>
    %571 = vector.broadcast %cst_141 : f32 to vector<1x32xf32>
    %572 = arith.select %569, %570, %571 : vector<1x32xi1>, vector<1x32xf32>
    %573 = vector.broadcast %572 : vector<1x32xf32> to vector<8x32xf32>
    %574 = arith.mulf %560, %573 : vector<8x32xf32>
    %cst_142 = arith.constant dense<0.000000e+00> : vector<8x8xf32>
    %575 = tpu.matmul %574, %561, %cst_142 {dimension_numbers = #tpu.dot_dimension_numbers<[1], [1], [0], [0], [0, 0, 1, 0], [], []>} : vector<8x32xf32>, vector<8x32xf32>, vector<8x8xf32> -> vector<8x8xf32>
    %cst_143 = arith.constant dense<0xFF800000> : vector<8xf32>
    %576 = vector.multi_reduction <maximumf>, %575, %cst_143 [1] : vector<8x8xf32> to vector<8xf32>
    %577 = vector.shape_cast %576 : vector<8xf32> to vector<8x1xf32>
    %578 = vector.broadcast %577 : vector<8x1xf32> to vector<8x8xf32>
    %579 = arith.subf %575, %578 : vector<8x8xf32>
    %580 = math.exp %579 : vector<8x8xf32>
    %cst_144 = arith.constant dense<0.000000e+00> : vector<8xf32>
    %581 = vector.multi_reduction <add>, %580, %cst_144 [1] : vector<8x8xf32> to vector<8xf32>
    %582 = vector.shape_cast %581 : vector<8xf32> to vector<8x1xf32>
    %583 = tpu.reciprocal %582 {approx = true} : vector<8x1xf32> -> vector<8x1xf32>
    %584 = vector.broadcast %583 : vector<8x1xf32> to vector<8x8xf32>
    %585 = arith.mulf %580, %584 : vector<8x8xf32>
    %586 = arith.addf %563, %585 : vector<8x8xf32>
    %587 = vector.extract_strided_slice %585 {offsets = [7, 0], sizes = [1, 8], strides = [1, 1]} : vector<8x8xf32> to vector<1x8xf32>
    %588 = vector.broadcast %572 : vector<1x32xf32> to vector<8x32xf32>
    %589 = arith.mulf %562, %588 : vector<8x32xf32>
    %cst_145 = arith.constant dense<0.000000e+00> : vector<1x32xf32>
    %590 = tpu.matmul %587, %589, %cst_145 {dimension_numbers = #tpu.dot_dimension_numbers<[1], [0], [0], [1], [0, 0, 1, 1], [], []>} : vector<1x8xf32>, vector<8x32xf32>, vector<1x32xf32> -> vector<1x32xf32>
    %591 = arith.addf %564, %590 : vector<1x32xf32>
    %c8_i32_146 = arith.constant 8 : i32
    %592 = vector.broadcast %c8_i32_146 : i32 to vector<1x32xi32>
    %593 = arith.cmpi sge, %440, %592 : vector<1x32xi32>
    %c16_i32_147 = arith.constant 16 : i32
    %594 = vector.broadcast %c16_i32_147 : i32 to vector<1x32xi32>
    %595 = arith.cmpi slt, %440, %594 : vector<1x32xi32>
    %596 = arith.andi %593, %595 : vector<1x32xi1>
    %cst_148 = arith.constant 1.000000e+00 : f32
    %cst_149 = arith.constant 0.000000e+00 : f32
    %597 = vector.broadcast %cst_148 : f32 to vector<1x32xf32>
    %598 = vector.broadcast %cst_149 : f32 to vector<1x32xf32>
    %599 = arith.select %596, %597, %598 : vector<1x32xi1>, vector<1x32xf32>
    %600 = vector.broadcast %599 : vector<1x32xf32> to vector<8x32xf32>
    %601 = arith.mulf %560, %600 : vector<8x32xf32>
    %cst_150 = arith.constant dense<0.000000e+00> : vector<8x8xf32>
    %602 = tpu.matmul %601, %561, %cst_150 {dimension_numbers = #tpu.dot_dimension_numbers<[1], [1], [0], [0], [0, 0, 1, 0], [], []>} : vector<8x32xf32>, vector<8x32xf32>, vector<8x8xf32> -> vector<8x8xf32>
    %cst_151 = arith.constant dense<0xFF800000> : vector<8xf32>
    %603 = vector.multi_reduction <maximumf>, %602, %cst_151 [1] : vector<8x8xf32> to vector<8xf32>
    %604 = vector.shape_cast %603 : vector<8xf32> to vector<8x1xf32>
    %605 = vector.broadcast %604 : vector<8x1xf32> to vector<8x8xf32>
    %606 = arith.subf %602, %605 : vector<8x8xf32>
    %607 = math.exp %606 : vector<8x8xf32>
    %cst_152 = arith.constant dense<0.000000e+00> : vector<8xf32>
    %608 = vector.multi_reduction <add>, %607, %cst_152 [1] : vector<8x8xf32> to vector<8xf32>
    %609 = vector.shape_cast %608 : vector<8xf32> to vector<8x1xf32>
    %610 = tpu.reciprocal %609 {approx = true} : vector<8x1xf32> -> vector<8x1xf32>
    %611 = vector.broadcast %610 : vector<8x1xf32> to vector<8x8xf32>
    %612 = arith.mulf %607, %611 : vector<8x8xf32>
    %613 = arith.addf %586, %612 : vector<8x8xf32>
    %614 = vector.extract_strided_slice %612 {offsets = [7, 0], sizes = [1, 8], strides = [1, 1]} : vector<8x8xf32> to vector<1x8xf32>
    %615 = vector.broadcast %599 : vector<1x32xf32> to vector<8x32xf32>
    %616 = arith.mulf %562, %615 : vector<8x32xf32>
    %cst_153 = arith.constant dense<0.000000e+00> : vector<1x32xf32>
    %617 = tpu.matmul %614, %616, %cst_153 {dimension_numbers = #tpu.dot_dimension_numbers<[1], [0], [0], [1], [0, 0, 1, 1], [], []>} : vector<1x8xf32>, vector<8x32xf32>, vector<1x32xf32> -> vector<1x32xf32>
    %618 = arith.addf %591, %617 : vector<1x32xf32>
    %c16_i32_154 = arith.constant 16 : i32
    %619 = vector.broadcast %c16_i32_154 : i32 to vector<1x32xi32>
    %620 = arith.cmpi sge, %440, %619 : vector<1x32xi32>
    %c24_i32_155 = arith.constant 24 : i32
    %621 = vector.broadcast %c24_i32_155 : i32 to vector<1x32xi32>
    %622 = arith.cmpi slt, %440, %621 : vector<1x32xi32>
    %623 = arith.andi %620, %622 : vector<1x32xi1>
    %cst_156 = arith.constant 1.000000e+00 : f32
    %cst_157 = arith.constant 0.000000e+00 : f32
    %624 = vector.broadcast %cst_156 : f32 to vector<1x32xf32>
    %625 = vector.broadcast %cst_157 : f32 to vector<1x32xf32>
    %626 = arith.select %623, %624, %625 : vector<1x32xi1>, vector<1x32xf32>
    %627 = vector.broadcast %626 : vector<1x32xf32> to vector<8x32xf32>
    %628 = arith.mulf %560, %627 : vector<8x32xf32>
    %cst_158 = arith.constant dense<0.000000e+00> : vector<8x8xf32>
    %629 = tpu.matmul %628, %561, %cst_158 {dimension_numbers = #tpu.dot_dimension_numbers<[1], [1], [0], [0], [0, 0, 1, 0], [], []>} : vector<8x32xf32>, vector<8x32xf32>, vector<8x8xf32> -> vector<8x8xf32>
    %cst_159 = arith.constant dense<0xFF800000> : vector<8xf32>
    %630 = vector.multi_reduction <maximumf>, %629, %cst_159 [1] : vector<8x8xf32> to vector<8xf32>
    %631 = vector.shape_cast %630 : vector<8xf32> to vector<8x1xf32>
    %632 = vector.broadcast %631 : vector<8x1xf32> to vector<8x8xf32>
    %633 = arith.subf %629, %632 : vector<8x8xf32>
    %634 = math.exp %633 : vector<8x8xf32>
    %cst_160 = arith.constant dense<0.000000e+00> : vector<8xf32>
    %635 = vector.multi_reduction <add>, %634, %cst_160 [1] : vector<8x8xf32> to vector<8xf32>
    %636 = vector.shape_cast %635 : vector<8xf32> to vector<8x1xf32>
    %637 = tpu.reciprocal %636 {approx = true} : vector<8x1xf32> -> vector<8x1xf32>
    %638 = vector.broadcast %637 : vector<8x1xf32> to vector<8x8xf32>
    %639 = arith.mulf %634, %638 : vector<8x8xf32>
    %640 = arith.addf %613, %639 : vector<8x8xf32>
    %641 = vector.extract_strided_slice %639 {offsets = [7, 0], sizes = [1, 8], strides = [1, 1]} : vector<8x8xf32> to vector<1x8xf32>
    %642 = vector.broadcast %626 : vector<1x32xf32> to vector<8x32xf32>
    %643 = arith.mulf %562, %642 : vector<8x32xf32>
    %cst_161 = arith.constant dense<0.000000e+00> : vector<1x32xf32>
    %644 = tpu.matmul %641, %643, %cst_161 {dimension_numbers = #tpu.dot_dimension_numbers<[1], [0], [0], [1], [0, 0, 1, 1], [], []>} : vector<1x8xf32>, vector<8x32xf32>, vector<1x32xf32> -> vector<1x32xf32>
    %645 = arith.addf %618, %644 : vector<1x32xf32>
    %c24_i32_162 = arith.constant 24 : i32
    %646 = vector.broadcast %c24_i32_162 : i32 to vector<1x32xi32>
    %647 = arith.cmpi sge, %440, %646 : vector<1x32xi32>
    %c32_i32_163 = arith.constant 32 : i32
    %648 = vector.broadcast %c32_i32_163 : i32 to vector<1x32xi32>
    %649 = arith.cmpi slt, %440, %648 : vector<1x32xi32>
    %650 = arith.andi %647, %649 : vector<1x32xi1>
    %cst_164 = arith.constant 1.000000e+00 : f32
    %cst_165 = arith.constant 0.000000e+00 : f32
    %651 = vector.broadcast %cst_164 : f32 to vector<1x32xf32>
    %652 = vector.broadcast %cst_165 : f32 to vector<1x32xf32>
    %653 = arith.select %650, %651, %652 : vector<1x32xi1>, vector<1x32xf32>
    %654 = vector.broadcast %653 : vector<1x32xf32> to vector<8x32xf32>
    %655 = arith.mulf %560, %654 : vector<8x32xf32>
    %cst_166 = arith.constant dense<0.000000e+00> : vector<8x8xf32>
    %656 = tpu.matmul %655, %561, %cst_166 {dimension_numbers = #tpu.dot_dimension_numbers<[1], [1], [0], [0], [0, 0, 1, 0], [], []>} : vector<8x32xf32>, vector<8x32xf32>, vector<8x8xf32> -> vector<8x8xf32>
    %cst_167 = arith.constant dense<0xFF800000> : vector<8xf32>
    %657 = vector.multi_reduction <maximumf>, %656, %cst_167 [1] : vector<8x8xf32> to vector<8xf32>
    %658 = vector.shape_cast %657 : vector<8xf32> to vector<8x1xf32>
    %659 = vector.broadcast %658 : vector<8x1xf32> to vector<8x8xf32>
    %660 = arith.subf %656, %659 : vector<8x8xf32>
    %661 = math.exp %660 : vector<8x8xf32>
    %cst_168 = arith.constant dense<0.000000e+00> : vector<8xf32>
    %662 = vector.multi_reduction <add>, %661, %cst_168 [1] : vector<8x8xf32> to vector<8xf32>
    %663 = vector.shape_cast %662 : vector<8xf32> to vector<8x1xf32>
    %664 = tpu.reciprocal %663 {approx = true} : vector<8x1xf32> -> vector<8x1xf32>
    %665 = vector.broadcast %664 : vector<8x1xf32> to vector<8x8xf32>
    %666 = arith.mulf %661, %665 : vector<8x8xf32>
    %667 = arith.addf %640, %666 : vector<8x8xf32>
    %668 = vector.extract_strided_slice %666 {offsets = [7, 0], sizes = [1, 8], strides = [1, 1]} : vector<8x8xf32> to vector<1x8xf32>
    %669 = vector.broadcast %653 : vector<1x32xf32> to vector<8x32xf32>
    %670 = arith.mulf %562, %669 : vector<8x32xf32>
    %cst_169 = arith.constant dense<0.000000e+00> : vector<1x32xf32>
    %671 = tpu.matmul %668, %670, %cst_169 {dimension_numbers = #tpu.dot_dimension_numbers<[1], [0], [0], [1], [0, 0, 1, 1], [], []>} : vector<1x8xf32>, vector<8x32xf32>, vector<1x32xf32> -> vector<1x32xf32>
    %672 = arith.addf %645, %671 : vector<1x32xf32>
    %cst_170 = arith.constant 2.500000e-01 : f32
    %673 = vector.broadcast %cst_170 : f32 to vector<8x8xf32>
    %674 = arith.mulf %667, %673 : vector<8x8xf32>
    %675 = vector.shape_cast %557 : vector<8x8xf32> to vector<1x8x8xf32>
    %676 = vector.shape_cast %674 : vector<8x8xf32> to vector<1x8x8xf32>
    %677 = tpu.concatenate %675, %676 in 0 : vector<1x8x8xf32>, vector<1x8x8xf32> -> vector<2x8x8xf32>
    %c0_171 = arith.constant 0 : index
    %c0_172 = arith.constant 0 : index
    %c0_173 = arith.constant 0 : index
    %678 = vector.load %arg5[%c0_171, %c0_172, %c0_173] : memref<2x8x8xf32, #tpu.memory_space<vmem>>, vector<2x8x8xf32>
    tpu.vector_store %arg5[%c0_171, %c0_172, %c0_173], %677 {strides = array<i32>} : memref<2x8x8xf32, #tpu.memory_space<vmem>>, vector<2x8x8xf32>,
    %679 = tpu.concatenate %555, %672 in 0 : vector<1x32xf32>, vector<1x32xf32> -> vector<2x32xf32>
    %cst_174 = arith.constant dense<0.000000e+00> : vector<2x32xf32>
    %680 = tpu.matmul %679, %10, %cst_174 {dimension_numbers = #tpu.dot_dimension_numbers<[1], [0], [0], [1], [0, 0, 1, 1], [], []>} : vector<2x32xf32>, vector<32x32xf32>, vector<2x32xf32> -> vector<2x32xf32>
    %681 = vector.broadcast %13 : vector<1x32xf32> to vector<2x32xf32>
    %682 = arith.addf %680, %681 : vector<2x32xf32>
    %cst_175 = arith.constant dense<0.000000e+00> : vector<2x32xf32>
    %683 = tpu.matmul %682, %11, %cst_175 {dimension_numbers = #tpu.dot_dimension_numbers<[1], [0], [0], [1], [0, 0, 1, 1], [], []>} : vector<2x32xf32>, vector<32x32xf32>, vector<2x32xf32> -> vector<2x32xf32>
    %684 = vector.broadcast %14 : vector<1x32xf32> to vector<2x32xf32>
    %685 = arith.addf %683, %684 : vector<2x32xf32>
    %cst_176 = arith.constant 0.000000e+00 : f32
    %686 = vector.broadcast %cst_176 : f32 to vector<2x32xf32>
    %687 = arith.maximumf %685, %686 : vector<2x32xf32>
    %cst_177 = arith.constant dense<0.000000e+00> : vector<2x32xf32>
    %688 = tpu.matmul %687, %12, %cst_177 {dimension_numbers = #tpu.dot_dimension_numbers<[1], [0], [0], [1], [0, 0, 1, 1], [], []>} : vector<2x32xf32>, vector<32x32xf32>, vector<2x32xf32> -> vector<2x32xf32>
    %689 = vector.broadcast %15 : vector<1x32xf32> to vector<2x32xf32>
    %690 = arith.addf %688, %689 : vector<2x32xf32>
    %691 = vector.extract_strided_slice %690 {offsets = [0, 0], sizes = [2, 1], strides = [1, 1]} : vector<2x32xf32> to vector<2x1xf32>
    %c0_178 = arith.constant 0 : index
    %c0_179 = arith.constant 0 : index
    %692 = vector.load %arg4[%c0_178, %c0_179] : memref<2x1xf32, #tpu.memory_space<vmem>>, vector<2x1xf32>
    tpu.vector_store %arg4[%c0_178, %c0_179], %691 {strides = array<i32>} : memref<2x1xf32, #tpu.memory_space<vmem>>, vector<2x1xf32>,
    return
  }
  func.func @transform_0(%arg0: i32) -> (i32, i32) {
    %c0_i32 = arith.constant 0 : i32
    %c0_i32_0 = arith.constant 0 : i32
    %c0_i32_1 = arith.constant 0 : i32
    return %c0_i32, %c0_i32_0 : i32, i32
  }
  func.func @transform_1(%arg0: i32) -> (i32, i32) {
    %c0_i32 = arith.constant 0 : i32
    %c0_i32_0 = arith.constant 0 : i32
    %c0_i32_1 = arith.constant 0 : i32
    return %c0_i32, %c0_i32_0 : i32, i32
  }
  func.func @transform_2(%arg0: i32) -> (i32, i32) {
    %c0_i32 = arith.constant 0 : i32
    %c0_i32_0 = arith.constant 0 : i32
    %c0_i32_1 = arith.constant 0 : i32
    return %c0_i32, %c0_i32_0 : i32, i32
  }
  func.func @transform_3(%arg0: i32) -> (i32, i32) {
    %c0_i32 = arith.constant 0 : i32
    %c0_i32_0 = arith.constant 0 : i32
    %c0_i32_1 = arith.constant 0 : i32
    return %c0_i32, %c0_i32_0 : i32, i32
  }
  func.func @transform_4(%arg0: i32) -> (i32, i32, i32) {
    %c0_i32 = arith.constant 0 : i32
    %c0_i32_0 = arith.constant 0 : i32
    %c0_i32_1 = arith.constant 0 : i32
    %c0_i32_2 = arith.constant 0 : i32
    return %c0_i32, %c0_i32_0, %c0_i32_1 : i32, i32, i32
  }
}

</mosaic_0001>

<llo_original>
// kernel: forward.1
$region0: #{forward.1}
  #allocation0 [shape = 'u32[]', space=smem, size = 0x4, offset = 0x4, fixed_abs, tag = 'smem constant byte address 0x4 - core index']
  #allocation1 [shape = 'u32[144,128]{1,0:T(1,128)}', space=vmem, size = 0x12000, scoped, tag = 'internal scratch']
  #allocation2 [shape = 'f32[16,32]{1,0:T(8,128)}', space=vmem, size = 0x2000, scoped, tag = 'scratch operand']
  #allocation3 [shape = 'f32[2,8,32]{2,1,0:T(8,128)}', space=vmem, size = 0x2000, scoped, tag = 'scratch operand']
  %s0 = inlined_call_operand.vmem [shape: f32[16,16], index: 0, kind: input, shape index: {}]
  %s1 = inlined_call_operand.vmem [shape: f32[184,96], index: 1, kind: input, shape index: {}]
  %s2 = inlined_call_operand.vmem [shape: f32[120,32], index: 2, kind: input, shape index: {}]
  %s3 = inlined_call_operand.vmem [shape: f32[2,1], index: 3, kind: output, shape index: {0}]
  %s4 = inlined_call_operand.hbm [shape: f32[2,8,8], index: 4, kind: output, shape index: {1}]
  %5 = xla_tuple %s3, %s4
  %s6 = sld [smem:[#allocation0]]
  $region30: #{forward.1} parent=0
    _
  %s8 = ssub.s32 1, %s6
  %s9 = scalar_select 0, %s8, %s6
  $region1: #{forward.1} parent=0
    #allocation4 [shape = 'u8[8192]{0}', space=vmem, size = 0x2000, scoped, tag = 'output window, operand 1, single buffered']
    #allocation5 [shape = 's32[1]{0}', space=sflag, size = 0x4, scoped, tag = 'scoped memory for forward.1']
    %10 = vsyncpa [#allocation5], 0
    // Predicated region
    $region2: #{forward.1} parent=1 // pred_check
      _
    $region3: #{forward.1} parent=1 // pred_check_branch
      %12 = sbr.rel (0) target = $region5
    $region4: #{forward.1} parent=1 // pred_region
      _
    $region5: #{forward.1} parent=1 // pred_fallthru
      _
    // Predicated region
    $region6: #{forward.1} parent=1 // pred_check
      _
    $region7: #{forward.1} parent=1 // pred_check_branch
      %14 = sbr.rel (0) target = $region9
    $region8: #{forward.1} parent=1 // pred_region
      _
    $region9: #{forward.1} parent=1 // pred_fallthru
      _
    // Predicated region
    $region10: #{forward.1} parent=1 // pred_check
      _
    $region11: #{forward.1} parent=1 // pred_check_branch
      %16 = sbr.rel (0) target = $region13
    $region12: #{forward.1} parent=1 // pred_region
      _
    $region13: #{forward.1} parent=1 // pred_fallthru
      _
    %v17 = vld [vmem:[%s1] sm:$0xff]
    %v18 = vld [vmem:[%s1 + $0x8] sm:$0xff]
    %v19 = vld [vmem:[%s1 + $0x10] sm:$0xff]
    %v20 = vld [vmem:[%s1 + $0x18] sm:$0xff]
    %v21 = vld [vmem:[%s1 + $0x20] sm:$0xff]
    %v22 = vld [vmem:[%s1 + $0x28] sm:$0xff]
    %v23 = vld [vmem:[%s1 + $0x30] sm:$0xff]
    %v24 = vld [vmem:[%s1 + $0x38] sm:$0xff]
    %v25 = vld [vmem:[%s1 + $0x40] sm:$0xff]
    %v26 = vld [vmem:[%s1 + $0x48] sm:$0xff]
    %v27 = vld [vmem:[%s1 + $0x50] sm:$0xff]
    %v28 = vld [vmem:[%s1 + $0x58] sm:$0xff]
    %v29 = vld [vmem:[%s1 + $0x60] sm:$0xff]
    %v30 = vld [vmem:[%s1 + $0x68] sm:$0xff]
    %v31 = vld [vmem:[%s1 + $0x70] sm:$0xff]
    %v32 = vld [vmem:[%s1 + $0x78] sm:$0xff]
    %v33 = vld [vmem:[%s1 + $0x80] sm:$0xff]
    %v34 = vld [vmem:[%s1 + $0x88] sm:$0xff]
    %v35 = vld [vmem:[%s1 + $0x90] sm:$0x1]
    %v36 = vld [vmem:[%s1 + $0x98] sm:$0x1]
    %v37 = vld [vmem:[%s1 + $0xa0] sm:$0x1]
    %v38 = vld [vmem:[%s1 + $0xa8] sm:$0x1]
    %v39 = vld [vmem:[%s1 + $0xb0] sm:$0x1]
    %v40 = vld [vmem:[%s2] sm:$0xff]
    %v41 = vld [vmem:[%s2 + $0x8] sm:$0xff]
    %v42 = vld [vmem:[%s2 + $0x10] sm:$0xff]
    %v43 = vld [vmem:[%s2 + $0x18] sm:$0xff]
    %v44 = vld [vmem:[%s2 + $0x20] sm:$0xff]
    %v45 = vld [vmem:[%s2 + $0x28] sm:$0xff]
    %v46 = vld [vmem:[%s2 + $0x30] sm:$0xff]
    %v47 = vld [vmem:[%s2 + $0x38] sm:$0xff]
    %v48 = vld [vmem:[%s2 + $0x40] sm:$0xff]
    %v49 = vld [vmem:[%s2 + $0x48] sm:$0xff]
    %v50 = vld [vmem:[%s2 + $0x50] sm:$0xff]
    %v51 = vld [vmem:[%s2 + $0x58] sm:$0xff]
    %v52 = vld [vmem:[%s2 + $0x60] sm:$0x1]
    %v53 = vld [vmem:[%s2 + $0x68] sm:$0x1]
    %v54 = vld [vmem:[%s2 + $0x70] sm:$0x1]
    %v55 = vld [vmem:[%s0] sm:$0xff]
    %v56 = vld [vmem:[%s0 + $0x8] sm:$0xff]
    %v57 = vlaneseq
    %v58 = vshrl.u32 %v57, 7
    %v59 = vsub.s32 0, %v58
    %v60 = vrot.slane %v35, %v59
    %vm61 = vcmask 130048
    %v63 = vsel %vm61, %v55, 0
    %v66 = vsel %vm61, %v56, 0
    %68 = vmatprep.subr.mxu0 0.0
    %69 = vmatpush1.msra.mxu0 0.0
    %70 = vmatprep.subr.mxu0 0.0
    %71 = vmatpush1.msra.mxu0 0.0
    %72 = vmatprep.subr.mxu0 0.0
    %73 = vmatpush1.msra.mxu0 0.0
    %74 = vmatprep.subr.mxu0 0.0
    %75 = vmatpush1.msra.mxu0 0.0
    %76 = vmatprep.subr.mxu0 0.0
    %77 = vmatpush1.msra.mxu0 0.0
    %78 = vmatprep.subr.mxu0 0.0
    %79 = vmatpush1.msra.mxu0 0.0
    %80 = vmatprep.subr.mxu0 0.0
    %81 = vmatpush1.msra.mxu0 0.0
    %82 = vmatprep.subr.mxu0 0.0
    %83 = vmatpush1.msra.mxu0 0.0
    %84 = vmatprep.subr.mxu0 0.0
    %85 = vmatpush1.msra.mxu0 0.0
    %86 = vmatprep.subr.mxu0 0.0
    %87 = vmatpush1.msra.mxu0 0.0
    %88 = vmatprep.subr.mxu0 0.0
    %89 = vmatpush1.msra.mxu0 0.0
    %90 = vmatprep.subr.mxu0 0.0
    %91 = vmatpush1.msra.mxu0 0.0
    %92 = vmatprep.subr.mxu0 0.0
    %93 = vmatpush1.msra.mxu0 0.0
    %94 = vmatprep.subr.mxu0 0.0
    %95 = vmatpush1.msra.mxu0 0.0
    %96 = vmatprep.subr.mxu0 0.0
    %97 = vmatpush1.msra.mxu0 %v18
    %98 = vmatprep.subr.mxu0 0.0
    %99 = vmatpush1.msra.mxu0 %v17
    %100 = vmatprep.subr.mxu0 0.0
    %101 = vmatpush2.msra.mxu0 0.0
    %102 = vmatprep.subr.mxu0 0.0
    %103 = vmatpush2.msra.mxu0 0.0
    %104 = vmatprep.subr.mxu0 0.0
    %105 = vmatpush2.msra.mxu0 0.0
    %106 = vmatprep.subr.mxu0 0.0
    %107 = vmatpush2.msra.mxu0 0.0
    %108 = vmatprep.subr.mxu0 0.0
    %109 = vmatpush2.msra.mxu0 0.0
    %110 = vmatprep.subr.mxu0 0.0
    %111 = vmatpush2.msra.mxu0 0.0
    %112 = vmatprep.subr.mxu0 0.0
    %113 = vmatpush2.msra.mxu0 0.0
    %114 = vmatprep.subr.mxu0 0.0
    %115 = vmatpush2.msra.mxu0 0.0
    %116 = vmatprep.subr.mxu0 0.0
    %117 = vmatpush2.msra.mxu0 0.0
    %118 = vmatprep.subr.mxu0 0.0
    %119 = vmatpush2.msra.mxu0 0.0
    %120 = vmatprep.subr.mxu0 0.0
    %121 = vmatpush2.msra.mxu0 0.0
    %122 = vmatprep.subr.mxu0 0.0
    %123 = vmatpush2.msra.mxu0 0.0
    %124 = vmatprep.subr.mxu0 0.0
    %125 = vmatpush2.msra.mxu0 0.0
    %126 = vmatprep.subr.mxu0 0.0
    %127 = vmatpush2.msra.mxu0 0.0
    %128 = vmatprep.subr.mxu0 0.0
    %129 = vmatpush2.msra.mxu0 0.0
    %130 = vmatprep.subr.mxu0 0.0
    %131 = vmatpush2.msra.mxu0 0.0
    %132 = vmatprep.mubr.f32.mxu0 0.0
    %133 = vmatmul.mubr.f32.gmra.mxu0 %v63
    %v134 = vpop.f32.mrf.mxu0
    %v135 = vadd.f32 %v60, %v134
    %v136 = vpop.f32.mrf.mxu0
    %137 = vmatprep.mubr.f32.mxu0 0.0
    %138 = vmatmul.mubr.f32.gmra.mxu0 %v66
    %v139 = vpop.f32.mrf.mxu0
    %v140 = vadd.f32 %v60, %v139
    %v141 = vpop.f32.mrf.mxu0
    %142 = vdwg.mxu0
    %v143 = vlaneseq
    %v144 = vshrl.u32 %v143, 7
    %v145 = vsub.s32 0, %v144
    %v146 = vrot.slane %v36, %v145
    %vm147 = vcmask 261120
    %v149 = vsel %vm147, 0.0, 0
    %151 = vmatprep.subr.mxu0 0.0
    %152 = vmatpush1.msra.mxu0 0.0
    %153 = vmatprep.subr.mxu0 0.0
    %154 = vmatpush1.msra.mxu0 0.0
    %155 = vmatprep.subr.mxu0 0.0
    %156 = vmatpush1.msra.mxu0 0.0
    %157 = vmatprep.subr.mxu0 0.0
    %158 = vmatpush1.msra.mxu0 0.0
    %159 = vmatprep.subr.mxu0 0.0
    %160 = vmatpush1.msra.mxu0 0.0
    %161 = vmatprep.subr.mxu0 0.0
    %162 = vmatpush1.msra.mxu0 0.0
    %163 = vmatprep.subr.mxu0 0.0
    %164 = vmatpush1.msra.mxu0 0.0
    %165 = vmatprep.subr.mxu0 0.0
    %166 = vmatpush1.msra.mxu0 0.0
    %167 = vmatprep.subr.mxu0 0.0
    %168 = vmatpush1.msra.mxu0 0.0
    %169 = vmatprep.subr.mxu0 0.0
    %170 = vmatpush1.msra.mxu0 0.0
    %171 = vmatprep.subr.mxu0 0.0
    %172 = vmatpush1.msra.mxu0 0.0
    %173 = vmatprep.subr.mxu0 0.0
    %174 = vmatpush1.msra.mxu0 0.0
    %175 = vmatprep.subr.mxu0 0.0
    %176 = vmatpush1.msra.mxu0 %v22
    %177 = vmatprep.subr.mxu0 0.0
    %178 = vmatpush1.msra.mxu0 %v21
    %179 = vmatprep.subr.mxu0 0.0
    %180 = vmatpush1.msra.mxu0 %v20
    %181 = vmatprep.subr.mxu0 0.0
    %182 = vmatpush1.msra.mxu0 %v19
    %183 = vmatprep.subr.mxu0 0.0
    %184 = vmatpush2.msra.mxu0 0.0
    %185 = vmatprep.subr.mxu0 0.0
    %186 = vmatpush2.msra.mxu0 0.0
    %187 = vmatprep.subr.mxu0 0.0
    %188 = vmatpush2.msra.mxu0 0.0
    %189 = vmatprep.subr.mxu0 0.0
    %190 = vmatpush2.msra.mxu0 0.0
    %191 = vmatprep.subr.mxu0 0.0
    %192 = vmatpush2.msra.mxu0 0.0
    %193 = vmatprep.subr.mxu0 0.0
    %194 = vmatpush2.msra.mxu0 0.0
    %195 = vmatprep.subr.mxu0 0.0
    %196 = vmatpush2.msra.mxu0 0.0
    %197 = vmatprep.subr.mxu0 0.0
    %198 = vmatpush2.msra.mxu0 0.0
    %199 = vmatprep.subr.mxu0 0.0
    %200 = vmatpush2.msra.mxu0 0.0
    %201 = vmatprep.subr.mxu0 0.0
    %202 = vmatpush2.msra.mxu0 0.0
    %203 = vmatprep.subr.mxu0 0.0
    %204 = vmatpush2.msra.mxu0 0.0
    %205 = vmatprep.subr.mxu0 0.0
    %206 = vmatpush2.msra.mxu0 0.0
    %207 = vmatprep.subr.mxu0 0.0
    %208 = vmatpush2.msra.mxu0 0.0
    %209 = vmatprep.subr.mxu0 0.0
    %210 = vmatpush2.msra.mxu0 0.0
    %211 = vmatprep.subr.mxu0 0.0
    %212 = vmatpush2.msra.mxu0 0.0
    %213 = vmatprep.subr.mxu0 0.0
    %214 = vmatpush2.msra.mxu0 0.0
    %215 = vmatprep.mubr.f32.mxu0 0.0
    %216 = vmatmul.mubr.f32.gmra.mxu0 %v149
    %v217 = vpop.f32.mrf.mxu0
    %v218 = vadd.f32 %v146, %v217
    %v219 = vpop.f32.mrf.mxu0
    %220 = vdwg.mxu0
    %v221 = vadd.f32 %v135, %v218
    %v222 = vxor.u32 %v221, 2147483648
    %v223 = vmul.f32 %v222, 1.442695
    %v224 = vpow.pop %v223
    %v225 = vadd.f32 %v224, 1.0
    %v226 = vrcp.pop %v225
    %v227 = vmul.f32 1.0, %v226
    %229 = vrot.lane.b32.xlu0 %v218, 64
    %v230 = vpop.permute.xlu0 %229
    %v232 = vmul.f32 %v227, %v230
    %234 = vrot.lane.b32.xlu0 %v232, 64
    %v235 = vpop.permute.xlu0 %234
    %v237 = vadd.f32 %v135, %v235
    %v238 = vtanh.pop %v237
    %v239 = vsub.f32 1.0, %v227
    %241 = vrot.lane.b32.xlu0 %v238, 96
    %v242 = vpop.permute.xlu0 %241
    %v244 = vmul.f32 %v239, %v242
    %v245 = vmul.f32 %v227, 0.0
    %v246 = vadd.f32 %v244, %v245
    %248 = vrot.lane.b32.xlu0 %v246, 96
    %v249 = vpop.permute.xlu0 %248
    %vm251 = vcmask 254976
    %252 = vst.msk [vmem:[#allocation2] sm:$0x3] %vm251, %v249
    %v253 = vsel %vm147, %v249, 0
    %255 = vmatprep.subr.mxu0 0.0
    %256 = vmatpush1.msra.mxu0 0.0
    %257 = vmatprep.subr.mxu0 0.0
    %258 = vmatpush1.msra.mxu0 0.0
    %259 = vmatprep.subr.mxu0 0.0
    %260 = vmatpush1.msra.mxu0 0.0
    %261 = vmatprep.subr.mxu0 0.0
    %262 = vmatpush1.msra.mxu0 0.0
    %263 = vmatprep.subr.mxu0 0.0
    %264 = vmatpush1.msra.mxu0 0.0
    %265 = vmatprep.subr.mxu0 0.0
    %266 = vmatpush1.msra.mxu0 0.0
    %267 = vmatprep.subr.mxu0 0.0
    %268 = vmatpush1.msra.mxu0 0.0
    %269 = vmatprep.subr.mxu0 0.0
    %270 = vmatpush1.msra.mxu0 0.0
    %271 = vmatprep.subr.mxu0 0.0
    %272 = vmatpush1.msra.mxu0 0.0
    %273 = vmatprep.subr.mxu0 0.0
    %274 = vmatpush1.msra.mxu0 0.0
    %275 = vmatprep.subr.mxu0 0.0
    %276 = vmatpush1.msra.mxu0 0.0
    %277 = vmatprep.subr.mxu0 0.0
    %278 = vmatpush1.msra.mxu0 0.0
    %279 = vmatprep.subr.mxu0 0.0
    %280 = vmatpush1.msra.mxu0 %v22
    %281 = vmatprep.subr.mxu0 0.0
    %282 = vmatpush1.msra.mxu0 %v21
    %283 = vmatprep.subr.mxu0 0.0
    %284 = vmatpush1.msra.mxu0 %v20
    %285 = vmatprep.subr.mxu0 0.0
    %286 = vmatpush1.msra.mxu0 %v19
    %287 = vmatprep.subr.mxu0 0.0
    %288 = vmatpush2.msra.mxu0 0.0
    %289 = vmatprep.subr.mxu0 0.0
    %290 = vmatpush2.msra.mxu0 0.0
    %291 = vmatprep.subr.mxu0 0.0
    %292 = vmatpush2.msra.mxu0 0.0
    %293 = vmatprep.subr.mxu0 0.0
    %294 = vmatpush2.msra.mxu0 0.0
    %295 = vmatprep.subr.mxu0 0.0
    %296 = vmatpush2.msra.mxu0 0.0
    %297 = vmatprep.subr.mxu0 0.0
    %298 = vmatpush2.msra.mxu0 0.0
    %299 = vmatprep.subr.mxu0 0.0
    %300 = vmatpush2.msra.mxu0 0.0
    %301 = vmatprep.subr.mxu0 0.0
    %302 = vmatpush2.msra.mxu0 0.0
    %303 = vmatprep.subr.mxu0 0.0
    %304 = vmatpush2.msra.mxu0 0.0
    %305 = vmatprep.subr.mxu0 0.0
    %306 = vmatpush2.msra.mxu0 0.0
    %307 = vmatprep.subr.mxu0 0.0
    %308 = vmatpush2.msra.mxu0 0.0
    %309 = vmatprep.subr.mxu0 0.0
    %310 = vmatpush2.msra.mxu0 0.0
    %311 = vmatprep.subr.mxu0 0.0
    %312 = vmatpush2.msra.mxu0 0.0
    %313 = vmatprep.subr.mxu0 0.0
    %314 = vmatpush2.msra.mxu0 0.0
    %315 = vmatprep.subr.mxu0 0.0
    %316 = vmatpush2.msra.mxu0 0.0
    %317 = vmatprep.subr.mxu0 0.0
    %318 = vmatpush2.msra.mxu0 0.0
    %319 = vmatprep.mubr.f32.mxu0 0.0
    %320 = vmatmul.mubr.f32.gmra.mxu0 %v253
    %v321 = vpop.f32.mrf.mxu0
    %v322 = vadd.f32 %v146, %v321
    %v323 = vpop.f32.mrf.mxu0
    %324 = vdwg.mxu0
    %v326 = vrot.slane %v322, 6
    %v328 = vadd.f32 %v135, %v326
    %v329 = vxor.u32 %v328, 2147483648
    %v330 = vmul.f32 %v329, 1.442695
    %v331 = vpow.pop %v330
    %v332 = vadd.f32 %v331, 1.0
    %v333 = vrcp.pop %v332
    %v334 = vmul.f32 1.0, %v333
    %335 = vrot.lane.b32.xlu0 %v326, 64
    %v336 = vpop.permute.xlu0 %335
    %v338 = vmul.f32 %v334, %v336
    %340 = vrot.lane.b32.xlu0 %v338, 64
    %v341 = vpop.permute.xlu0 %340
    %v343 = vadd.f32 %v135, %v341
    %v344 = vtanh.pop %v343
    %v345 = vsub.f32 1.0, %v334
    %347 = vrot.lane.b32.xlu0 %v344, 96
    %v348 = vpop.permute.xlu0 %347
    %v350 = vmul.f32 %v345, %v348
    %v351 = vrot.slane %v246, 6
    %v353 = vmul.f32 %v334, %v351
    %v354 = vadd.f32 %v350, %v353
    %356 = vrot.lane.b32.xlu0 %v354, 96
    %v357 = vpop.permute.xlu0 %356
    %vm359 = vcmask 257026
    %360 = vst.msk [vmem:[#allocation2] sm:$0xc] %vm359, %v357
    %v361 = vrot.slane %v354, 2
    %362 = vrot.lane.b32.xlu0 %v361, 96
    %v363 = vpop.permute.xlu0 %362
    %v364 = vsel %vm147, %v363, 0
    %366 = vmatprep.subr.mxu0 0.0
    %367 = vmatpush1.msra.mxu0 0.0
    %368 = vmatprep.subr.mxu0 0.0
    %369 = vmatpush1.msra.mxu0 0.0
    %370 = vmatprep.subr.mxu0 0.0
    %371 = vmatpush1.msra.mxu0 0.0
    %372 = vmatprep.subr.mxu0 0.0
    %373 = vmatpush1.msra.mxu0 0.0
    %374 = vmatprep.subr.mxu0 0.0
    %375 = vmatpush1.msra.mxu0 0.0
    %376 = vmatprep.subr.mxu0 0.0
    %377 = vmatpush1.msra.mxu0 0.0
    %378 = vmatprep.subr.mxu0 0.0
    %379 = vmatpush1.msra.mxu0 0.0
    %380 = vmatprep.subr.mxu0 0.0
    %381 = vmatpush1.msra.mxu0 0.0
    %382 = vmatprep.subr.mxu0 0.0
    %383 = vmatpush1.msra.mxu0 0.0
    %384 = vmatprep.subr.mxu0 0.0
    %385 = vmatpush1.msra.mxu0 0.0
    %386 = vmatprep.subr.mxu0 0.0
    %387 = vmatpush1.msra.mxu0 0.0
    %388 = vmatprep.subr.mxu0 0.0
    %389 = vmatpush1.msra.mxu0 0.0
    %390 = vmatprep.subr.mxu0 0.0
    %391 = vmatpush1.msra.mxu0 %v22
    %392 = vmatprep.subr.mxu0 0.0
    %393 = vmatpush1.msra.mxu0 %v21
    %394 = vmatprep.subr.mxu0 0.0
    %395 = vmatpush1.msra.mxu0 %v20
    %396 = vmatprep.subr.mxu0 0.0
    %397 = vmatpush1.msra.mxu0 %v19
    %398 = vmatprep.subr.mxu0 0.0
    %399 = vmatpush2.msra.mxu0 0.0
    %400 = vmatprep.subr.mxu0 0.0
    %401 = vmatpush2.msra.mxu0 0.0
    %402 = vmatprep.subr.mxu0 0.0
    %403 = vmatpush2.msra.mxu0 0.0
    %404 = vmatprep.subr.mxu0 0.0
    %405 = vmatpush2.msra.mxu0 0.0
    %406 = vmatprep.subr.mxu0 0.0
    %407 = vmatpush2.msra.mxu0 0.0
    %408 = vmatprep.subr.mxu0 0.0
    %409 = vmatpush2.msra.mxu0 0.0
    %410 = vmatprep.subr.mxu0 0.0
    %411 = vmatpush2.msra.mxu0 0.0
    %412 = vmatprep.subr.mxu0 0.0
    %413 = vmatpush2.msra.mxu0 0.0
    %414 = vmatprep.subr.mxu0 0.0
    %415 = vmatpush2.msra.mxu0 0.0
    %416 = vmatprep.subr.mxu0 0.0
    %417 = vmatpush2.msra.mxu0 0.0
    %418 = vmatprep.subr.mxu0 0.0
    %419 = vmatpush2.msra.mxu0 0.0
    %420 = vmatprep.subr.mxu0 0.0
    %421 = vmatpush2.msra.mxu0 0.0
    %422 = vmatprep.subr.mxu0 0.0
    %423 = vmatpush2.msra.mxu0 0.0
    %424 = vmatprep.subr.mxu0 0.0
    %425 = vmatpush2.msra.mxu0 0.0
    %426 = vmatprep.subr.mxu0 0.0
    %427 = vmatpush2.msra.mxu0 0.0
    %428 = vmatprep.subr.mxu0 0.0
    %429 = vmatpush2.msra.mxu0 0.0
    %430 = vmatprep.mubr.f32.mxu0 0.0
    %431 = vmatmul.mubr.f32.gmra.mxu0 %v364
    %v432 = vpop.f32.mrf.mxu0
    %v433 = vadd.f32 %v146, %v432
    %v434 = vpop.f32.mrf.mxu0
    %435 = vdwg.mxu0
    %v437 = vrot.slane %v433, 4
    %v439 = vadd.f32 %v135, %v437
    %v440 = vxor.u32 %v439, 2147483648
    %v441 = vmul.f32 %v440, 1.442695
    %v442 = vpow.pop %v441
    %v443 = vadd.f32 %v442, 1.0
    %v444 = vrcp.pop %v443
    %v445 = vmul.f32 1.0, %v444
    %446 = vrot.lane.b32.xlu0 %v437, 64
    %v447 = vpop.permute.xlu0 %446
    %v449 = vmul.f32 %v445, %v447
    %451 = vrot.lane.b32.xlu0 %v449, 64
    %v452 = vpop.permute.xlu0 %451
    %v454 = vadd.f32 %v135, %v452
    %v455 = vtanh.pop %v454
    %v456 = vsub.f32 1.0, %v445
    %458 = vrot.lane.b32.xlu0 %v455, 96
    %v459 = vpop.permute.xlu0 %458
    %v461 = vmul.f32 %v456, %v459
    %v462 = vrot.slane %v354, 6
    %v464 = vmul.f32 %v445, %v462
    %v465 = vadd.f32 %v461, %v464
    %467 = vrot.lane.b32.xlu0 %v465, 96
    %v468 = vpop.permute.xlu0 %467
    %vm470 = vcmask 259076
    %471 = vst.msk [vmem:[#allocation2] sm:$0x30] %vm470, %v468
    %v472 = vrot.slane %v465, 4
    %473 = vrot.lane.b32.xlu0 %v472, 96
    %v474 = vpop.permute.xlu0 %473
    %v475 = vsel %vm147, %v474, 0
    %477 = vmatprep.subr.mxu0 0.0
    %478 = vmatpush1.msra.mxu0 0.0
    %479 = vmatprep.subr.mxu0 0.0
    %480 = vmatpush1.msra.mxu0 0.0
    %481 = vmatprep.subr.mxu0 0.0
    %482 = vmatpush1.msra.mxu0 0.0
    %483 = vmatprep.subr.mxu0 0.0
    %484 = vmatpush1.msra.mxu0 0.0
    %485 = vmatprep.subr.mxu0 0.0
    %486 = vmatpush1.msra.mxu0 0.0
    %487 = vmatprep.subr.mxu0 0.0
    %488 = vmatpush1.msra.mxu0 0.0
    %489 = vmatprep.subr.mxu0 0.0
    %490 = vmatpush1.msra.mxu0 0.0
    %491 = vmatprep.subr.mxu0 0.0
    %492 = vmatpush1.msra.mxu0 0.0
    %493 = vmatprep.subr.mxu0 0.0
    %494 = vmatpush1.msra.mxu0 0.0
    %495 = vmatprep.subr.mxu0 0.0
    %496 = vmatpush1.msra.mxu0 0.0
    %497 = vmatprep.subr.mxu0 0.0
    %498 = vmatpush1.msra.mxu0 0.0
    %499 = vmatprep.subr.mxu0 0.0
    %500 = vmatpush1.msra.mxu0 0.0
    %501 = vmatprep.subr.mxu0 0.0
    %502 = vmatpush1.msra.mxu0 %v22
    %503 = vmatprep.subr.mxu0 0.0
    %504 = vmatpush1.msra.mxu0 %v21
    %505 = vmatprep.subr.mxu0 0.0
    %506 = vmatpush1.msra.mxu0 %v20
    %507 = vmatprep.subr.mxu0 0.0
    %508 = vmatpush1.msra.mxu0 %v19
    %509 = vmatprep.subr.mxu0 0.0
    %510 = vmatpush2.msra.mxu0 0.0
    %511 = vmatprep.subr.mxu0 0.0
    %512 = vmatpush2.msra.mxu0 0.0
    %513 = vmatprep.subr.mxu0 0.0
    %514 = vmatpush2.msra.mxu0 0.0
    %515 = vmatprep.subr.mxu0 0.0
    %516 = vmatpush2.msra.mxu0 0.0
    %517 = vmatprep.subr.mxu0 0.0
    %518 = vmatpush2.msra.mxu0 0.0
    %519 = vmatprep.subr.mxu0 0.0
    %520 = vmatpush2.msra.mxu0 0.0
    %521 = vmatprep.subr.mxu0 0.0
    %522 = vmatpush2.msra.mxu0 0.0
    %523 = vmatprep.subr.mxu0 0.0
    %524 = vmatpush2.msra.mxu0 0.0
    %525 = vmatprep.subr.mxu0 0.0
    %526 = vmatpush2.msra.mxu0 0.0
    %527 = vmatprep.subr.mxu0 0.0
    %528 = vmatpush2.msra.mxu0 0.0
    %529 = vmatprep.subr.mxu0 0.0
    %530 = vmatpush2.msra.mxu0 0.0
    %531 = vmatprep.subr.mxu0 0.0
    %532 = vmatpush2.msra.mxu0 0.0
    %533 = vmatprep.subr.mxu0 0.0
    %534 = vmatpush2.msra.mxu0 0.0
    %535 = vmatprep.subr.mxu0 0.0
    %536 = vmatpush2.msra.mxu0 0.0
    %537 = vmatprep.subr.mxu0 0.0
    %538 = vmatpush2.msra.mxu0 0.0
    %539 = vmatprep.subr.mxu0 0.0
    %540 = vmatpush2.msra.mxu0 0.0
    %541 = vmatprep.mubr.f32.mxu0 0.0
    %542 = vmatmul.mubr.f32.gmra.mxu0 %v475
    %v543 = vpop.f32.mrf.mxu0
    %v544 = vadd.f32 %v146, %v543
    %v545 = vpop.f32.mrf.mxu0
    %546 = vdwg.mxu0
    %v548 = vrot.slane %v544, 2
    %v550 = vadd.f32 %v135, %v548
    %v551 = vxor.u32 %v550, 2147483648
    %v552 = vmul.f32 %v551, 1.442695
    %v553 = vpow.pop %v552
    %v554 = vadd.f32 %v553, 1.0
    %v555 = vrcp.pop %v554
    %v556 = vmul.f32 1.0, %v555
    %557 = vrot.lane.b32.xlu0 %v548, 64
    %v558 = vpop.permute.xlu0 %557
    %v560 = vmul.f32 %v556, %v558
    %562 = vrot.lane.b32.xlu0 %v560, 64
    %v563 = vpop.permute.xlu0 %562
    %v565 = vadd.f32 %v135, %v563
    %v566 = vtanh.pop %v565
    %v567 = vsub.f32 1.0, %v556
    %569 = vrot.lane.b32.xlu0 %v566, 96
    %v570 = vpop.permute.xlu0 %569
    %v572 = vmul.f32 %v567, %v570
    %v573 = vrot.slane %v465, 6
    %v575 = vmul.f32 %v556, %v573
    %v576 = vadd.f32 %v572, %v575
    %578 = vrot.lane.b32.xlu0 %v576, 96
    %v579 = vpop.permute.xlu0 %578
    %vm581 = vcmask 261126
    %582 = vst.msk [vmem:[#allocation2] sm:$0xc0] %vm581, %v579
    %v583 = vrot.slane %v576, 6
    %584 = vrot.lane.b32.xlu0 %v583, 96
    %v585 = vpop.permute.xlu0 %584
    %v586 = vsel %vm147, %v585, 0
    %588 = vmatprep.subr.mxu0 0.0
    %589 = vmatpush1.msra.mxu0 0.0
    %590 = vmatprep.subr.mxu0 0.0
    %591 = vmatpush1.msra.mxu0 0.0
    %592 = vmatprep.subr.mxu0 0.0
    %593 = vmatpush1.msra.mxu0 0.0
    %594 = vmatprep.subr.mxu0 0.0
    %595 = vmatpush1.msra.mxu0 0.0
    %596 = vmatprep.subr.mxu0 0.0
    %597 = vmatpush1.msra.mxu0 0.0
    %598 = vmatprep.subr.mxu0 0.0
    %599 = vmatpush1.msra.mxu0 0.0
    %600 = vmatprep.subr.mxu0 0.0
    %601 = vmatpush1.msra.mxu0 0.0
    %602 = vmatprep.subr.mxu0 0.0
    %603 = vmatpush1.msra.mxu0 0.0
    %604 = vmatprep.subr.mxu0 0.0
    %605 = vmatpush1.msra.mxu0 0.0
    %606 = vmatprep.subr.mxu0 0.0
    %607 = vmatpush1.msra.mxu0 0.0
    %608 = vmatprep.subr.mxu0 0.0
    %609 = vmatpush1.msra.mxu0 0.0
    %610 = vmatprep.subr.mxu0 0.0
    %611 = vmatpush1.msra.mxu0 0.0
    %612 = vmatprep.subr.mxu0 0.0
    %613 = vmatpush1.msra.mxu0 %v22
    %614 = vmatprep.subr.mxu0 0.0
    %615 = vmatpush1.msra.mxu0 %v21
    %616 = vmatprep.subr.mxu0 0.0
    %617 = vmatpush1.msra.mxu0 %v20
    %618 = vmatprep.subr.mxu0 0.0
    %619 = vmatpush1.msra.mxu0 %v19
    %620 = vmatprep.subr.mxu0 0.0
    %621 = vmatpush2.msra.mxu0 0.0
    %622 = vmatprep.subr.mxu0 0.0
    %623 = vmatpush2.msra.mxu0 0.0
    %624 = vmatprep.subr.mxu0 0.0
    %625 = vmatpush2.msra.mxu0 0.0
    %626 = vmatprep.subr.mxu0 0.0
    %627 = vmatpush2.msra.mxu0 0.0
    %628 = vmatprep.subr.mxu0 0.0
    %629 = vmatpush2.msra.mxu0 0.0
    %630 = vmatprep.subr.mxu0 0.0
    %631 = vmatpush2.msra.mxu0 0.0
    %632 = vmatprep.subr.mxu0 0.0
    %633 = vmatpush2.msra.mxu0 0.0
    %634 = vmatprep.subr.mxu0 0.0
    %635 = vmatpush2.msra.mxu0 0.0
    %636 = vmatprep.subr.mxu0 0.0
    %637 = vmatpush2.msra.mxu0 0.0
    %638 = vmatprep.subr.mxu0 0.0
    %639 = vmatpush2.msra.mxu0 0.0
    %640 = vmatprep.subr.mxu0 0.0
    %641 = vmatpush2.msra.mxu0 0.0
    %642 = vmatprep.subr.mxu0 0.0
    %643 = vmatpush2.msra.mxu0 0.0
    %644 = vmatprep.subr.mxu0 0.0
    %645 = vmatpush2.msra.mxu0 0.0
    %646 = vmatprep.subr.mxu0 0.0
    %647 = vmatpush2.msra.mxu0 0.0
    %648 = vmatprep.subr.mxu0 0.0
    %649 = vmatpush2.msra.mxu0 0.0
    %650 = vmatprep.subr.mxu0 0.0
    %651 = vmatpush2.msra.mxu0 0.0
    %652 = vmatprep.mubr.f32.mxu0 0.0
    %653 = vmatmul.mubr.f32.gmra.mxu0 %v586
    %v654 = vpop.f32.mrf.mxu0
    %v655 = vadd.f32 %v146, %v654
    %v656 = vpop.f32.mrf.mxu0
    %657 = vdwg.mxu0
    %v658 = vadd.f32 %v140, %v655
    %v659 = vxor.u32 %v658, 2147483648
    %v660 = vmul.f32 %v659, 1.442695
    %v661 = vpow.pop %v660
    %v662 = vadd.f32 %v661, 1.0
    %v663 = vrcp.pop %v662
    %v664 = vmul.f32 1.0, %v663
    %666 = vrot.lane.b32.xlu0 %v655, 64
    %v667 = vpop.permute.xlu0 %666
    %v669 = vmul.f32 %v664, %v667
    %671 = vrot.lane.b32.xlu0 %v669, 64
    %v672 = vpop.permute.xlu0 %671
    %v674 = vadd.f32 %v140, %v672
    %v675 = vtanh.pop %v674
    %v676 = vsub.f32 1.0, %v664
    %678 = vrot.lane.b32.xlu0 %v675, 96
    %v679 = vpop.permute.xlu0 %678
    %v681 = vmul.f32 %v676, %v679
    %v683 = vmul.f32 %v664, %v583
    %v684 = vadd.f32 %v681, %v683
    %686 = vrot.lane.b32.xlu0 %v684, 96
    %v687 = vpop.permute.xlu0 %686
    %689 = vst.msk [vmem:[#allocation2 + $0x8] sm:$0x3] %vm251, %v687
    %v690 = vsel %vm147, %v687, 0
    %692 = vmatprep.subr.mxu0 0.0
    %693 = vmatpush1.msra.mxu0 0.0
    %694 = vmatprep.subr.mxu0 0.0
    %695 = vmatpush1.msra.mxu0 0.0
    %696 = vmatprep.subr.mxu0 0.0
    %697 = vmatpush1.msra.mxu0 0.0
    %698 = vmatprep.subr.mxu0 0.0
    %699 = vmatpush1.msra.mxu0 0.0
    %700 = vmatprep.subr.mxu0 0.0
    %701 = vmatpush1.msra.mxu0 0.0
    %702 = vmatprep.subr.mxu0 0.0
    %703 = vmatpush1.msra.mxu0 0.0
    %704 = vmatprep.subr.mxu0 0.0
    %705 = vmatpush1.msra.mxu0 0.0
    %706 = vmatprep.subr.mxu0 0.0
    %707 = vmatpush1.msra.mxu0 0.0
    %708 = vmatprep.subr.mxu0 0.0
    %709 = vmatpush1.msra.mxu0 0.0
    %710 = vmatprep.subr.mxu0 0.0
    %711 = vmatpush1.msra.mxu0 0.0
    %712 = vmatprep.subr.mxu0 0.0
    %713 = vmatpush1.msra.mxu0 0.0
    %714 = vmatprep.subr.mxu0 0.0
    %715 = vmatpush1.msra.mxu0 0.0
    %716 = vmatprep.subr.mxu0 0.0
    %717 = vmatpush1.msra.mxu0 %v22
    %718 = vmatprep.subr.mxu0 0.0
    %719 = vmatpush1.msra.mxu0 %v21
    %720 = vmatprep.subr.mxu0 0.0
    %721 = vmatpush1.msra.mxu0 %v20
    %722 = vmatprep.subr.mxu0 0.0
    %723 = vmatpush1.msra.mxu0 %v19
    %724 = vmatprep.subr.mxu0 0.0
    %725 = vmatpush2.msra.mxu0 0.0
    %726 = vmatprep.subr.mxu0 0.0
    %727 = vmatpush2.msra.mxu0 0.0
    %728 = vmatprep.subr.mxu0 0.0
    %729 = vmatpush2.msra.mxu0 0.0
    %730 = vmatprep.subr.mxu0 0.0
    %731 = vmatpush2.msra.mxu0 0.0
    %732 = vmatprep.subr.mxu0 0.0
    %733 = vmatpush2.msra.mxu0 0.0
    %734 = vmatprep.subr.mxu0 0.0
    %735 = vmatpush2.msra.mxu0 0.0
    %736 = vmatprep.subr.mxu0 0.0
    %737 = vmatpush2.msra.mxu0 0.0
    %738 = vmatprep.subr.mxu0 0.0
    %739 = vmatpush2.msra.mxu0 0.0
    %740 = vmatprep.subr.mxu0 0.0
    %741 = vmatpush2.msra.mxu0 0.0
    %742 = vmatprep.subr.mxu0 0.0
    %743 = vmatpush2.msra.mxu0 0.0
    %744 = vmatprep.subr.mxu0 0.0
    %745 = vmatpush2.msra.mxu0 0.0
    %746 = vmatprep.subr.mxu0 0.0
    %747 = vmatpush2.msra.mxu0 0.0
    %748 = vmatprep.subr.mxu0 0.0
    %749 = vmatpush2.msra.mxu0 0.0
    %750 = vmatprep.subr.mxu0 0.0
    %751 = vmatpush2.msra.mxu0 0.0
    %752 = vmatprep.subr.mxu0 0.0
    %753 = vmatpush2.msra.mxu0 0.0
    %754 = vmatprep.subr.mxu0 0.0
    %755 = vmatpush2.msra.mxu0 0.0
    %756 = vmatprep.mubr.f32.mxu0 0.0
    %757 = vmatmul.mubr.f32.gmra.mxu0 %v690
    %v758 = vpop.f32.mrf.mxu0
    %v759 = vadd.f32 %v146, %v758
    %v760 = vpop.f32.mrf.mxu0
    %761 = vdwg.mxu0
    %v763 = vrot.slane %v759, 6
    %v765 = vadd.f32 %v140, %v763
    %v766 = vxor.u32 %v765, 2147483648
    %v767 = vmul.f32 %v766, 1.442695
    %v768 = vpow.pop %v767
    %v769 = vadd.f32 %v768, 1.0
    %v770 = vrcp.pop %v769
    %v771 = vmul.f32 1.0, %v770
    %772 = vrot.lane.b32.xlu0 %v763, 64
    %v773 = vpop.permute.xlu0 %772
    %v775 = vmul.f32 %v771, %v773
    %777 = vrot.lane.b32.xlu0 %v775, 64
    %v778 = vpop.permute.xlu0 %777
    %v780 = vadd.f32 %v140, %v778
    %v781 = vtanh.pop %v780
    %v782 = vsub.f32 1.0, %v771
    %784 = vrot.lane.b32.xlu0 %v781, 96
    %v785 = vpop.permute.xlu0 %784
    %v787 = vmul.f32 %v782, %v785
    %v788 = vrot.slane %v684, 6
    %v790 = vmul.f32 %v771, %v788
    %v791 = vadd.f32 %v787, %v790
    %793 = vrot.lane.b32.xlu0 %v791, 96
    %v794 = vpop.permute.xlu0 %793
    %796 = vst.msk [vmem:[#allocation2 + $0x8] sm:$0xc] %vm359, %v794
    %v797 = vrot.slane %v791, 2
    %798 = vrot.lane.b32.xlu0 %v797, 96
    %v799 = vpop.permute.xlu0 %798
    %v800 = vsel %vm147, %v799, 0
    %802 = vmatprep.subr.mxu0 0.0
    %803 = vmatpush1.msra.mxu0 0.0
    %804 = vmatprep.subr.mxu0 0.0
    %805 = vmatpush1.msra.mxu0 0.0
    %806 = vmatprep.subr.mxu0 0.0
    %807 = vmatpush1.msra.mxu0 0.0
    %808 = vmatprep.subr.mxu0 0.0
    %809 = vmatpush1.msra.mxu0 0.0
    %810 = vmatprep.subr.mxu0 0.0
    %811 = vmatpush1.msra.mxu0 0.0
    %812 = vmatprep.subr.mxu0 0.0
    %813 = vmatpush1.msra.mxu0 0.0
    %814 = vmatprep.subr.mxu0 0.0
    %815 = vmatpush1.msra.mxu0 0.0
    %816 = vmatprep.subr.mxu0 0.0
    %817 = vmatpush1.msra.mxu0 0.0
    %818 = vmatprep.subr.mxu0 0.0
    %819 = vmatpush1.msra.mxu0 0.0
    %820 = vmatprep.subr.mxu0 0.0
    %821 = vmatpush1.msra.mxu0 0.0
    %822 = vmatprep.subr.mxu0 0.0
    %823 = vmatpush1.msra.mxu0 0.0
    %824 = vmatprep.subr.mxu0 0.0
    %825 = vmatpush1.msra.mxu0 0.0
    %826 = vmatprep.subr.mxu0 0.0
    %827 = vmatpush1.msra.mxu0 %v22
    %828 = vmatprep.subr.mxu0 0.0
    %829 = vmatpush1.msra.mxu0 %v21
    %830 = vmatprep.subr.mxu0 0.0
    %831 = vmatpush1.msra.mxu0 %v20
    %832 = vmatprep.subr.mxu0 0.0
    %833 = vmatpush1.msra.mxu0 %v19
    %834 = vmatprep.subr.mxu0 0.0
    %835 = vmatpush2.msra.mxu0 0.0
    %836 = vmatprep.subr.mxu0 0.0
    %837 = vmatpush2.msra.mxu0 0.0
    %838 = vmatprep.subr.mxu0 0.0
    %839 = vmatpush2.msra.mxu0 0.0
    %840 = vmatprep.subr.mxu0 0.0
    %841 = vmatpush2.msra.mxu0 0.0
    %842 = vmatprep.subr.mxu0 0.0
    %843 = vmatpush2.msra.mxu0 0.0
    %844 = vmatprep.subr.mxu0 0.0
    %845 = vmatpush2.msra.mxu0 0.0
    %846 = vmatprep.subr.mxu0 0.0
    %847 = vmatpush2.msra.mxu0 0.0
    %848 = vmatprep.subr.mxu0 0.0
    %849 = vmatpush2.msra.mxu0 0.0
    %850 = vmatprep.subr.mxu0 0.0
    %851 = vmatpush2.msra.mxu0 0.0
    %852 = vmatprep.subr.mxu0 0.0
    %853 = vmatpush2.msra.mxu0 0.0
    %854 = vmatprep.subr.mxu0 0.0
    %855 = vmatpush2.msra.mxu0 0.0
    %856 = vmatprep.subr.mxu0 0.0
    %857 = vmatpush2.msra.mxu0 0.0
    %858 = vmatprep.subr.mxu0 0.0
    %859 = vmatpush2.msra.mxu0 0.0
    %860 = vmatprep.subr.mxu0 0.0
    %861 = vmatpush2.msra.mxu0 0.0
    %862 = vmatprep.subr.mxu0 0.0
    %863 = vmatpush2.msra.mxu0 0.0
    %864 = vmatprep.subr.mxu0 0.0
    %865 = vmatpush2.msra.mxu0 0.0
    %866 = vmatprep.mubr.f32.mxu0 0.0
    %867 = vmatmul.mubr.f32.gmra.mxu0 %v800
    %v868 = vpop.f32.mrf.mxu0
    %v869 = vadd.f32 %v146, %v868
    %v870 = vpop.f32.mrf.mxu0
    %871 = vdwg.mxu0
    %v873 = vrot.slane %v869, 4
    %v875 = vadd.f32 %v140, %v873
    %v876 = vxor.u32 %v875, 2147483648
    %v877 = vmul.f32 %v876, 1.442695
    %v878 = vpow.pop %v877
    %v879 = vadd.f32 %v878, 1.0
    %v880 = vrcp.pop %v879
    %v881 = vmul.f32 1.0, %v880
    %882 = vrot.lane.b32.xlu0 %v873, 64
    %v883 = vpop.permute.xlu0 %882
    %v885 = vmul.f32 %v881, %v883
    %887 = vrot.lane.b32.xlu0 %v885, 64
    %v888 = vpop.permute.xlu0 %887
    %v890 = vadd.f32 %v140, %v888
    %v891 = vtanh.pop %v890
    %v892 = vsub.f32 1.0, %v881
    %894 = vrot.lane.b32.xlu0 %v891, 96
    %v895 = vpop.permute.xlu0 %894
    %v897 = vmul.f32 %v892, %v895
    %v898 = vrot.slane %v791, 6
    %v900 = vmul.f32 %v881, %v898
    %v901 = vadd.f32 %v897, %v900
    %903 = vrot.lane.b32.xlu0 %v901, 96
    %v904 = vpop.permute.xlu0 %903
    %906 = vst.msk [vmem:[#allocation2 + $0x8] sm:$0x30] %vm470, %v904
    %v907 = vrot.slane %v901, 4
    %908 = vrot.lane.b32.xlu0 %v907, 96
    %v909 = vpop.permute.xlu0 %908
    %v910 = vsel %vm147, %v909, 0
    %912 = vmatprep.subr.mxu0 0.0
    %913 = vmatpush1.msra.mxu0 0.0
    %914 = vmatprep.subr.mxu0 0.0
    %915 = vmatpush1.msra.mxu0 0.0
    %916 = vmatprep.subr.mxu0 0.0
    %917 = vmatpush1.msra.mxu0 0.0
    %918 = vmatprep.subr.mxu0 0.0
    %919 = vmatpush1.msra.mxu0 0.0
    %920 = vmatprep.subr.mxu0 0.0
    %921 = vmatpush1.msra.mxu0 0.0
    %922 = vmatprep.subr.mxu0 0.0
    %923 = vmatpush1.msra.mxu0 0.0
    %924 = vmatprep.subr.mxu0 0.0
    %925 = vmatpush1.msra.mxu0 0.0
    %926 = vmatprep.subr.mxu0 0.0
    %927 = vmatpush1.msra.mxu0 0.0
    %928 = vmatprep.subr.mxu0 0.0
    %929 = vmatpush1.msra.mxu0 0.0
    %930 = vmatprep.subr.mxu0 0.0
    %931 = vmatpush1.msra.mxu0 0.0
    %932 = vmatprep.subr.mxu0 0.0
    %933 = vmatpush1.msra.mxu0 0.0
    %934 = vmatprep.subr.mxu0 0.0
    %935 = vmatpush1.msra.mxu0 0.0
    %936 = vmatprep.subr.mxu0 0.0
    %937 = vmatpush1.msra.mxu0 %v22
    %938 = vmatprep.subr.mxu0 0.0
    %939 = vmatpush1.msra.mxu0 %v21
    %940 = vmatprep.subr.mxu0 0.0
    %941 = vmatpush1.msra.mxu0 %v20
    %942 = vmatprep.subr.mxu0 0.0
    %943 = vmatpush1.msra.mxu0 %v19
    %944 = vmatprep.subr.mxu0 0.0
    %945 = vmatpush2.msra.mxu0 0.0
    %946 = vmatprep.subr.mxu0 0.0
    %947 = vmatpush2.msra.mxu0 0.0
    %948 = vmatprep.subr.mxu0 0.0
    %949 = vmatpush2.msra.mxu0 0.0
    %950 = vmatprep.subr.mxu0 0.0
    %951 = vmatpush2.msra.mxu0 0.0
    %952 = vmatprep.subr.mxu0 0.0
    %953 = vmatpush2.msra.mxu0 0.0
    %954 = vmatprep.subr.mxu0 0.0
    %955 = vmatpush2.msra.mxu0 0.0
    %956 = vmatprep.subr.mxu0 0.0
    %957 = vmatpush2.msra.mxu0 0.0
    %958 = vmatprep.subr.mxu0 0.0
    %959 = vmatpush2.msra.mxu0 0.0
    %960 = vmatprep.subr.mxu0 0.0
    %961 = vmatpush2.msra.mxu0 0.0
    %962 = vmatprep.subr.mxu0 0.0
    %963 = vmatpush2.msra.mxu0 0.0
    %964 = vmatprep.subr.mxu0 0.0
    %965 = vmatpush2.msra.mxu0 0.0
    %966 = vmatprep.subr.mxu0 0.0
    %967 = vmatpush2.msra.mxu0 0.0
    %968 = vmatprep.subr.mxu0 0.0
    %969 = vmatpush2.msra.mxu0 0.0
    %970 = vmatprep.subr.mxu0 0.0
    %971 = vmatpush2.msra.mxu0 0.0
    %972 = vmatprep.subr.mxu0 0.0
    %973 = vmatpush2.msra.mxu0 0.0
    %974 = vmatprep.subr.mxu0 0.0
    %975 = vmatpush2.msra.mxu0 0.0
    %976 = vmatprep.mubr.f32.mxu0 0.0
    %977 = vmatmul.mubr.f32.gmra.mxu0 %v910
    %v978 = vpop.f32.mrf.mxu0
    %v979 = vadd.f32 %v146, %v978
    %v980 = vpop.f32.mrf.mxu0
    %981 = vdwg.mxu0
    %v983 = vrot.slane %v979, 2
    %v985 = vadd.f32 %v140, %v983
    %v986 = vxor.u32 %v985, 2147483648
    %v987 = vmul.f32 %v986, 1.442695
    %v988 = vpow.pop %v987
    %v989 = vadd.f32 %v988, 1.0
    %v990 = vrcp.pop %v989
    %v991 = vmul.f32 1.0, %v990
    %992 = vrot.lane.b32.xlu0 %v983, 64
    %v993 = vpop.permute.xlu0 %992
    %v995 = vmul.f32 %v991, %v993
    %997 = vrot.lane.b32.xlu0 %v995, 64
    %v998 = vpop.permute.xlu0 %997
    %v1000 = vadd.f32 %v140, %v998
    %v1001 = vtanh.pop %v1000
    %v1002 = vsub.f32 1.0, %v991
    %1004 = vrot.lane.b32.xlu0 %v1001, 96
    %v1005 = vpop.permute.xlu0 %1004
    %v1007 = vmul.f32 %v1002, %v1005
    %v1008 = vrot.slane %v901, 6
    %v1010 = vmul.f32 %v991, %v1008
    %v1011 = vadd.f32 %v1007, %v1010
    %1013 = vrot.lane.b32.xlu0 %v1011, 96
    %v1014 = vpop.permute.xlu0 %1013
    %1016 = vst.msk [vmem:[#allocation2 + $0x8] sm:$0xc0] %vm581, %v1014
    %v1017 = vld [vmem:[#allocation2] sm:$0xff]
    %v1018 = vld [vmem:[#allocation2 + $0x8] sm:$0xff]
    %v1019 = vlaneseq
    %v1020 = vshrl.u32 %v1019, 7
    %v1021 = vsub.s32 0, %v1020
    %v1022 = vrot.slane %v37, %v1021
    %v1024 = vsel %vm147, %v1017, 0
    %v1027 = vsel %vm147, %v1018, 0
    %1029 = vmatprep.subr.mxu0 0.0
    %1030 = vmatpush1.msra.mxu0 0.0
    %1031 = vmatprep.subr.mxu0 0.0
    %1032 = vmatpush1.msra.mxu0 0.0
    %1033 = vmatprep.subr.mxu0 0.0
    %1034 = vmatpush1.msra.mxu0 0.0
    %1035 = vmatprep.subr.mxu0 0.0
    %1036 = vmatpush1.msra.mxu0 0.0
    %1037 = vmatprep.subr.mxu0 0.0
    %1038 = vmatpush1.msra.mxu0 0.0
    %1039 = vmatprep.subr.mxu0 0.0
    %1040 = vmatpush1.msra.mxu0 0.0
    %1041 = vmatprep.subr.mxu0 0.0
    %1042 = vmatpush1.msra.mxu0 0.0
    %1043 = vmatprep.subr.mxu0 0.0
    %1044 = vmatpush1.msra.mxu0 0.0
    %1045 = vmatprep.subr.mxu0 0.0
    %1046 = vmatpush1.msra.mxu0 0.0
    %1047 = vmatprep.subr.mxu0 0.0
    %1048 = vmatpush1.msra.mxu0 0.0
    %1049 = vmatprep.subr.mxu0 0.0
    %1050 = vmatpush1.msra.mxu0 0.0
    %1051 = vmatprep.subr.mxu0 0.0
    %1052 = vmatpush1.msra.mxu0 0.0
    %1053 = vmatprep.subr.mxu0 0.0
    %1054 = vmatpush1.msra.mxu0 %v26
    %1055 = vmatprep.subr.mxu0 0.0
    %1056 = vmatpush1.msra.mxu0 %v25
    %1057 = vmatprep.subr.mxu0 0.0
    %1058 = vmatpush1.msra.mxu0 %v24
    %1059 = vmatprep.subr.mxu0 0.0
    %1060 = vmatpush1.msra.mxu0 %v23
    %1061 = vmatprep.subr.mxu0 0.0
    %1062 = vmatpush2.msra.mxu0 0.0
    %1063 = vmatprep.subr.mxu0 0.0
    %1064 = vmatpush2.msra.mxu0 0.0
    %1065 = vmatprep.subr.mxu0 0.0
    %1066 = vmatpush2.msra.mxu0 0.0
    %1067 = vmatprep.subr.mxu0 0.0
    %1068 = vmatpush2.msra.mxu0 0.0
    %1069 = vmatprep.subr.mxu0 0.0
    %1070 = vmatpush2.msra.mxu0 0.0
    %1071 = vmatprep.subr.mxu0 0.0
    %1072 = vmatpush2.msra.mxu0 0.0
    %1073 = vmatprep.subr.mxu0 0.0
    %1074 = vmatpush2.msra.mxu0 0.0
    %1075 = vmatprep.subr.mxu0 0.0
    %1076 = vmatpush2.msra.mxu0 0.0
    %1077 = vmatprep.subr.mxu0 0.0
    %1078 = vmatpush2.msra.mxu0 0.0
    %1079 = vmatprep.subr.mxu0 0.0
    %1080 = vmatpush2.msra.mxu0 0.0
    %1081 = vmatprep.subr.mxu0 0.0
    %1082 = vmatpush2.msra.mxu0 0.0
    %1083 = vmatprep.subr.mxu0 0.0
    %1084 = vmatpush2.msra.mxu0 0.0
    %1085 = vmatprep.subr.mxu0 0.0
    %1086 = vmatpush2.msra.mxu0 0.0
    %1087 = vmatprep.subr.mxu0 0.0
    %1088 = vmatpush2.msra.mxu0 0.0
    %1089 = vmatprep.subr.mxu0 0.0
    %1090 = vmatpush2.msra.mxu0 0.0
    %1091 = vmatprep.subr.mxu0 0.0
    %1092 = vmatpush2.msra.mxu0 0.0
    %1093 = vmatprep.mubr.f32.mxu0 0.0
    %1094 = vmatmul.mubr.f32.gmra.mxu0 %v1024
    %v1095 = vpop.f32.mrf.mxu0
    %v1096 = vadd.f32 %v1022, %v1095
    %v1097 = vpop.f32.mrf.mxu0
    %1098 = vmatprep.mubr.f32.mxu0 0.0
    %1099 = vmatmul.mubr.f32.gmra.mxu0 %v1027
    %v1100 = vpop.f32.mrf.mxu0
    %v1101 = vadd.f32 %v1022, %v1100
    %v1102 = vpop.f32.mrf.mxu0
    %1103 = vdwg.mxu0
    %v1104 = vlaneseq
    %v1105 = vshrl.u32 %v1104, 7
    %v1106 = vsub.s32 0, %v1105
    %v1107 = vrot.slane %v38, %v1106
    %1108 = vmatprep.subr.mxu0 0.0
    %1109 = vmatpush1.msra.mxu0 0.0
    %1110 = vmatprep.subr.mxu0 0.0
    %1111 = vmatpush1.msra.mxu0 0.0
    %1112 = vmatprep.subr.mxu0 0.0
    %1113 = vmatpush1.msra.mxu0 0.0
    %1114 = vmatprep.subr.mxu0 0.0
    %1115 = vmatpush1.msra.mxu0 0.0
    %1116 = vmatprep.subr.mxu0 0.0
    %1117 = vmatpush1.msra.mxu0 0.0
    %1118 = vmatprep.subr.mxu0 0.0
    %1119 = vmatpush1.msra.mxu0 0.0
    %1120 = vmatprep.subr.mxu0 0.0
    %1121 = vmatpush1.msra.mxu0 0.0
    %1122 = vmatprep.subr.mxu0 0.0
    %1123 = vmatpush1.msra.mxu0 0.0
    %1124 = vmatprep.subr.mxu0 0.0
    %1125 = vmatpush1.msra.mxu0 0.0
    %1126 = vmatprep.subr.mxu0 0.0
    %1127 = vmatpush1.msra.mxu0 0.0
    %1128 = vmatprep.subr.mxu0 0.0
    %1129 = vmatpush1.msra.mxu0 0.0
    %1130 = vmatprep.subr.mxu0 0.0
    %1131 = vmatpush1.msra.mxu0 0.0
    %1132 = vmatprep.subr.mxu0 0.0
    %1133 = vmatpush1.msra.mxu0 %v30
    %1134 = vmatprep.subr.mxu0 0.0
    %1135 = vmatpush1.msra.mxu0 %v29
    %1136 = vmatprep.subr.mxu0 0.0
    %1137 = vmatpush1.msra.mxu0 %v28
    %1138 = vmatprep.subr.mxu0 0.0
    %1139 = vmatpush1.msra.mxu0 %v27
    %1140 = vmatprep.subr.mxu0 0.0
    %1141 = vmatpush2.msra.mxu0 0.0
    %1142 = vmatprep.subr.mxu0 0.0
    %1143 = vmatpush2.msra.mxu0 0.0
    %1144 = vmatprep.subr.mxu0 0.0
    %1145 = vmatpush2.msra.mxu0 0.0
    %1146 = vmatprep.subr.mxu0 0.0
    %1147 = vmatpush2.msra.mxu0 0.0
    %1148 = vmatprep.subr.mxu0 0.0
    %1149 = vmatpush2.msra.mxu0 0.0
    %1150 = vmatprep.subr.mxu0 0.0
    %1151 = vmatpush2.msra.mxu0 0.0
    %1152 = vmatprep.subr.mxu0 0.0
    %1153 = vmatpush2.msra.mxu0 0.0
    %1154 = vmatprep.subr.mxu0 0.0
    %1155 = vmatpush2.msra.mxu0 0.0
    %1156 = vmatprep.subr.mxu0 0.0
    %1157 = vmatpush2.msra.mxu0 0.0
    %1158 = vmatprep.subr.mxu0 0.0
    %1159 = vmatpush2.msra.mxu0 0.0
    %1160 = vmatprep.subr.mxu0 0.0
    %1161 = vmatpush2.msra.mxu0 0.0
    %1162 = vmatprep.subr.mxu0 0.0
    %1163 = vmatpush2.msra.mxu0 0.0
    %1164 = vmatprep.subr.mxu0 0.0
    %1165 = vmatpush2.msra.mxu0 0.0
    %1166 = vmatprep.subr.mxu0 0.0
    %1167 = vmatpush2.msra.mxu0 0.0
    %1168 = vmatprep.subr.mxu0 0.0
    %1169 = vmatpush2.msra.mxu0 0.0
    %1170 = vmatprep.subr.mxu0 0.0
    %1171 = vmatpush2.msra.mxu0 0.0
    %1172 = vmatprep.mubr.f32.mxu0 0.0
    %1173 = vmatmul.mubr.f32.gmra.mxu0 %v149
    %v1174 = vpop.f32.mrf.mxu0
    %v1175 = vadd.f32 %v1107, %v1174
    %v1176 = vpop.f32.mrf.mxu0
    %1177 = vdwg.mxu0
    %v1178 = vadd.f32 %v1096, %v1175
    %v1179 = vxor.u32 %v1178, 2147483648
    %v1180 = vmul.f32 %v1179, 1.442695
    %v1181 = vpow.pop %v1180
    %v1182 = vadd.f32 %v1181, 1.0
    %v1183 = vrcp.pop %v1182
    %v1184 = vmul.f32 1.0, %v1183
    %1186 = vrot.lane.b32.xlu0 %v1175, 64
    %v1187 = vpop.permute.xlu0 %1186
    %v1189 = vmul.f32 %v1184, %v1187
    %1191 = vrot.lane.b32.xlu0 %v1189, 64
    %v1192 = vpop.permute.xlu0 %1191
    %v1194 = vadd.f32 %v1096, %v1192
    %v1195 = vtanh.pop %v1194
    %v1196 = vsub.f32 1.0, %v1184
    %1198 = vrot.lane.b32.xlu0 %v1195, 96
    %v1199 = vpop.permute.xlu0 %1198
    %v1201 = vmul.f32 %v1196, %v1199
    %v1202 = vmul.f32 %v1184, 0.0
    %v1203 = vadd.f32 %v1201, %v1202
    %v1206 = vunpack.c.l.s4 1966171168
    %v1207 = vunpack.c.0.s8 %v1206
    %v1208 = vlaneseq
    %v1209 = vshrl.u32 %v1208, 7
    %v1210 = vsub.s32 %v1207, %v1209
    %v1211 = vrot.slane %v1203, %v1210
    %v1212 = vcombine.high %v1211, %v1211
    %v1214 = vunpack.c.l.s4 1966171168
    %v1215 = vunpack.c.0.s8 %v1214
    %v1216 = vlaneseq
    %v1217 = vshrl.u32 %v1216, 7
    %v1218 = vsub.s32 %v1215, %v1217
    %v1219 = vrot.slane %v1211, %v1218
    %v1221 = vunpack.c.l.s4 1966171168
    %v1222 = vunpack.c.0.s8 %v1221
    %v1223 = vlaneseq
    %v1224 = vshrl.u32 %v1223, 7
    %v1225 = vsub.s32 %v1222, %v1224
    %v1226 = vrot.slane %v1212, %v1225
    %v1227 = vlaneseq
    %v1228 = vshrl.u32 %v1227, 7
    %v1229 = vsub.s32 0, %v1228
    %v1230 = vrot.slane %v1219, %v1229
    %v1231 = vlaneseq
    %v1232 = vshrl.u32 %v1231, 7
    %v1233 = vsub.s32 0, %v1232
    %v1234 = vrot.slane %v1226, %v1233
    %1235 = vrot.lane.b32.xlu0 %v1230, 96
    %v1236 = vpop.permute.xlu0 %1235
    %1237 = vrot.lane.b32.xlu0 %v1234, 96
    %v1238 = vpop.permute.xlu0 %1237
    %vm1241 = vcmask 253952
    %1242 = vst.msk [vmem:[#allocation3] sm:$0x1] %vm1241, %v1236
    %1243 = vst.msk [vmem:[#allocation3 + $0x8] sm:$0x1] %vm1241, %v1238
    %1244 = vrot.lane.b32.xlu0 %v1203, 96
    %v1245 = vpop.permute.xlu0 %1244
    %v1246 = vsel %vm147, %v1245, 0
    %1248 = vmatprep.subr.mxu0 0.0
    %1249 = vmatpush1.msra.mxu0 0.0
    %1250 = vmatprep.subr.mxu0 0.0
    %1251 = vmatpush1.msra.mxu0 0.0
    %1252 = vmatprep.subr.mxu0 0.0
    %1253 = vmatpush1.msra.mxu0 0.0
    %1254 = vmatprep.subr.mxu0 0.0
    %1255 = vmatpush1.msra.mxu0 0.0
    %1256 = vmatprep.subr.mxu0 0.0
    %1257 = vmatpush1.msra.mxu0 0.0
    %1258 = vmatprep.subr.mxu0 0.0
    %1259 = vmatpush1.msra.mxu0 0.0
    %1260 = vmatprep.subr.mxu0 0.0
    %1261 = vmatpush1.msra.mxu0 0.0
    %1262 = vmatprep.subr.mxu0 0.0
    %1263 = vmatpush1.msra.mxu0 0.0
    %1264 = vmatprep.subr.mxu0 0.0
    %1265 = vmatpush1.msra.mxu0 0.0
    %1266 = vmatprep.subr.mxu0 0.0
    %1267 = vmatpush1.msra.mxu0 0.0
    %1268 = vmatprep.subr.mxu0 0.0
    %1269 = vmatpush1.msra.mxu0 0.0
    %1270 = vmatprep.subr.mxu0 0.0
    %1271 = vmatpush1.msra.mxu0 0.0
    %1272 = vmatprep.subr.mxu0 0.0
    %1273 = vmatpush1.msra.mxu0 %v30
    %1274 = vmatprep.subr.mxu0 0.0
    %1275 = vmatpush1.msra.mxu0 %v29
    %1276 = vmatprep.subr.mxu0 0.0
    %1277 = vmatpush1.msra.mxu0 %v28
    %1278 = vmatprep.subr.mxu0 0.0
    %1279 = vmatpush1.msra.mxu0 %v27
    %1280 = vmatprep.subr.mxu0 0.0
    %1281 = vmatpush2.msra.mxu0 0.0
    %1282 = vmatprep.subr.mxu0 0.0
    %1283 = vmatpush2.msra.mxu0 0.0
    %1284 = vmatprep.subr.mxu0 0.0
    %1285 = vmatpush2.msra.mxu0 0.0
    %1286 = vmatprep.subr.mxu0 0.0
    %1287 = vmatpush2.msra.mxu0 0.0
    %1288 = vmatprep.subr.mxu0 0.0
    %1289 = vmatpush2.msra.mxu0 0.0
    %1290 = vmatprep.subr.mxu0 0.0
    %1291 = vmatpush2.msra.mxu0 0.0
    %1292 = vmatprep.subr.mxu0 0.0
    %1293 = vmatpush2.msra.mxu0 0.0
    %1294 = vmatprep.subr.mxu0 0.0
    %1295 = vmatpush2.msra.mxu0 0.0
    %1296 = vmatprep.subr.mxu0 0.0
    %1297 = vmatpush2.msra.mxu0 0.0
    %1298 = vmatprep.subr.mxu0 0.0
    %1299 = vmatpush2.msra.mxu0 0.0
    %1300 = vmatprep.subr.mxu0 0.0
    %1301 = vmatpush2.msra.mxu0 0.0
    %1302 = vmatprep.subr.mxu0 0.0
    %1303 = vmatpush2.msra.mxu0 0.0
    %1304 = vmatprep.subr.mxu0 0.0
    %1305 = vmatpush2.msra.mxu0 0.0
    %1306 = vmatprep.subr.mxu0 0.0
    %1307 = vmatpush2.msra.mxu0 0.0
    %1308 = vmatprep.subr.mxu0 0.0
    %1309 = vmatpush2.msra.mxu0 0.0
    %1310 = vmatprep.subr.mxu0 0.0
    %1311 = vmatpush2.msra.mxu0 0.0
    %1312 = vmatprep.mubr.f32.mxu0 0.0
    %1313 = vmatmul.mubr.f32.gmra.mxu0 %v1246
    %v1314 = vpop.f32.mrf.mxu0
    %v1315 = vadd.f32 %v1107, %v1314
    %v1316 = vpop.f32.mrf.mxu0
    %1317 = vdwg.mxu0
    %v1319 = vrot.slane %v1315, 6
    %v1321 = vadd.f32 %v1096, %v1319
    %v1322 = vxor.u32 %v1321, 2147483648
    %v1323 = vmul.f32 %v1322, 1.442695
    %v1324 = vpow.pop %v1323
    %v1325 = vadd.f32 %v1324, 1.0
    %v1326 = vrcp.pop %v1325
    %v1327 = vmul.f32 1.0, %v1326
    %1328 = vrot.lane.b32.xlu0 %v1319, 64
    %v1329 = vpop.permute.xlu0 %1328
    %v1331 = vmul.f32 %v1327, %v1329
    %1333 = vrot.lane.b32.xlu0 %v1331, 64
    %v1334 = vpop.permute.xlu0 %1333
    %v1336 = vadd.f32 %v1096, %v1334
    %v1337 = vtanh.pop %v1336
    %v1338 = vsub.f32 1.0, %v1327
    %1340 = vrot.lane.b32.xlu0 %v1337, 96
    %v1341 = vpop.permute.xlu0 %1340
    %v1343 = vmul.f32 %v1338, %v1341
    %v1344 = vrot.slane %v1203, 6
    %v1346 = vmul.f32 %v1327, %v1344
    %v1347 = vadd.f32 %v1343, %v1346
    %v1350 = vunpack.c.l.s4 1966171168
    %v1351 = vunpack.c.0.s8 %v1350
    %v1352 = vlaneseq
    %v1353 = vshrl.u32 %v1352, 7
    %v1354 = vsub.s32 %v1351, %v1353
    %v1355 = vrot.slane %v1347, %v1354
    %v1356 = vcombine.high %v1355, %v1355
    %v1358 = vunpack.c.l.s4 1966171168
    %v1359 = vunpack.c.0.s8 %v1358
    %v1360 = vlaneseq
    %v1361 = vshrl.u32 %v1360, 7
    %v1362 = vsub.s32 %v1359, %v1361
    %v1363 = vrot.slane %v1355, %v1362
    %v1365 = vunpack.c.l.s4 1966171168
    %v1366 = vunpack.c.0.s8 %v1365
    %v1367 = vlaneseq
    %v1368 = vshrl.u32 %v1367, 7
    %v1369 = vsub.s32 %v1366, %v1368
    %v1370 = vrot.slane %v1356, %v1369
    %v1371 = vcombine.high %v1363, %v1363
    %v1372 = vcombine.high %v1370, %v1370
    %v1373 = vlaneseq
    %v1374 = vshrl.u32 %v1373, 7
    %v1375 = vsub.s32 0, %v1374
    %v1376 = vrot.slane %v1371, %v1375
    %v1377 = vlaneseq
    %v1378 = vshrl.u32 %v1377, 7
    %v1379 = vsub.s32 0, %v1378
    %v1380 = vrot.slane %v1372, %v1379
    %1381 = vrot.lane.b32.xlu0 %v1376, 96
    %v1382 = vpop.permute.xlu0 %1381
    %1383 = vrot.lane.b32.xlu0 %v1380, 96
    %v1384 = vpop.permute.xlu0 %1383
    %1387 = vst.msk [vmem:[#allocation3 + $0x1] sm:$0x1] %vm1241, %v1382
    %1388 = vst.msk [vmem:[#allocation3 + $0x9] sm:$0x1] %vm1241, %v1384
    %v1389 = vrot.slane %v1347, 2
    %1390 = vrot.lane.b32.xlu0 %v1389, 96
    %v1391 = vpop.permute.xlu0 %1390
    %v1392 = vsel %vm147, %v1391, 0
    %1394 = vmatprep.subr.mxu0 0.0
    %1395 = vmatpush1.msra.mxu0 0.0
    %1396 = vmatprep.subr.mxu0 0.0
    %1397 = vmatpush1.msra.mxu0 0.0
    %1398 = vmatprep.subr.mxu0 0.0
    %1399 = vmatpush1.msra.mxu0 0.0
    %1400 = vmatprep.subr.mxu0 0.0
    %1401 = vmatpush1.msra.mxu0 0.0
    %1402 = vmatprep.subr.mxu0 0.0
    %1403 = vmatpush1.msra.mxu0 0.0
    %1404 = vmatprep.subr.mxu0 0.0
    %1405 = vmatpush1.msra.mxu0 0.0
    %1406 = vmatprep.subr.mxu0 0.0
    %1407 = vmatpush1.msra.mxu0 0.0
    %1408 = vmatprep.subr.mxu0 0.0
    %1409 = vmatpush1.msra.mxu0 0.0
    %1410 = vmatprep.subr.mxu0 0.0
    %1411 = vmatpush1.msra.mxu0 0.0
    %1412 = vmatprep.subr.mxu0 0.0
    %1413 = vmatpush1.msra.mxu0 0.0
    %1414 = vmatprep.subr.mxu0 0.0
    %1415 = vmatpush1.msra.mxu0 0.0
    %1416 = vmatprep.subr.mxu0 0.0
    %1417 = vmatpush1.msra.mxu0 0.0
    %1418 = vmatprep.subr.mxu0 0.0
    %1419 = vmatpush1.msra.mxu0 %v30
    %1420 = vmatprep.subr.mxu0 0.0
    %1421 = vmatpush1.msra.mxu0 %v29
    %1422 = vmatprep.subr.mxu0 0.0
    %1423 = vmatpush1.msra.mxu0 %v28
    %1424 = vmatprep.subr.mxu0 0.0
    %1425 = vmatpush1.msra.mxu0 %v27
    %1426 = vmatprep.subr.mxu0 0.0
    %1427 = vmatpush2.msra.mxu0 0.0
    %1428 = vmatprep.subr.mxu0 0.0
    %1429 = vmatpush2.msra.mxu0 0.0
    %1430 = vmatprep.subr.mxu0 0.0
    %1431 = vmatpush2.msra.mxu0 0.0
    %1432 = vmatprep.subr.mxu0 0.0
    %1433 = vmatpush2.msra.mxu0 0.0
    %1434 = vmatprep.subr.mxu0 0.0
    %1435 = vmatpush2.msra.mxu0 0.0
    %1436 = vmatprep.subr.mxu0 0.0
    %1437 = vmatpush2.msra.mxu0 0.0
    %1438 = vmatprep.subr.mxu0 0.0
    %1439 = vmatpush2.msra.mxu0 0.0
    %1440 = vmatprep.subr.mxu0 0.0
    %1441 = vmatpush2.msra.mxu0 0.0
    %1442 = vmatprep.subr.mxu0 0.0
    %1443 = vmatpush2.msra.mxu0 0.0
    %1444 = vmatprep.subr.mxu0 0.0
    %1445 = vmatpush2.msra.mxu0 0.0
    %1446 = vmatprep.subr.mxu0 0.0
    %1447 = vmatpush2.msra.mxu0 0.0
    %1448 = vmatprep.subr.mxu0 0.0
    %1449 = vmatpush2.msra.mxu0 0.0
    %1450 = vmatprep.subr.mxu0 0.0
    %1451 = vmatpush2.msra.mxu0 0.0
    %1452 = vmatprep.subr.mxu0 0.0
    %1453 = vmatpush2.msra.mxu0 0.0
    %1454 = vmatprep.subr.mxu0 0.0
    %1455 = vmatpush2.msra.mxu0 0.0
    %1456 = vmatprep.subr.mxu0 0.0
    %1457 = vmatpush2.msra.mxu0 0.0
    %1458 = vmatprep.mubr.f32.mxu0 0.0
    %1459 = vmatmul.mubr.f32.gmra.mxu0 %v1392
    %v1460 = vpop.f32.mrf.mxu0
    %v1461 = vadd.f32 %v1107, %v1460
    %v1462 = vpop.f32.mrf.mxu0
    %1463 = vdwg.mxu0
    %v1465 = vrot.slane %v1461, 4
    %v1467 = vadd.f32 %v1096, %v1465
    %v1468 = vxor.u32 %v1467, 2147483648
    %v1469 = vmul.f32 %v1468, 1.442695
    %v1470 = vpow.pop %v1469
    %v1471 = vadd.f32 %v1470, 1.0
    %v1472 = vrcp.pop %v1471
    %v1473 = vmul.f32 1.0, %v1472
    %1474 = vrot.lane.b32.xlu0 %v1465, 64
    %v1475 = vpop.permute.xlu0 %1474
    %v1477 = vmul.f32 %v1473, %v1475
    %1479 = vrot.lane.b32.xlu0 %v1477, 64
    %v1480 = vpop.permute.xlu0 %1479
    %v1482 = vadd.f32 %v1096, %v1480
    %v1483 = vtanh.pop %v1482
    %v1484 = vsub.f32 1.0, %v1473
    %1486 = vrot.lane.b32.xlu0 %v1483, 96
    %v1487 = vpop.permute.xlu0 %1486
    %v1489 = vmul.f32 %v1484, %v1487
    %v1490 = vrot.slane %v1347, 6
    %v1492 = vmul.f32 %v1473, %v1490
    %v1493 = vadd.f32 %v1489, %v1492
    %v1495 = vcombine.high %v1493, %v1493
    %v1497 = vunpack.c.l.s4 1966171168
    %v1498 = vunpack.c.0.s8 %v1497
    %v1499 = vlaneseq
    %v1500 = vshrl.u32 %v1499, 7
    %v1501 = vsub.s32 %v1498, %v1500
    %v1502 = vrot.slane %v1495, %v1501
    %v1503 = vcombine.high %v1502, %v1502
    %v1505 = vunpack.c.l.s4 1966171168
    %v1506 = vunpack.c.0.s8 %v1505
    %v1507 = vlaneseq
    %v1508 = vshrl.u32 %v1507, 7
    %v1509 = vsub.s32 %v1506, %v1508
    %v1510 = vrot.slane %v1502, %v1509
    %v1512 = vunpack.c.l.s4 1966171168
    %v1513 = vunpack.c.0.s8 %v1512
    %v1514 = vlaneseq
    %v1515 = vshrl.u32 %v1514, 7
    %v1516 = vsub.s32 %v1513, %v1515
    %v1517 = vrot.slane %v1503, %v1516
    %v1518 = vlaneseq
    %v1519 = vshrl.u32 %v1518, 7
    %v1520 = vsub.s32 0, %v1519
    %v1521 = vrot.slane %v1510, %v1520
    %v1522 = vlaneseq
    %v1523 = vshrl.u32 %v1522, 7
    %v1524 = vsub.s32 0, %v1523
    %v1525 = vrot.slane %v1517, %v1524
    %1526 = vrot.lane.b32.xlu0 %v1521, 96
    %v1527 = vpop.permute.xlu0 %1526
    %1528 = vrot.lane.b32.xlu0 %v1525, 96
    %v1529 = vpop.permute.xlu0 %1528
    %1532 = vst.msk [vmem:[#allocation3 + $0x2] sm:$0x1] %vm1241, %v1527
    %1533 = vst.msk [vmem:[#allocation3 + $0xa] sm:$0x1] %vm1241, %v1529
    %v1534 = vrot.slane %v1493, 4
    %1535 = vrot.lane.b32.xlu0 %v1534, 96
    %v1536 = vpop.permute.xlu0 %1535
    %v1537 = vsel %vm147, %v1536, 0
    %1539 = vmatprep.subr.mxu0 0.0
    %1540 = vmatpush1.msra.mxu0 0.0
    %1541 = vmatprep.subr.mxu0 0.0
    %1542 = vmatpush1.msra.mxu0 0.0
    %1543 = vmatprep.subr.mxu0 0.0
    %1544 = vmatpush1.msra.mxu0 0.0
    %1545 = vmatprep.subr.mxu0 0.0
    %1546 = vmatpush1.msra.mxu0 0.0
    %1547 = vmatprep.subr.mxu0 0.0
    %1548 = vmatpush1.msra.mxu0 0.0
    %1549 = vmatprep.subr.mxu0 0.0
    %1550 = vmatpush1.msra.mxu0 0.0
    %1551 = vmatprep.subr.mxu0 0.0
    %1552 = vmatpush1.msra.mxu0 0.0
    %1553 = vmatprep.subr.mxu0 0.0
    %1554 = vmatpush1.msra.mxu0 0.0
    %1555 = vmatprep.subr.mxu0 0.0
    %1556 = vmatpush1.msra.mxu0 0.0
    %1557 = vmatprep.subr.mxu0 0.0
    %1558 = vmatpush1.msra.mxu0 0.0
    %1559 = vmatprep.subr.mxu0 0.0
    %1560 = vmatpush1.msra.mxu0 0.0
    %1561 = vmatprep.subr.mxu0 0.0
    %1562 = vmatpush1.msra.mxu0 0.0
    %1563 = vmatprep.subr.mxu0 0.0
    %1564 = vmatpush1.msra.mxu0 %v30
    %1565 = vmatprep.subr.mxu0 0.0
    %1566 = vmatpush1.msra.mxu0 %v29
    %1567 = vmatprep.subr.mxu0 0.0
    %1568 = vmatpush1.msra.mxu0 %v28
    %1569 = vmatprep.subr.mxu0 0.0
    %1570 = vmatpush1.msra.mxu0 %v27
    %1571 = vmatprep.subr.mxu0 0.0
    %1572 = vmatpush2.msra.mxu0 0.0
    %1573 = vmatprep.subr.mxu0 0.0
    %1574 = vmatpush2.msra.mxu0 0.0
    %1575 = vmatprep.subr.mxu0 0.0
    %1576 = vmatpush2.msra.mxu0 0.0
    %1577 = vmatprep.subr.mxu0 0.0
    %1578 = vmatpush2.msra.mxu0 0.0
    %1579 = vmatprep.subr.mxu0 0.0
    %1580 = vmatpush2.msra.mxu0 0.0
    %1581 = vmatprep.subr.mxu0 0.0
    %1582 = vmatpush2.msra.mxu0 0.0
    %1583 = vmatprep.subr.mxu0 0.0
    %1584 = vmatpush2.msra.mxu0 0.0
    %1585 = vmatprep.subr.mxu0 0.0
    %1586 = vmatpush2.msra.mxu0 0.0
    %1587 = vmatprep.subr.mxu0 0.0
    %1588 = vmatpush2.msra.mxu0 0.0
    %1589 = vmatprep.subr.mxu0 0.0
    %1590 = vmatpush2.msra.mxu0 0.0
    %1591 = vmatprep.subr.mxu0 0.0
    %1592 = vmatpush2.msra.mxu0 0.0
    %1593 = vmatprep.subr.mxu0 0.0
    %1594 = vmatpush2.msra.mxu0 0.0
    %1595 = vmatprep.subr.mxu0 0.0
    %1596 = vmatpush2.msra.mxu0 0.0
    %1597 = vmatprep.subr.mxu0 0.0
    %1598 = vmatpush2.msra.mxu0 0.0
    %1599 = vmatprep.subr.mxu0 0.0
    %1600 = vmatpush2.msra.mxu0 0.0
    %1601 = vmatprep.subr.mxu0 0.0
    %1602 = vmatpush2.msra.mxu0 0.0
    %1603 = vmatprep.mubr.f32.mxu0 0.0
    %1604 = vmatmul.mubr.f32.gmra.mxu0 %v1537
    %v1605 = vpop.f32.mrf.mxu0
    %v1606 = vadd.f32 %v1107, %v1605
    %v1607 = vpop.f32.mrf.mxu0
    %1608 = vdwg.mxu0
    %v1610 = vrot.slane %v1606, 2
    %v1612 = vadd.f32 %v1096, %v1610
    %v1613 = vxor.u32 %v1612, 2147483648
    %v1614 = vmul.f32 %v1613, 1.442695
    %v1615 = vpow.pop %v1614
    %v1616 = vadd.f32 %v1615, 1.0
    %v1617 = vrcp.pop %v1616
    %v1618 = vmul.f32 1.0, %v1617
    %1619 = vrot.lane.b32.xlu0 %v1610, 64
    %v1620 = vpop.permute.xlu0 %1619
    %v1622 = vmul.f32 %v1618, %v1620
    %1624 = vrot.lane.b32.xlu0 %v1622, 64
    %v1625 = vpop.permute.xlu0 %1624
    %v1627 = vadd.f32 %v1096, %v1625
    %v1628 = vtanh.pop %v1627
    %v1629 = vsub.f32 1.0, %v1618
    %1631 = vrot.lane.b32.xlu0 %v1628, 96
    %v1632 = vpop.permute.xlu0 %1631
    %v1634 = vmul.f32 %v1629, %v1632
    %v1635 = vrot.slane %v1493, 6
    %v1637 = vmul.f32 %v1618, %v1635
    %v1638 = vadd.f32 %v1634, %v1637
    %v1640 = vcombine.high %v1638, %v1638
    %v1642 = vunpack.c.l.s4 1966171168
    %v1643 = vunpack.c.0.s8 %v1642
    %v1644 = vlaneseq
    %v1645 = vshrl.u32 %v1644, 7
    %v1646 = vsub.s32 %v1643, %v1645
    %v1647 = vrot.slane %v1640, %v1646
    %v1648 = vcombine.high %v1647, %v1647
    %v1650 = vunpack.c.l.s4 1966171168
    %v1651 = vunpack.c.0.s8 %v1650
    %v1652 = vlaneseq
    %v1653 = vshrl.u32 %v1652, 7
    %v1654 = vsub.s32 %v1651, %v1653
    %v1655 = vrot.slane %v1647, %v1654
    %v1657 = vunpack.c.l.s4 1966171168
    %v1658 = vunpack.c.0.s8 %v1657
    %v1659 = vlaneseq
    %v1660 = vshrl.u32 %v1659, 7
    %v1661 = vsub.s32 %v1658, %v1660
    %v1662 = vrot.slane %v1648, %v1661
    %v1663 = vcombine.high %v1655, %v1655
    %v1664 = vcombine.high %v1662, %v1662
    %v1665 = vlaneseq
    %v1666 = vshrl.u32 %v1665, 7
    %v1667 = vsub.s32 0, %v1666
    %v1668 = vrot.slane %v1663, %v1667
    %v1669 = vlaneseq
    %v1670 = vshrl.u32 %v1669, 7
    %v1671 = vsub.s32 0, %v1670
    %v1672 = vrot.slane %v1664, %v1671
    %1673 = vrot.lane.b32.xlu0 %v1668, 96
    %v1674 = vpop.permute.xlu0 %1673
    %1675 = vrot.lane.b32.xlu0 %v1672, 96
    %v1676 = vpop.permute.xlu0 %1675
    %1679 = vst.msk [vmem:[#allocation3 + $0x3] sm:$0x1] %vm1241, %v1674
    %1680 = vst.msk [vmem:[#allocation3 + $0xb] sm:$0x1] %vm1241, %v1676
    %v1681 = vrot.slane %v1638, 6
    %1682 = vrot.lane.b32.xlu0 %v1681, 96
    %v1683 = vpop.permute.xlu0 %1682
    %v1684 = vsel %vm147, %v1683, 0
    %1686 = vmatprep.subr.mxu0 0.0
    %1687 = vmatpush1.msra.mxu0 0.0
    %1688 = vmatprep.subr.mxu0 0.0
    %1689 = vmatpush1.msra.mxu0 0.0
    %1690 = vmatprep.subr.mxu0 0.0
    %1691 = vmatpush1.msra.mxu0 0.0
    %1692 = vmatprep.subr.mxu0 0.0
    %1693 = vmatpush1.msra.mxu0 0.0
    %1694 = vmatprep.subr.mxu0 0.0
    %1695 = vmatpush1.msra.mxu0 0.0
    %1696 = vmatprep.subr.mxu0 0.0
    %1697 = vmatpush1.msra.mxu0 0.0
    %1698 = vmatprep.subr.mxu0 0.0
    %1699 = vmatpush1.msra.mxu0 0.0
    %1700 = vmatprep.subr.mxu0 0.0
    %1701 = vmatpush1.msra.mxu0 0.0
    %1702 = vmatprep.subr.mxu0 0.0
    %1703 = vmatpush1.msra.mxu0 0.0
    %1704 = vmatprep.subr.mxu0 0.0
    %1705 = vmatpush1.msra.mxu0 0.0
    %1706 = vmatprep.subr.mxu0 0.0
    %1707 = vmatpush1.msra.mxu0 0.0
    %1708 = vmatprep.subr.mxu0 0.0
    %1709 = vmatpush1.msra.mxu0 0.0
    %1710 = vmatprep.subr.mxu0 0.0
    %1711 = vmatpush1.msra.mxu0 %v30
    %1712 = vmatprep.subr.mxu0 0.0
    %1713 = vmatpush1.msra.mxu0 %v29
    %1714 = vmatprep.subr.mxu0 0.0
    %1715 = vmatpush1.msra.mxu0 %v28
    %1716 = vmatprep.subr.mxu0 0.0
    %1717 = vmatpush1.msra.mxu0 %v27
    %1718 = vmatprep.subr.mxu0 0.0
    %1719 = vmatpush2.msra.mxu0 0.0
    %1720 = vmatprep.subr.mxu0 0.0
    %1721 = vmatpush2.msra.mxu0 0.0
    %1722 = vmatprep.subr.mxu0 0.0
    %1723 = vmatpush2.msra.mxu0 0.0
    %1724 = vmatprep.subr.mxu0 0.0
    %1725 = vmatpush2.msra.mxu0 0.0
    %1726 = vmatprep.subr.mxu0 0.0
    %1727 = vmatpush2.msra.mxu0 0.0
    %1728 = vmatprep.subr.mxu0 0.0
    %1729 = vmatpush2.msra.mxu0 0.0
    %1730 = vmatprep.subr.mxu0 0.0
    %1731 = vmatpush2.msra.mxu0 0.0
    %1732 = vmatprep.subr.mxu0 0.0
    %1733 = vmatpush2.msra.mxu0 0.0
    %1734 = vmatprep.subr.mxu0 0.0
    %1735 = vmatpush2.msra.mxu0 0.0
    %1736 = vmatprep.subr.mxu0 0.0
    %1737 = vmatpush2.msra.mxu0 0.0
    %1738 = vmatprep.subr.mxu0 0.0
    %1739 = vmatpush2.msra.mxu0 0.0
    %1740 = vmatprep.subr.mxu0 0.0
    %1741 = vmatpush2.msra.mxu0 0.0
    %1742 = vmatprep.subr.mxu0 0.0
    %1743 = vmatpush2.msra.mxu0 0.0
    %1744 = vmatprep.subr.mxu0 0.0
    %1745 = vmatpush2.msra.mxu0 0.0
    %1746 = vmatprep.subr.mxu0 0.0
    %1747 = vmatpush2.msra.mxu0 0.0
    %1748 = vmatprep.subr.mxu0 0.0
    %1749 = vmatpush2.msra.mxu0 0.0
    %1750 = vmatprep.mubr.f32.mxu0 0.0
    %1751 = vmatmul.mubr.f32.gmra.mxu0 %v1684
    %v1752 = vpop.f32.mrf.mxu0
    %v1753 = vadd.f32 %v1107, %v1752
    %v1754 = vpop.f32.mrf.mxu0
    %1755 = vdwg.mxu0
    %v1756 = vadd.f32 %v1101, %v1753
    %v1757 = vxor.u32 %v1756, 2147483648
    %v1758 = vmul.f32 %v1757, 1.442695
    %v1759 = vpow.pop %v1758
    %v1760 = vadd.f32 %v1759, 1.0
    %v1761 = vrcp.pop %v1760
    %v1762 = vmul.f32 1.0, %v1761
    %1764 = vrot.lane.b32.xlu0 %v1753, 64
    %v1765 = vpop.permute.xlu0 %1764
    %v1767 = vmul.f32 %v1762, %v1765
    %1769 = vrot.lane.b32.xlu0 %v1767, 64
    %v1770 = vpop.permute.xlu0 %1769
    %v1772 = vadd.f32 %v1101, %v1770
    %v1773 = vtanh.pop %v1772
    %v1774 = vsub.f32 1.0, %v1762
    %1776 = vrot.lane.b32.xlu0 %v1773, 96
    %v1777 = vpop.permute.xlu0 %1776
    %v1779 = vmul.f32 %v1774, %v1777
    %v1781 = vmul.f32 %v1762, %v1681
    %v1782 = vadd.f32 %v1779, %v1781
    %v1785 = vunpack.c.l.s4 1966171168
    %v1786 = vunpack.c.0.s8 %v1785
    %v1787 = vlaneseq
    %v1788 = vshrl.u32 %v1787, 7
    %v1789 = vsub.s32 %v1786, %v1788
    %v1790 = vrot.slane %v1782, %v1789
    %v1791 = vcombine.high %v1790, %v1790
    %v1793 = vunpack.c.l.s4 1966171168
    %v1794 = vunpack.c.0.s8 %v1793
    %v1795 = vlaneseq
    %v1796 = vshrl.u32 %v1795, 7
    %v1797 = vsub.s32 %v1794, %v1796
    %v1798 = vrot.slane %v1790, %v1797
    %v1800 = vunpack.c.l.s4 1966171168
    %v1801 = vunpack.c.0.s8 %v1800
    %v1802 = vlaneseq
    %v1803 = vshrl.u32 %v1802, 7
    %v1804 = vsub.s32 %v1801, %v1803
    %v1805 = vrot.slane %v1791, %v1804
    %v1806 = vlaneseq
    %v1807 = vshrl.u32 %v1806, 7
    %v1808 = vsub.s32 0, %v1807
    %v1809 = vrot.slane %v1798, %v1808
    %v1810 = vlaneseq
    %v1811 = vshrl.u32 %v1810, 7
    %v1812 = vsub.s32 0, %v1811
    %v1813 = vrot.slane %v1805, %v1812
    %1814 = vrot.lane.b32.xlu0 %v1809, 96
    %v1815 = vpop.permute.xlu0 %1814
    %1816 = vrot.lane.b32.xlu0 %v1813, 96
    %v1817 = vpop.permute.xlu0 %1816
    %1820 = vst.msk [vmem:[#allocation3 + $0x4] sm:$0x1] %vm1241, %v1815
    %1821 = vst.msk [vmem:[#allocation3 + $0xc] sm:$0x1] %vm1241, %v1817
    %1822 = vrot.lane.b32.xlu0 %v1782, 96
    %v1823 = vpop.permute.xlu0 %1822
    %v1824 = vsel %vm147, %v1823, 0
    %1826 = vmatprep.subr.mxu0 0.0
    %1827 = vmatpush1.msra.mxu0 0.0
    %1828 = vmatprep.subr.mxu0 0.0
    %1829 = vmatpush1.msra.mxu0 0.0
    %1830 = vmatprep.subr.mxu0 0.0
    %1831 = vmatpush1.msra.mxu0 0.0
    %1832 = vmatprep.subr.mxu0 0.0
    %1833 = vmatpush1.msra.mxu0 0.0
    %1834 = vmatprep.subr.mxu0 0.0
    %1835 = vmatpush1.msra.mxu0 0.0
    %1836 = vmatprep.subr.mxu0 0.0
    %1837 = vmatpush1.msra.mxu0 0.0
    %1838 = vmatprep.subr.mxu0 0.0
    %1839 = vmatpush1.msra.mxu0 0.0
    %1840 = vmatprep.subr.mxu0 0.0
    %1841 = vmatpush1.msra.mxu0 0.0
    %1842 = vmatprep.subr.mxu0 0.0
    %1843 = vmatpush1.msra.mxu0 0.0
    %1844 = vmatprep.subr.mxu0 0.0
    %1845 = vmatpush1.msra.mxu0 0.0
    %1846 = vmatprep.subr.mxu0 0.0
    %1847 = vmatpush1.msra.mxu0 0.0
    %1848 = vmatprep.subr.mxu0 0.0
    %1849 = vmatpush1.msra.mxu0 0.0
    %1850 = vmatprep.subr.mxu0 0.0
    %1851 = vmatpush1.msra.mxu0 %v30
    %1852 = vmatprep.subr.mxu0 0.0
    %1853 = vmatpush1.msra.mxu0 %v29
    %1854 = vmatprep.subr.mxu0 0.0
    %1855 = vmatpush1.msra.mxu0 %v28
    %1856 = vmatprep.subr.mxu0 0.0
    %1857 = vmatpush1.msra.mxu0 %v27
    %1858 = vmatprep.subr.mxu0 0.0
    %1859 = vmatpush2.msra.mxu0 0.0
    %1860 = vmatprep.subr.mxu0 0.0
    %1861 = vmatpush2.msra.mxu0 0.0
    %1862 = vmatprep.subr.mxu0 0.0
    %1863 = vmatpush2.msra.mxu0 0.0
    %1864 = vmatprep.subr.mxu0 0.0
    %1865 = vmatpush2.msra.mxu0 0.0
    %1866 = vmatprep.subr.mxu0 0.0
    %1867 = vmatpush2.msra.mxu0 0.0
    %1868 = vmatprep.subr.mxu0 0.0
    %1869 = vmatpush2.msra.mxu0 0.0
    %1870 = vmatprep.subr.mxu0 0.0
    %1871 = vmatpush2.msra.mxu0 0.0
    %1872 = vmatprep.subr.mxu0 0.0
    %1873 = vmatpush2.msra.mxu0 0.0
    %1874 = vmatprep.subr.mxu0 0.0
    %1875 = vmatpush2.msra.mxu0 0.0
    %1876 = vmatprep.subr.mxu0 0.0
    %1877 = vmatpush2.msra.mxu0 0.0
    %1878 = vmatprep.subr.mxu0 0.0
    %1879 = vmatpush2.msra.mxu0 0.0
    %1880 = vmatprep.subr.mxu0 0.0
    %1881 = vmatpush2.msra.mxu0 0.0
    %1882 = vmatprep.subr.mxu0 0.0
    %1883 = vmatpush2.msra.mxu0 0.0
    %1884 = vmatprep.subr.mxu0 0.0
    %1885 = vmatpush2.msra.mxu0 0.0
    %1886 = vmatprep.subr.mxu0 0.0
    %1887 = vmatpush2.msra.mxu0 0.0
    %1888 = vmatprep.subr.mxu0 0.0
    %1889 = vmatpush2.msra.mxu0 0.0
    %1890 = vmatprep.mubr.f32.mxu0 0.0
    %1891 = vmatmul.mubr.f32.gmra.mxu0 %v1824
    %v1892 = vpop.f32.mrf.mxu0
    %v1893 = vadd.f32 %v1107, %v1892
    %v1894 = vpop.f32.mrf.mxu0
    %1895 = vdwg.mxu0
    %v1897 = vrot.slane %v1893, 6
    %v1899 = vadd.f32 %v1101, %v1897
    %v1900 = vxor.u32 %v1899, 2147483648
    %v1901 = vmul.f32 %v1900, 1.442695
    %v1902 = vpow.pop %v1901
    %v1903 = vadd.f32 %v1902, 1.0
    %v1904 = vrcp.pop %v1903
    %v1905 = vmul.f32 1.0, %v1904
    %1906 = vrot.lane.b32.xlu0 %v1897, 64
    %v1907 = vpop.permute.xlu0 %1906
    %v1909 = vmul.f32 %v1905, %v1907
    %1911 = vrot.lane.b32.xlu0 %v1909, 64
    %v1912 = vpop.permute.xlu0 %1911
    %v1914 = vadd.f32 %v1101, %v1912
    %v1915 = vtanh.pop %v1914
    %v1916 = vsub.f32 1.0, %v1905
    %1918 = vrot.lane.b32.xlu0 %v1915, 96
    %v1919 = vpop.permute.xlu0 %1918
    %v1921 = vmul.f32 %v1916, %v1919
    %v1922 = vrot.slane %v1782, 6
    %v1924 = vmul.f32 %v1905, %v1922
    %v1925 = vadd.f32 %v1921, %v1924
    %v1928 = vunpack.c.l.s4 1966171168
    %v1929 = vunpack.c.0.s8 %v1928
    %v1930 = vlaneseq
    %v1931 = vshrl.u32 %v1930, 7
    %v1932 = vsub.s32 %v1929, %v1931
    %v1933 = vrot.slane %v1925, %v1932
    %v1934 = vcombine.high %v1933, %v1933
    %v1936 = vunpack.c.l.s4 1966171168
    %v1937 = vunpack.c.0.s8 %v1936
    %v1938 = vlaneseq
    %v1939 = vshrl.u32 %v1938, 7
    %v1940 = vsub.s32 %v1937, %v1939
    %v1941 = vrot.slane %v1933, %v1940
    %v1943 = vunpack.c.l.s4 1966171168
    %v1944 = vunpack.c.0.s8 %v1943
    %v1945 = vlaneseq
    %v1946 = vshrl.u32 %v1945, 7
    %v1947 = vsub.s32 %v1944, %v1946
    %v1948 = vrot.slane %v1934, %v1947
    %v1949 = vcombine.high %v1941, %v1941
    %v1950 = vcombine.high %v1948, %v1948
    %v1951 = vlaneseq
    %v1952 = vshrl.u32 %v1951, 7
    %v1953 = vsub.s32 0, %v1952
    %v1954 = vrot.slane %v1949, %v1953
    %v1955 = vlaneseq
    %v1956 = vshrl.u32 %v1955, 7
    %v1957 = vsub.s32 0, %v1956
    %v1958 = vrot.slane %v1950, %v1957
    %1959 = vrot.lane.b32.xlu0 %v1954, 96
    %v1960 = vpop.permute.xlu0 %1959
    %1961 = vrot.lane.b32.xlu0 %v1958, 96
    %v1962 = vpop.permute.xlu0 %1961
    %1965 = vst.msk [vmem:[#allocation3 + $0x5] sm:$0x1] %vm1241, %v1960
    %1966 = vst.msk [vmem:[#allocation3 + $0xd] sm:$0x1] %vm1241, %v1962
    %v1967 = vrot.slane %v1925, 2
    %1968 = vrot.lane.b32.xlu0 %v1967, 96
    %v1969 = vpop.permute.xlu0 %1968
    %v1970 = vsel %vm147, %v1969, 0
    %1972 = vmatprep.subr.mxu0 0.0
    %1973 = vmatpush1.msra.mxu0 0.0
    %1974 = vmatprep.subr.mxu0 0.0
    %1975 = vmatpush1.msra.mxu0 0.0
    %1976 = vmatprep.subr.mxu0 0.0
    %1977 = vmatpush1.msra.mxu0 0.0
    %1978 = vmatprep.subr.mxu0 0.0
    %1979 = vmatpush1.msra.mxu0 0.0
    %1980 = vmatprep.subr.mxu0 0.0
    %1981 = vmatpush1.msra.mxu0 0.0
    %1982 = vmatprep.subr.mxu0 0.0
    %1983 = vmatpush1.msra.mxu0 0.0
    %1984 = vmatprep.subr.mxu0 0.0
    %1985 = vmatpush1.msra.mxu0 0.0
    %1986 = vmatprep.subr.mxu0 0.0
    %1987 = vmatpush1.msra.mxu0 0.0
    %1988 = vmatprep.subr.mxu0 0.0
    %1989 = vmatpush1.msra.mxu0 0.0
    %1990 = vmatprep.subr.mxu0 0.0
    %1991 = vmatpush1.msra.mxu0 0.0
    %1992 = vmatprep.subr.mxu0 0.0
    %1993 = vmatpush1.msra.mxu0 0.0
    %1994 = vmatprep.subr.mxu0 0.0
    %1995 = vmatpush1.msra.mxu0 0.0
    %1996 = vmatprep.subr.mxu0 0.0
    %1997 = vmatpush1.msra.mxu0 %v30
    %1998 = vmatprep.subr.mxu0 0.0
    %1999 = vmatpush1.msra.mxu0 %v29
    %2000 = vmatprep.subr.mxu0 0.0
    %2001 = vmatpush1.msra.mxu0 %v28
    %2002 = vmatprep.subr.mxu0 0.0
    %2003 = vmatpush1.msra.mxu0 %v27
    %2004 = vmatprep.subr.mxu0 0.0
    %2005 = vmatpush2.msra.mxu0 0.0
    %2006 = vmatprep.subr.mxu0 0.0
    %2007 = vmatpush2.msra.mxu0 0.0
    %2008 = vmatprep.subr.mxu0 0.0
    %2009 = vmatpush2.msra.mxu0 0.0
    %2010 = vmatprep.subr.mxu0 0.0
    %2011 = vmatpush2.msra.mxu0 0.0
    %2012 = vmatprep.subr.mxu0 0.0
    %2013 = vmatpush2.msra.mxu0 0.0
    %2014 = vmatprep.subr.mxu0 0.0
    %2015 = vmatpush2.msra.mxu0 0.0
    %2016 = vmatprep.subr.mxu0 0.0
    %2017 = vmatpush2.msra.mxu0 0.0
    %2018 = vmatprep.subr.mxu0 0.0
    %2019 = vmatpush2.msra.mxu0 0.0
    %2020 = vmatprep.subr.mxu0 0.0
    %2021 = vmatpush2.msra.mxu0 0.0
    %2022 = vmatprep.subr.mxu0 0.0
    %2023 = vmatpush2.msra.mxu0 0.0
    %2024 = vmatprep.subr.mxu0 0.0
    %2025 = vmatpush2.msra.mxu0 0.0
    %2026 = vmatprep.subr.mxu0 0.0
    %2027 = vmatpush2.msra.mxu0 0.0
    %2028 = vmatprep.subr.mxu0 0.0
    %2029 = vmatpush2.msra.mxu0 0.0
    %2030 = vmatprep.subr.mxu0 0.0
    %2031 = vmatpush2.msra.mxu0 0.0
    %2032 = vmatprep.subr.mxu0 0.0
    %2033 = vmatpush2.msra.mxu0 0.0
    %2034 = vmatprep.subr.mxu0 0.0
    %2035 = vmatpush2.msra.mxu0 0.0
    %2036 = vmatprep.mubr.f32.mxu0 0.0
    %2037 = vmatmul.mubr.f32.gmra.mxu0 %v1970
    %v2038 = vpop.f32.mrf.mxu0
    %v2039 = vadd.f32 %v1107, %v2038
    %v2040 = vpop.f32.mrf.mxu0
    %2041 = vdwg.mxu0
    %v2043 = vrot.slane %v2039, 4
    %v2045 = vadd.f32 %v1101, %v2043
    %v2046 = vxor.u32 %v2045, 2147483648
    %v2047 = vmul.f32 %v2046, 1.442695
    %v2048 = vpow.pop %v2047
    %v2049 = vadd.f32 %v2048, 1.0
    %v2050 = vrcp.pop %v2049
    %v2051 = vmul.f32 1.0, %v2050
    %2052 = vrot.lane.b32.xlu0 %v2043, 64
    %v2053 = vpop.permute.xlu0 %2052
    %v2055 = vmul.f32 %v2051, %v2053
    %2057 = vrot.lane.b32.xlu0 %v2055, 64
    %v2058 = vpop.permute.xlu0 %2057
    %v2060 = vadd.f32 %v1101, %v2058
    %v2061 = vtanh.pop %v2060
    %v2062 = vsub.f32 1.0, %v2051
    %2064 = vrot.lane.b32.xlu0 %v2061, 96
    %v2065 = vpop.permute.xlu0 %2064
    %v2067 = vmul.f32 %v2062, %v2065
    %v2068 = vrot.slane %v1925, 6
    %v2070 = vmul.f32 %v2051, %v2068
    %v2071 = vadd.f32 %v2067, %v2070
    %v2073 = vcombine.high %v2071, %v2071
    %v2075 = vunpack.c.l.s4 1966171168
    %v2076 = vunpack.c.0.s8 %v2075
    %v2077 = vlaneseq
    %v2078 = vshrl.u32 %v2077, 7
    %v2079 = vsub.s32 %v2076, %v2078
    %v2080 = vrot.slane %v2073, %v2079
    %v2081 = vcombine.high %v2080, %v2080
    %v2083 = vunpack.c.l.s4 1966171168
    %v2084 = vunpack.c.0.s8 %v2083
    %v2085 = vlaneseq
    %v2086 = vshrl.u32 %v2085, 7
    %v2087 = vsub.s32 %v2084, %v2086
    %v2088 = vrot.slane %v2080, %v2087
    %v2090 = vunpack.c.l.s4 1966171168
    %v2091 = vunpack.c.0.s8 %v2090
    %v2092 = vlaneseq
    %v2093 = vshrl.u32 %v2092, 7
    %v2094 = vsub.s32 %v2091, %v2093
    %v2095 = vrot.slane %v2081, %v2094
    %v2096 = vlaneseq
    %v2097 = vshrl.u32 %v2096, 7
    %v2098 = vsub.s32 0, %v2097
    %v2099 = vrot.slane %v2088, %v2098
    %v2100 = vlaneseq
    %v2101 = vshrl.u32 %v2100, 7
    %v2102 = vsub.s32 0, %v2101
    %v2103 = vrot.slane %v2095, %v2102
    %2104 = vrot.lane.b32.xlu0 %v2099, 96
    %v2105 = vpop.permute.xlu0 %2104
    %2106 = vrot.lane.b32.xlu0 %v2103, 96
    %v2107 = vpop.permute.xlu0 %2106
    %2110 = vst.msk [vmem:[#allocation3 + $0x6] sm:$0x1] %vm1241, %v2105
    %2111 = vst.msk [vmem:[#allocation3 + $0xe] sm:$0x1] %vm1241, %v2107
    %v2112 = vrot.slane %v2071, 4
    %2113 = vrot.lane.b32.xlu0 %v2112, 96
    %v2114 = vpop.permute.xlu0 %2113
    %v2115 = vsel %vm147, %v2114, 0
    %2117 = vmatprep.subr.mxu0 0.0
    %2118 = vmatpush1.msra.mxu0 0.0
    %2119 = vmatprep.subr.mxu0 0.0
    %2120 = vmatpush1.msra.mxu0 0.0
    %2121 = vmatprep.subr.mxu0 0.0
    %2122 = vmatpush1.msra.mxu0 0.0
    %2123 = vmatprep.subr.mxu0 0.0
    %2124 = vmatpush1.msra.mxu0 0.0
    %2125 = vmatprep.subr.mxu0 0.0
    %2126 = vmatpush1.msra.mxu0 0.0
    %2127 = vmatprep.subr.mxu0 0.0
    %2128 = vmatpush1.msra.mxu0 0.0
    %2129 = vmatprep.subr.mxu0 0.0
    %2130 = vmatpush1.msra.mxu0 0.0
    %2131 = vmatprep.subr.mxu0 0.0
    %2132 = vmatpush1.msra.mxu0 0.0
    %2133 = vmatprep.subr.mxu0 0.0
    %2134 = vmatpush1.msra.mxu0 0.0
    %2135 = vmatprep.subr.mxu0 0.0
    %2136 = vmatpush1.msra.mxu0 0.0
    %2137 = vmatprep.subr.mxu0 0.0
    %2138 = vmatpush1.msra.mxu0 0.0
    %2139 = vmatprep.subr.mxu0 0.0
    %2140 = vmatpush1.msra.mxu0 0.0
    %2141 = vmatprep.subr.mxu0 0.0
    %2142 = vmatpush1.msra.mxu0 %v30
    %2143 = vmatprep.subr.mxu0 0.0
    %2144 = vmatpush1.msra.mxu0 %v29
    %2145 = vmatprep.subr.mxu0 0.0
    %2146 = vmatpush1.msra.mxu0 %v28
    %2147 = vmatprep.subr.mxu0 0.0
    %2148 = vmatpush1.msra.mxu0 %v27
    %2149 = vmatprep.subr.mxu0 0.0
    %2150 = vmatpush2.msra.mxu0 0.0
    %2151 = vmatprep.subr.mxu0 0.0
    %2152 = vmatpush2.msra.mxu0 0.0
    %2153 = vmatprep.subr.mxu0 0.0
    %2154 = vmatpush2.msra.mxu0 0.0
    %2155 = vmatprep.subr.mxu0 0.0
    %2156 = vmatpush2.msra.mxu0 0.0
    %2157 = vmatprep.subr.mxu0 0.0
    %2158 = vmatpush2.msra.mxu0 0.0
    %2159 = vmatprep.subr.mxu0 0.0
    %2160 = vmatpush2.msra.mxu0 0.0
    %2161 = vmatprep.subr.mxu0 0.0
    %2162 = vmatpush2.msra.mxu0 0.0
    %2163 = vmatprep.subr.mxu0 0.0
    %2164 = vmatpush2.msra.mxu0 0.0
    %2165 = vmatprep.subr.mxu0 0.0
    %2166 = vmatpush2.msra.mxu0 0.0
    %2167 = vmatprep.subr.mxu0 0.0
    %2168 = vmatpush2.msra.mxu0 0.0
    %2169 = vmatprep.subr.mxu0 0.0
    %2170 = vmatpush2.msra.mxu0 0.0
    %2171 = vmatprep.subr.mxu0 0.0
    %2172 = vmatpush2.msra.mxu0 0.0
    %2173 = vmatprep.subr.mxu0 0.0
    %2174 = vmatpush2.msra.mxu0 0.0
    %2175 = vmatprep.subr.mxu0 0.0
    %2176 = vmatpush2.msra.mxu0 0.0
    %2177 = vmatprep.subr.mxu0 0.0
    %2178 = vmatpush2.msra.mxu0 0.0
    %2179 = vmatprep.subr.mxu0 0.0
    %2180 = vmatpush2.msra.mxu0 0.0
    %2181 = vmatprep.mubr.f32.mxu0 0.0
    %2182 = vmatmul.mubr.f32.gmra.mxu0 %v2115
    %v2183 = vpop.f32.mrf.mxu0
    %v2184 = vadd.f32 %v1107, %v2183
    %v2185 = vpop.f32.mrf.mxu0
    %2186 = vdwg.mxu0
    %v2188 = vrot.slane %v2184, 2
    %v2190 = vadd.f32 %v1101, %v2188
    %v2191 = vxor.u32 %v2190, 2147483648
    %v2192 = vmul.f32 %v2191, 1.442695
    %v2193 = vpow.pop %v2192
    %v2194 = vadd.f32 %v2193, 1.0
    %v2195 = vrcp.pop %v2194
    %v2196 = vmul.f32 1.0, %v2195
    %2197 = vrot.lane.b32.xlu0 %v2188, 64
    %v2198 = vpop.permute.xlu0 %2197
    %v2200 = vmul.f32 %v2196, %v2198
    %2202 = vrot.lane.b32.xlu0 %v2200, 64
    %v2203 = vpop.permute.xlu0 %2202
    %v2205 = vadd.f32 %v1101, %v2203
    %v2206 = vtanh.pop %v2205
    %v2207 = vsub.f32 1.0, %v2196
    %2209 = vrot.lane.b32.xlu0 %v2206, 96
    %v2210 = vpop.permute.xlu0 %2209
    %v2212 = vmul.f32 %v2207, %v2210
    %v2213 = vrot.slane %v2071, 6
    %v2215 = vmul.f32 %v2196, %v2213
    %v2216 = vadd.f32 %v2212, %v2215
    %v2218 = vcombine.high %v2216, %v2216
    %v2220 = vunpack.c.l.s4 1966171168
    %v2221 = vunpack.c.0.s8 %v2220
    %v2222 = vlaneseq
    %v2223 = vshrl.u32 %v2222, 7
    %v2224 = vsub.s32 %v2221, %v2223
    %v2225 = vrot.slane %v2218, %v2224
    %v2226 = vcombine.high %v2225, %v2225
    %v2228 = vunpack.c.l.s4 1966171168
    %v2229 = vunpack.c.0.s8 %v2228
    %v2230 = vlaneseq
    %v2231 = vshrl.u32 %v2230, 7
    %v2232 = vsub.s32 %v2229, %v2231
    %v2233 = vrot.slane %v2225, %v2232
    %v2235 = vunpack.c.l.s4 1966171168
    %v2236 = vunpack.c.0.s8 %v2235
    %v2237 = vlaneseq
    %v2238 = vshrl.u32 %v2237, 7
    %v2239 = vsub.s32 %v2236, %v2238
    %v2240 = vrot.slane %v2226, %v2239
    %v2241 = vcombine.high %v2233, %v2233
    %v2242 = vcombine.high %v2240, %v2240
    %v2243 = vlaneseq
    %v2244 = vshrl.u32 %v2243, 7
    %v2245 = vsub.s32 0, %v2244
    %v2246 = vrot.slane %v2241, %v2245
    %v2247 = vlaneseq
    %v2248 = vshrl.u32 %v2247, 7
    %v2249 = vsub.s32 0, %v2248
    %v2250 = vrot.slane %v2242, %v2249
    %2251 = vrot.lane.b32.xlu0 %v2246, 96
    %v2252 = vpop.permute.xlu0 %2251
    %2253 = vrot.lane.b32.xlu0 %v2250, 96
    %v2254 = vpop.permute.xlu0 %2253
    %2257 = vst.msk [vmem:[#allocation3 + $0x7] sm:$0x1] %vm1241, %v2252
    %2258 = vst.msk [vmem:[#allocation3 + $0xf] sm:$0x1] %vm1241, %v2254
    %v2259 = vld [vmem:[#allocation3] sm:$0xff]
    %v2260 = vld [vmem:[#allocation3 + $0x8] sm:$0xff]
    %v2261 = vlaneseq
    %v2262 = vshrl.u32 %v2261, 7
    %v2263 = vsub.s32 0, %v2262
    %v2264 = vrot.slane %v39, %v2263
    %v2266 = vsel %vm147, %v2259, 0
    %v2269 = vsel %vm147, %v2260, 0
    %2271 = vmatprep.subr.mxu0 0.0
    %2272 = vmatpush1.msra.mxu0 0.0
    %2273 = vmatprep.subr.mxu0 0.0
    %2274 = vmatpush1.msra.mxu0 0.0
    %2275 = vmatprep.subr.mxu0 0.0
    %2276 = vmatpush1.msra.mxu0 0.0
    %2277 = vmatprep.subr.mxu0 0.0
    %2278 = vmatpush1.msra.mxu0 0.0
    %2279 = vmatprep.subr.mxu0 0.0
    %2280 = vmatpush1.msra.mxu0 0.0
    %2281 = vmatprep.subr.mxu0 0.0
    %2282 = vmatpush1.msra.mxu0 0.0
    %2283 = vmatprep.subr.mxu0 0.0
    %2284 = vmatpush1.msra.mxu0 0.0
    %2285 = vmatprep.subr.mxu0 0.0
    %2286 = vmatpush1.msra.mxu0 0.0
    %2287 = vmatprep.subr.mxu0 0.0
    %2288 = vmatpush1.msra.mxu0 0.0
    %2289 = vmatprep.subr.mxu0 0.0
    %2290 = vmatpush1.msra.mxu0 0.0
    %2291 = vmatprep.subr.mxu0 0.0
    %2292 = vmatpush1.msra.mxu0 0.0
    %2293 = vmatprep.subr.mxu0 0.0
    %2294 = vmatpush1.msra.mxu0 0.0
    %2295 = vmatprep.subr.mxu0 0.0
    %2296 = vmatpush1.msra.mxu0 %v34
    %2297 = vmatprep.subr.mxu0 0.0
    %2298 = vmatpush1.msra.mxu0 %v33
    %2299 = vmatprep.subr.mxu0 0.0
    %2300 = vmatpush1.msra.mxu0 %v32
    %2301 = vmatprep.subr.mxu0 0.0
    %2302 = vmatpush1.msra.mxu0 %v31
    %2303 = vmatprep.subr.mxu0 0.0
    %2304 = vmatpush2.msra.mxu0 0.0
    %2305 = vmatprep.subr.mxu0 0.0
    %2306 = vmatpush2.msra.mxu0 0.0
    %2307 = vmatprep.subr.mxu0 0.0
    %2308 = vmatpush2.msra.mxu0 0.0
    %2309 = vmatprep.subr.mxu0 0.0
    %2310 = vmatpush2.msra.mxu0 0.0
    %2311 = vmatprep.subr.mxu0 0.0
    %2312 = vmatpush2.msra.mxu0 0.0
    %2313 = vmatprep.subr.mxu0 0.0
    %2314 = vmatpush2.msra.mxu0 0.0
    %2315 = vmatprep.subr.mxu0 0.0
    %2316 = vmatpush2.msra.mxu0 0.0
    %2317 = vmatprep.subr.mxu0 0.0
    %2318 = vmatpush2.msra.mxu0 0.0
    %2319 = vmatprep.subr.mxu0 0.0
    %2320 = vmatpush2.msra.mxu0 0.0
    %2321 = vmatprep.subr.mxu0 0.0
    %2322 = vmatpush2.msra.mxu0 0.0
    %2323 = vmatprep.subr.mxu0 0.0
    %2324 = vmatpush2.msra.mxu0 0.0
    %2325 = vmatprep.subr.mxu0 0.0
    %2326 = vmatpush2.msra.mxu0 0.0
    %2327 = vmatprep.subr.mxu0 0.0
    %2328 = vmatpush2.msra.mxu0 0.0
    %2329 = vmatprep.subr.mxu0 0.0
    %2330 = vmatpush2.msra.mxu0 0.0
    %2331 = vmatprep.subr.mxu0 0.0
    %2332 = vmatpush2.msra.mxu0 0.0
    %2333 = vmatprep.subr.mxu0 0.0
    %2334 = vmatpush2.msra.mxu0 0.0
    %2335 = vmatprep.mubr.f32.mxu0 0.0
    %2336 = vmatmul.mubr.f32.gmra.mxu0 %v2266
    %v2337 = vpop.f32.mrf.mxu0
    %v2338 = vadd.f32 %v2264, %v2337
    %v2339 = vpop.f32.mrf.mxu0
    %2340 = vmatprep.mubr.f32.mxu0 0.0
    %2341 = vmatmul.mubr.f32.gmra.mxu0 %v2269
    %v2342 = vpop.f32.mrf.mxu0
    %v2343 = vadd.f32 %v2264, %v2342
    %v2344 = vpop.f32.mrf.mxu0
    %2345 = vdwg.mxu0
    %v2346 = vlaneseq
    %v2347 = vand.u32 %v2346, 127
    %vm2348 = vcmp.ge.s32.totalorder %v2347, 0
    %vm2349 = vcmp.lt.s32.totalorder %v2347, 8
    %vm2350 = vmand %vm2348, %vm2349
    %v2351 = vsel %vm2350, 1.0, 0.0
    %v2352 = vmul.f32 %v2338, %v2351
    %2354 = vrot.lane.b32.xlu0 %v2338, 96
    %v2355 = vpop.permute.xlu0 %2354
    %v2357 = vsel %vm147, %v2352, 0
    %v2359 = vsel %vm147, %v2355, 0
    %2361 = vmatprep.subr.mxu0 0.0
    %2362 = vmatpush1.xpose.msra.mxu0 0.0
    %2363 = vmatprep.subr.mxu0 0.0
    %2364 = vmatpush1.xpose.msra.mxu0 0.0
    %2365 = vmatprep.subr.mxu0 0.0
    %2366 = vmatpush1.xpose.msra.mxu0 0.0
    %2367 = vmatprep.subr.mxu0 0.0
    %2368 = vmatpush1.xpose.msra.mxu0 0.0
    %2369 = vmatprep.subr.mxu0 0.0
    %2370 = vmatpush1.xpose.msra.mxu0 0.0
    %2371 = vmatprep.subr.mxu0 0.0
    %2372 = vmatpush1.xpose.msra.mxu0 0.0
    %2373 = vmatprep.subr.mxu0 0.0
    %2374 = vmatpush1.xpose.msra.mxu0 0.0
    %2375 = vmatprep.subr.mxu0 0.0
    %2376 = vmatpush1.xpose.msra.mxu0 0.0
    %2377 = vmatprep.subr.mxu0 0.0
    %2378 = vmatpush1.xpose.msra.mxu0 0.0
    %2379 = vmatprep.subr.mxu0 0.0
    %2380 = vmatpush1.xpose.msra.mxu0 0.0
    %2381 = vmatprep.subr.mxu0 0.0
    %2382 = vmatpush1.xpose.msra.mxu0 0.0
    %2383 = vmatprep.subr.mxu0 0.0
    %2384 = vmatpush1.xpose.msra.mxu0 0.0
    %2385 = vmatprep.subr.mxu0 0.0
    %2386 = vmatpush1.xpose.msra.mxu0 0.0
    %2387 = vmatprep.subr.mxu0 0.0
    %2388 = vmatpush1.xpose.msra.mxu0 0.0
    %2389 = vmatprep.subr.mxu0 0.0
    %2390 = vmatpush1.xpose.msra.mxu0 0.0
    %2391 = vmatprep.subr.mxu0 0.0
    %2392 = vmatpush1.xpose.msra.mxu0 %v2359
    %2393 = vmatprep.subr.mxu0 0.0
    %2394 = vmatpush2.xpose.msra.mxu0 0.0
    %2395 = vmatprep.subr.mxu0 0.0
    %2396 = vmatpush2.xpose.msra.mxu0 0.0
    %2397 = vmatprep.subr.mxu0 0.0
    %2398 = vmatpush2.xpose.msra.mxu0 0.0
    %2399 = vmatprep.subr.mxu0 0.0
    %2400 = vmatpush2.xpose.msra.mxu0 0.0
    %2401 = vmatprep.subr.mxu0 0.0
    %2402 = vmatpush2.xpose.msra.mxu0 0.0
    %2403 = vmatprep.subr.mxu0 0.0
    %2404 = vmatpush2.xpose.msra.mxu0 0.0
    %2405 = vmatprep.subr.mxu0 0.0
    %2406 = vmatpush2.xpose.msra.mxu0 0.0
    %2407 = vmatprep.subr.mxu0 0.0
    %2408 = vmatpush2.xpose.msra.mxu0 0.0
    %2409 = vmatprep.subr.mxu0 0.0
    %2410 = vmatpush2.xpose.msra.mxu0 0.0
    %2411 = vmatprep.subr.mxu0 0.0
    %2412 = vmatpush2.xpose.msra.mxu0 0.0
    %2413 = vmatprep.subr.mxu0 0.0
    %2414 = vmatpush2.xpose.msra.mxu0 0.0
    %2415 = vmatprep.subr.mxu0 0.0
    %2416 = vmatpush2.xpose.msra.mxu0 0.0
    %2417 = vmatprep.subr.mxu0 0.0
    %2418 = vmatpush2.xpose.msra.mxu0 0.0
    %2419 = vmatprep.subr.mxu0 0.0
    %2420 = vmatpush2.xpose.msra.mxu0 0.0
    %2421 = vmatprep.subr.mxu0 0.0
    %2422 = vmatpush2.xpose.msra.mxu0 0.0
    %2423 = vmatprep.subr.mxu0 0.0
    %2424 = vmatpush2.xpose.msra.mxu0 0.0
    %2425 = vmatprep.mubr.f32.mxu0 0.0
    %2426 = vmatmul.mubr.f32.gmra.mxu0 %v2357
    %v2427 = vpop.f32.mrf.mxu0
    %v2428 = vadd.f32 0.0, %v2427
    %v2429 = vpop.f32.mrf.mxu0
    %2430 = vdwg.mxu0
    %vm2431 = vcmask 64512
    %v2432 = vsel %vm2431, %v2428, -inf
    %2433 = vmax.xlane.f32.xlu0 %v2432
    %v2434 = vpop.xlane.xlu0 %2433
    %v2435 = vsub.f32 %v2428, %v2434
    %v2436 = vmul.f32 %v2435, 1.442695
    %v2437 = vpow.pop %v2436
    %v2438 = vsel %vm2431, %v2437, 0.0
    %2439 = vadd.xlane.f32.xlu0 %v2438
    %v2440 = vpop.xlane.xlu0 %2439
    %v2441 = vrcp.pop %v2440
    %v2442 = vmul.f32 %v2437, %v2441
    %v2443 = vadd.f32 %v2442, 0.0
    %2445 = vrot.lane.b32.xlu0 %v2351, 64
    %v2446 = vpop.permute.xlu0 %2445
    %v2448 = vmul.f32 %v2338, %v2446
    %vm2449 = vcmp.ge.s32.totalorder %v2347, 8
    %vm2450 = vcmp.lt.s32.totalorder %v2347, 16
    %vm2451 = vmand %vm2449, %vm2450
    %v2452 = vsel %vm2451, 1.0, 0.0
    %v2453 = vmul.f32 %v2338, %v2452
    %v2455 = vsel %vm147, %v2453, 0
    %2457 = vmatprep.subr.mxu0 0.0
    %2458 = vmatpush1.xpose.msra.mxu0 0.0
    %2459 = vmatprep.subr.mxu0 0.0
    %2460 = vmatpush1.xpose.msra.mxu0 0.0
    %2461 = vmatprep.subr.mxu0 0.0
    %2462 = vmatpush1.xpose.msra.mxu0 0.0
    %2463 = vmatprep.subr.mxu0 0.0
    %2464 = vmatpush1.xpose.msra.mxu0 0.0
    %2465 = vmatprep.subr.mxu0 0.0
    %2466 = vmatpush1.xpose.msra.mxu0 0.0
    %2467 = vmatprep.subr.mxu0 0.0
    %2468 = vmatpush1.xpose.msra.mxu0 0.0
    %2469 = vmatprep.subr.mxu0 0.0
    %2470 = vmatpush1.xpose.msra.mxu0 0.0
    %2471 = vmatprep.subr.mxu0 0.0
    %2472 = vmatpush1.xpose.msra.mxu0 0.0
    %2473 = vmatprep.subr.mxu0 0.0
    %2474 = vmatpush1.xpose.msra.mxu0 0.0
    %2475 = vmatprep.subr.mxu0 0.0
    %2476 = vmatpush1.xpose.msra.mxu0 0.0
    %2477 = vmatprep.subr.mxu0 0.0
    %2478 = vmatpush1.xpose.msra.mxu0 0.0
    %2479 = vmatprep.subr.mxu0 0.0
    %2480 = vmatpush1.xpose.msra.mxu0 0.0
    %2481 = vmatprep.subr.mxu0 0.0
    %2482 = vmatpush1.xpose.msra.mxu0 0.0
    %2483 = vmatprep.subr.mxu0 0.0
    %2484 = vmatpush1.xpose.msra.mxu0 0.0
    %2485 = vmatprep.subr.mxu0 0.0
    %2486 = vmatpush1.xpose.msra.mxu0 0.0
    %2487 = vmatprep.subr.mxu0 0.0
    %2488 = vmatpush1.xpose.msra.mxu0 %v2359
    %2489 = vmatprep.subr.mxu0 0.0
    %2490 = vmatpush2.xpose.msra.mxu0 0.0
    %2491 = vmatprep.subr.mxu0 0.0
    %2492 = vmatpush2.xpose.msra.mxu0 0.0
    %2493 = vmatprep.subr.mxu0 0.0
    %2494 = vmatpush2.xpose.msra.mxu0 0.0
    %2495 = vmatprep.subr.mxu0 0.0
    %2496 = vmatpush2.xpose.msra.mxu0 0.0
    %2497 = vmatprep.subr.mxu0 0.0
    %2498 = vmatpush2.xpose.msra.mxu0 0.0
    %2499 = vmatprep.subr.mxu0 0.0
    %2500 = vmatpush2.xpose.msra.mxu0 0.0
    %2501 = vmatprep.subr.mxu0 0.0
    %2502 = vmatpush2.xpose.msra.mxu0 0.0
    %2503 = vmatprep.subr.mxu0 0.0
    %2504 = vmatpush2.xpose.msra.mxu0 0.0
    %2505 = vmatprep.subr.mxu0 0.0
    %2506 = vmatpush2.xpose.msra.mxu0 0.0
    %2507 = vmatprep.subr.mxu0 0.0
    %2508 = vmatpush2.xpose.msra.mxu0 0.0
    %2509 = vmatprep.subr.mxu0 0.0
    %2510 = vmatpush2.xpose.msra.mxu0 0.0
    %2511 = vmatprep.subr.mxu0 0.0
    %2512 = vmatpush2.xpose.msra.mxu0 0.0
    %2513 = vmatprep.subr.mxu0 0.0
    %2514 = vmatpush2.xpose.msra.mxu0 0.0
    %2515 = vmatprep.subr.mxu0 0.0
    %2516 = vmatpush2.xpose.msra.mxu0 0.0
    %2517 = vmatprep.subr.mxu0 0.0
    %2518 = vmatpush2.xpose.msra.mxu0 0.0
    %2519 = vmatprep.subr.mxu0 0.0
    %2520 = vmatpush2.xpose.msra.mxu0 0.0
    %2521 = vmatprep.mubr.f32.mxu0 0.0
    %2522 = vmatmul.mubr.f32.gmra.mxu0 %v2455
    %v2523 = vpop.f32.mrf.mxu0
    %v2524 = vadd.f32 0.0, %v2523
    %v2525 = vpop.f32.mrf.mxu0
    %2526 = vdwg.mxu0
    %v2527 = vsel %vm2431, %v2524, -inf
    %2528 = vmax.xlane.f32.xlu0 %v2527
    %v2529 = vpop.xlane.xlu0 %2528
    %v2530 = vsub.f32 %v2524, %v2529
    %v2531 = vmul.f32 %v2530, 1.442695
    %v2532 = vpow.pop %v2531
    %v2533 = vsel %vm2431, %v2532, 0.0
    %2534 = vadd.xlane.f32.xlu0 %v2533
    %v2535 = vpop.xlane.xlu0 %2534
    %v2536 = vrcp.pop %v2535
    %v2537 = vmul.f32 %v2532, %v2536
    %v2538 = vadd.f32 %v2443, %v2537
    %2540 = vrot.lane.b32.xlu0 %v2452, 64
    %v2541 = vpop.permute.xlu0 %2540
    %v2543 = vmul.f32 %v2338, %v2541
    %v2545 = vrot.slane %v2537, 7
    %2547 = vrot.lane.b32.xlu0 %v2543, 64
    %v2548 = vpop.permute.xlu0 %2547
    %v2550 = vsel %vm2431, %v2545, 0
    %2552 = vmatprep.subr.mxu0 0.0
    %2553 = vmatpush1.msra.mxu0 0.0
    %2554 = vmatprep.subr.mxu0 0.0
    %2555 = vmatpush1.msra.mxu0 0.0
    %2556 = vmatprep.subr.mxu0 0.0
    %2557 = vmatpush1.msra.mxu0 0.0
    %2558 = vmatprep.subr.mxu0 0.0
    %2559 = vmatpush1.msra.mxu0 0.0
    %2560 = vmatprep.subr.mxu0 0.0
    %2561 = vmatpush1.msra.mxu0 0.0
    %2562 = vmatprep.subr.mxu0 0.0
    %2563 = vmatpush1.msra.mxu0 0.0
    %2564 = vmatprep.subr.mxu0 0.0
    %2565 = vmatpush1.msra.mxu0 0.0
    %2566 = vmatprep.subr.mxu0 0.0
    %2567 = vmatpush1.msra.mxu0 0.0
    %2568 = vmatprep.subr.mxu0 0.0
    %2569 = vmatpush1.msra.mxu0 0.0
    %2570 = vmatprep.subr.mxu0 0.0
    %2571 = vmatpush1.msra.mxu0 0.0
    %2572 = vmatprep.subr.mxu0 0.0
    %2573 = vmatpush1.msra.mxu0 0.0
    %2574 = vmatprep.subr.mxu0 0.0
    %2575 = vmatpush1.msra.mxu0 0.0
    %2576 = vmatprep.subr.mxu0 0.0
    %2577 = vmatpush1.msra.mxu0 0.0
    %2578 = vmatprep.subr.mxu0 0.0
    %2579 = vmatpush1.msra.mxu0 0.0
    %2580 = vmatprep.subr.mxu0 0.0
    %2581 = vmatpush1.msra.mxu0 0.0
    %2582 = vmatprep.subr.mxu0 0.0
    %2583 = vmatpush1.msra.mxu0 %v2548
    %2584 = vmatprep.subr.mxu0 0.0
    %2585 = vmatpush2.msra.mxu0 0.0
    %2586 = vmatprep.subr.mxu0 0.0
    %2587 = vmatpush2.msra.mxu0 0.0
    %2588 = vmatprep.subr.mxu0 0.0
    %2589 = vmatpush2.msra.mxu0 0.0
    %2590 = vmatprep.subr.mxu0 0.0
    %2591 = vmatpush2.msra.mxu0 0.0
    %2592 = vmatprep.subr.mxu0 0.0
    %2593 = vmatpush2.msra.mxu0 0.0
    %2594 = vmatprep.subr.mxu0 0.0
    %2595 = vmatpush2.msra.mxu0 0.0
    %2596 = vmatprep.subr.mxu0 0.0
    %2597 = vmatpush2.msra.mxu0 0.0
    %2598 = vmatprep.subr.mxu0 0.0
    %2599 = vmatpush2.msra.mxu0 0.0
    %2600 = vmatprep.subr.mxu0 0.0
    %2601 = vmatpush2.msra.mxu0 0.0
    %2602 = vmatprep.subr.mxu0 0.0
    %2603 = vmatpush2.msra.mxu0 0.0
    %2604 = vmatprep.subr.mxu0 0.0
    %2605 = vmatpush2.msra.mxu0 0.0
    %2606 = vmatprep.subr.mxu0 0.0
    %2607 = vmatpush2.msra.mxu0 0.0
    %2608 = vmatprep.subr.mxu0 0.0
    %2609 = vmatpush2.msra.mxu0 0.0
    %2610 = vmatprep.subr.mxu0 0.0
    %2611 = vmatpush2.msra.mxu0 0.0
    %2612 = vmatprep.subr.mxu0 0.0
    %2613 = vmatpush2.msra.mxu0 0.0
    %2614 = vmatprep.subr.mxu0 0.0
    %2615 = vmatpush2.msra.mxu0 0.0
    %2616 = vmatprep.mubr.f32.mxu0 0.0
    %2617 = vmatmul.mubr.f32.gmra.mxu0 %v2550
    %v2618 = vpop.f32.mrf.mxu0
    %v2619 = vadd.f32 0.0, %v2618
    %v2620 = vpop.f32.mrf.mxu0
    %2621 = vdwg.mxu0
    %v2623 = vrot.slane %v2442, 7
    %2625 = vrot.lane.b32.xlu0 %v2448, 64
    %v2626 = vpop.permute.xlu0 %2625
    %v2628 = vsel %vm2431, %v2623, 0
    %2630 = vmatprep.subr.mxu0 0.0
    %2631 = vmatpush1.msra.mxu0 0.0
    %2632 = vmatprep.subr.mxu0 0.0
    %2633 = vmatpush1.msra.mxu0 0.0
    %2634 = vmatprep.subr.mxu0 0.0
    %2635 = vmatpush1.msra.mxu0 0.0
    %2636 = vmatprep.subr.mxu0 0.0
    %2637 = vmatpush1.msra.mxu0 0.0
    %2638 = vmatprep.subr.mxu0 0.0
    %2639 = vmatpush1.msra.mxu0 0.0
    %2640 = vmatprep.subr.mxu0 0.0
    %2641 = vmatpush1.msra.mxu0 0.0
    %2642 = vmatprep.subr.mxu0 0.0
    %2643 = vmatpush1.msra.mxu0 0.0
    %2644 = vmatprep.subr.mxu0 0.0
    %2645 = vmatpush1.msra.mxu0 0.0
    %2646 = vmatprep.subr.mxu0 0.0
    %2647 = vmatpush1.msra.mxu0 0.0
    %2648 = vmatprep.subr.mxu0 0.0
    %2649 = vmatpush1.msra.mxu0 0.0
    %2650 = vmatprep.subr.mxu0 0.0
    %2651 = vmatpush1.msra.mxu0 0.0
    %2652 = vmatprep.subr.mxu0 0.0
    %2653 = vmatpush1.msra.mxu0 0.0
    %2654 = vmatprep.subr.mxu0 0.0
    %2655 = vmatpush1.msra.mxu0 0.0
    %2656 = vmatprep.subr.mxu0 0.0
    %2657 = vmatpush1.msra.mxu0 0.0
    %2658 = vmatprep.subr.mxu0 0.0
    %2659 = vmatpush1.msra.mxu0 0.0
    %2660 = vmatprep.subr.mxu0 0.0
    %2661 = vmatpush1.msra.mxu0 %v2626
    %2662 = vmatprep.subr.mxu0 0.0
    %2663 = vmatpush2.msra.mxu0 0.0
    %2664 = vmatprep.subr.mxu0 0.0
    %2665 = vmatpush2.msra.mxu0 0.0
    %2666 = vmatprep.subr.mxu0 0.0
    %2667 = vmatpush2.msra.mxu0 0.0
    %2668 = vmatprep.subr.mxu0 0.0
    %2669 = vmatpush2.msra.mxu0 0.0
    %2670 = vmatprep.subr.mxu0 0.0
    %2671 = vmatpush2.msra.mxu0 0.0
    %2672 = vmatprep.subr.mxu0 0.0
    %2673 = vmatpush2.msra.mxu0 0.0
    %2674 = vmatprep.subr.mxu0 0.0
    %2675 = vmatpush2.msra.mxu0 0.0
    %2676 = vmatprep.subr.mxu0 0.0
    %2677 = vmatpush2.msra.mxu0 0.0
    %2678 = vmatprep.subr.mxu0 0.0
    %2679 = vmatpush2.msra.mxu0 0.0
    %2680 = vmatprep.subr.mxu0 0.0
    %2681 = vmatpush2.msra.mxu0 0.0
    %2682 = vmatprep.subr.mxu0 0.0
    %2683 = vmatpush2.msra.mxu0 0.0
    %2684 = vmatprep.subr.mxu0 0.0
    %2685 = vmatpush2.msra.mxu0 0.0
    %2686 = vmatprep.subr.mxu0 0.0
    %2687 = vmatpush2.msra.mxu0 0.0
    %2688 = vmatprep.subr.mxu0 0.0
    %2689 = vmatpush2.msra.mxu0 0.0
    %2690 = vmatprep.subr.mxu0 0.0
    %2691 = vmatpush2.msra.mxu0 0.0
    %2692 = vmatprep.subr.mxu0 0.0
    %2693 = vmatpush2.msra.mxu0 0.0
    %2694 = vmatprep.mubr.f32.mxu0 0.0
    %2695 = vmatmul.mubr.f32.gmra.mxu0 %v2628
    %v2696 = vpop.f32.mrf.mxu0
    %v2697 = vadd.f32 %v2619, %v2696
    %v2698 = vpop.f32.mrf.mxu0
    %2699 = vdwg.mxu0
    %vm2700 = vcmp.ge.s32.totalorder %v2347, 16
    %vm2701 = vcmp.lt.s32.totalorder %v2347, 24
    %vm2702 = vmand %vm2700, %vm2701
    %v2703 = vsel %vm2702, 1.0, 0.0
    %v2704 = vmul.f32 %v2338, %v2703
    %v2706 = vsel %vm147, %v2704, 0
    %2708 = vmatprep.subr.mxu0 0.0
    %2709 = vmatpush1.xpose.msra.mxu0 0.0
    %2710 = vmatprep.subr.mxu0 0.0
    %2711 = vmatpush1.xpose.msra.mxu0 0.0
    %2712 = vmatprep.subr.mxu0 0.0
    %2713 = vmatpush1.xpose.msra.mxu0 0.0
    %2714 = vmatprep.subr.mxu0 0.0
    %2715 = vmatpush1.xpose.msra.mxu0 0.0
    %2716 = vmatprep.subr.mxu0 0.0
    %2717 = vmatpush1.xpose.msra.mxu0 0.0
    %2718 = vmatprep.subr.mxu0 0.0
    %2719 = vmatpush1.xpose.msra.mxu0 0.0
    %2720 = vmatprep.subr.mxu0 0.0
    %2721 = vmatpush1.xpose.msra.mxu0 0.0
    %2722 = vmatprep.subr.mxu0 0.0
    %2723 = vmatpush1.xpose.msra.mxu0 0.0
    %2724 = vmatprep.subr.mxu0 0.0
    %2725 = vmatpush1.xpose.msra.mxu0 0.0
    %2726 = vmatprep.subr.mxu0 0.0
    %2727 = vmatpush1.xpose.msra.mxu0 0.0
    %2728 = vmatprep.subr.mxu0 0.0
    %2729 = vmatpush1.xpose.msra.mxu0 0.0
    %2730 = vmatprep.subr.mxu0 0.0
    %2731 = vmatpush1.xpose.msra.mxu0 0.0
    %2732 = vmatprep.subr.mxu0 0.0
    %2733 = vmatpush1.xpose.msra.mxu0 0.0
    %2734 = vmatprep.subr.mxu0 0.0
    %2735 = vmatpush1.xpose.msra.mxu0 0.0
    %2736 = vmatprep.subr.mxu0 0.0
    %2737 = vmatpush1.xpose.msra.mxu0 0.0
    %2738 = vmatprep.subr.mxu0 0.0
    %2739 = vmatpush1.xpose.msra.mxu0 %v2359
    %2740 = vmatprep.subr.mxu0 0.0
    %2741 = vmatpush2.xpose.msra.mxu0 0.0
    %2742 = vmatprep.subr.mxu0 0.0
    %2743 = vmatpush2.xpose.msra.mxu0 0.0
    %2744 = vmatprep.subr.mxu0 0.0
    %2745 = vmatpush2.xpose.msra.mxu0 0.0
    %2746 = vmatprep.subr.mxu0 0.0
    %2747 = vmatpush2.xpose.msra.mxu0 0.0
    %2748 = vmatprep.subr.mxu0 0.0
    %2749 = vmatpush2.xpose.msra.mxu0 0.0
    %2750 = vmatprep.subr.mxu0 0.0
    %2751 = vmatpush2.xpose.msra.mxu0 0.0
    %2752 = vmatprep.subr.mxu0 0.0
    %2753 = vmatpush2.xpose.msra.mxu0 0.0
    %2754 = vmatprep.subr.mxu0 0.0
    %2755 = vmatpush2.xpose.msra.mxu0 0.0
    %2756 = vmatprep.subr.mxu0 0.0
    %2757 = vmatpush2.xpose.msra.mxu0 0.0
    %2758 = vmatprep.subr.mxu0 0.0
    %2759 = vmatpush2.xpose.msra.mxu0 0.0
    %2760 = vmatprep.subr.mxu0 0.0
    %2761 = vmatpush2.xpose.msra.mxu0 0.0
    %2762 = vmatprep.subr.mxu0 0.0
    %2763 = vmatpush2.xpose.msra.mxu0 0.0
    %2764 = vmatprep.subr.mxu0 0.0
    %2765 = vmatpush2.xpose.msra.mxu0 0.0
    %2766 = vmatprep.subr.mxu0 0.0
    %2767 = vmatpush2.xpose.msra.mxu0 0.0
    %2768 = vmatprep.subr.mxu0 0.0
    %2769 = vmatpush2.xpose.msra.mxu0 0.0
    %2770 = vmatprep.subr.mxu0 0.0
    %2771 = vmatpush2.xpose.msra.mxu0 0.0
    %2772 = vmatprep.mubr.f32.mxu0 0.0
    %2773 = vmatmul.mubr.f32.gmra.mxu0 %v2706
    %v2774 = vpop.f32.mrf.mxu0
    %v2775 = vadd.f32 0.0, %v2774
    %v2776 = vpop.f32.mrf.mxu0
    %2777 = vdwg.mxu0
    %v2778 = vsel %vm2431, %v2775, -inf
    %2779 = vmax.xlane.f32.xlu0 %v2778
    %v2780 = vpop.xlane.xlu0 %2779
    %v2781 = vsub.f32 %v2775, %v2780
    %v2782 = vmul.f32 %v2781, 1.442695
    %v2783 = vpow.pop %v2782
    %v2784 = vsel %vm2431, %v2783, 0.0
    %2785 = vadd.xlane.f32.xlu0 %v2784
    %v2786 = vpop.xlane.xlu0 %2785
    %v2787 = vrcp.pop %v2786
    %v2788 = vmul.f32 %v2783, %v2787
    %v2789 = vadd.f32 %v2538, %v2788
    %2791 = vrot.lane.b32.xlu0 %v2703, 64
    %v2792 = vpop.permute.xlu0 %2791
    %v2794 = vmul.f32 %v2338, %v2792
    %v2796 = vrot.slane %v2788, 7
    %2798 = vrot.lane.b32.xlu0 %v2794, 64
    %v2799 = vpop.permute.xlu0 %2798
    %v2801 = vsel %vm2431, %v2796, 0
    %2803 = vmatprep.subr.mxu0 0.0
    %2804 = vmatpush1.msra.mxu0 0.0
    %2805 = vmatprep.subr.mxu0 0.0
    %2806 = vmatpush1.msra.mxu0 0.0
    %2807 = vmatprep.subr.mxu0 0.0
    %2808 = vmatpush1.msra.mxu0 0.0
    %2809 = vmatprep.subr.mxu0 0.0
    %2810 = vmatpush1.msra.mxu0 0.0
    %2811 = vmatprep.subr.mxu0 0.0
    %2812 = vmatpush1.msra.mxu0 0.0
    %2813 = vmatprep.subr.mxu0 0.0
    %2814 = vmatpush1.msra.mxu0 0.0
    %2815 = vmatprep.subr.mxu0 0.0
    %2816 = vmatpush1.msra.mxu0 0.0
    %2817 = vmatprep.subr.mxu0 0.0
    %2818 = vmatpush1.msra.mxu0 0.0
    %2819 = vmatprep.subr.mxu0 0.0
    %2820 = vmatpush1.msra.mxu0 0.0
    %2821 = vmatprep.subr.mxu0 0.0
    %2822 = vmatpush1.msra.mxu0 0.0
    %2823 = vmatprep.subr.mxu0 0.0
    %2824 = vmatpush1.msra.mxu0 0.0
    %2825 = vmatprep.subr.mxu0 0.0
    %2826 = vmatpush1.msra.mxu0 0.0
    %2827 = vmatprep.subr.mxu0 0.0
    %2828 = vmatpush1.msra.mxu0 0.0
    %2829 = vmatprep.subr.mxu0 0.0
    %2830 = vmatpush1.msra.mxu0 0.0
    %2831 = vmatprep.subr.mxu0 0.0
    %2832 = vmatpush1.msra.mxu0 0.0
    %2833 = vmatprep.subr.mxu0 0.0
    %2834 = vmatpush1.msra.mxu0 %v2799
    %2835 = vmatprep.subr.mxu0 0.0
    %2836 = vmatpush2.msra.mxu0 0.0
    %2837 = vmatprep.subr.mxu0 0.0
    %2838 = vmatpush2.msra.mxu0 0.0
    %2839 = vmatprep.subr.mxu0 0.0
    %2840 = vmatpush2.msra.mxu0 0.0
    %2841 = vmatprep.subr.mxu0 0.0
    %2842 = vmatpush2.msra.mxu0 0.0
    %2843 = vmatprep.subr.mxu0 0.0
    %2844 = vmatpush2.msra.mxu0 0.0
    %2845 = vmatprep.subr.mxu0 0.0
    %2846 = vmatpush2.msra.mxu0 0.0
    %2847 = vmatprep.subr.mxu0 0.0
    %2848 = vmatpush2.msra.mxu0 0.0
    %2849 = vmatprep.subr.mxu0 0.0
    %2850 = vmatpush2.msra.mxu0 0.0
    %2851 = vmatprep.subr.mxu0 0.0
    %2852 = vmatpush2.msra.mxu0 0.0
    %2853 = vmatprep.subr.mxu0 0.0
    %2854 = vmatpush2.msra.mxu0 0.0
    %2855 = vmatprep.subr.mxu0 0.0
    %2856 = vmatpush2.msra.mxu0 0.0
    %2857 = vmatprep.subr.mxu0 0.0
    %2858 = vmatpush2.msra.mxu0 0.0
    %2859 = vmatprep.subr.mxu0 0.0
    %2860 = vmatpush2.msra.mxu0 0.0
    %2861 = vmatprep.subr.mxu0 0.0
    %2862 = vmatpush2.msra.mxu0 0.0
    %2863 = vmatprep.subr.mxu0 0.0
    %2864 = vmatpush2.msra.mxu0 0.0
    %2865 = vmatprep.subr.mxu0 0.0
    %2866 = vmatpush2.msra.mxu0 0.0
    %2867 = vmatprep.mubr.f32.mxu0 0.0
    %2868 = vmatmul.mubr.f32.gmra.mxu0 %v2801
    %v2869 = vpop.f32.mrf.mxu0
    %v2870 = vadd.f32 0.0, %v2869
    %v2871 = vpop.f32.mrf.mxu0
    %2872 = vdwg.mxu0
    %v2873 = vadd.f32 %v2697, %v2870
    %vm2874 = vcmp.ge.s32.totalorder %v2347, 24
    %vm2875 = vcmp.lt.s32.totalorder %v2347, 32
    %vm2876 = vmand %vm2874, %vm2875
    %v2877 = vsel %vm2876, 1.0, 0.0
    %v2878 = vmul.f32 %v2338, %v2877
    %v2880 = vsel %vm147, %v2878, 0
    %2882 = vmatprep.subr.mxu0 0.0
    %2883 = vmatpush1.xpose.msra.mxu0 0.0
    %2884 = vmatprep.subr.mxu0 0.0
    %2885 = vmatpush1.xpose.msra.mxu0 0.0
    %2886 = vmatprep.subr.mxu0 0.0
    %2887 = vmatpush1.xpose.msra.mxu0 0.0
    %2888 = vmatprep.subr.mxu0 0.0
    %2889 = vmatpush1.xpose.msra.mxu0 0.0
    %2890 = vmatprep.subr.mxu0 0.0
    %2891 = vmatpush1.xpose.msra.mxu0 0.0
    %2892 = vmatprep.subr.mxu0 0.0
    %2893 = vmatpush1.xpose.msra.mxu0 0.0
    %2894 = vmatprep.subr.mxu0 0.0
    %2895 = vmatpush1.xpose.msra.mxu0 0.0
    %2896 = vmatprep.subr.mxu0 0.0
    %2897 = vmatpush1.xpose.msra.mxu0 0.0
    %2898 = vmatprep.subr.mxu0 0.0
    %2899 = vmatpush1.xpose.msra.mxu0 0.0
    %2900 = vmatprep.subr.mxu0 0.0
    %2901 = vmatpush1.xpose.msra.mxu0 0.0
    %2902 = vmatprep.subr.mxu0 0.0
    %2903 = vmatpush1.xpose.msra.mxu0 0.0
    %2904 = vmatprep.subr.mxu0 0.0
    %2905 = vmatpush1.xpose.msra.mxu0 0.0
    %2906 = vmatprep.subr.mxu0 0.0
    %2907 = vmatpush1.xpose.msra.mxu0 0.0
    %2908 = vmatprep.subr.mxu0 0.0
    %2909 = vmatpush1.xpose.msra.mxu0 0.0
    %2910 = vmatprep.subr.mxu0 0.0
    %2911 = vmatpush1.xpose.msra.mxu0 0.0
    %2912 = vmatprep.subr.mxu0 0.0
    %2913 = vmatpush1.xpose.msra.mxu0 %v2359
    %2914 = vmatprep.subr.mxu0 0.0
    %2915 = vmatpush2.xpose.msra.mxu0 0.0
    %2916 = vmatprep.subr.mxu0 0.0
    %2917 = vmatpush2.xpose.msra.mxu0 0.0
    %2918 = vmatprep.subr.mxu0 0.0
    %2919 = vmatpush2.xpose.msra.mxu0 0.0
    %2920 = vmatprep.subr.mxu0 0.0
    %2921 = vmatpush2.xpose.msra.mxu0 0.0
    %2922 = vmatprep.subr.mxu0 0.0
    %2923 = vmatpush2.xpose.msra.mxu0 0.0
    %2924 = vmatprep.subr.mxu0 0.0
    %2925 = vmatpush2.xpose.msra.mxu0 0.0
    %2926 = vmatprep.subr.mxu0 0.0
    %2927 = vmatpush2.xpose.msra.mxu0 0.0
    %2928 = vmatprep.subr.mxu0 0.0
    %2929 = vmatpush2.xpose.msra.mxu0 0.0
    %2930 = vmatprep.subr.mxu0 0.0
    %2931 = vmatpush2.xpose.msra.mxu0 0.0
    %2932 = vmatprep.subr.mxu0 0.0
    %2933 = vmatpush2.xpose.msra.mxu0 0.0
    %2934 = vmatprep.subr.mxu0 0.0
    %2935 = vmatpush2.xpose.msra.mxu0 0.0
    %2936 = vmatprep.subr.mxu0 0.0
    %2937 = vmatpush2.xpose.msra.mxu0 0.0
    %2938 = vmatprep.subr.mxu0 0.0
    %2939 = vmatpush2.xpose.msra.mxu0 0.0
    %2940 = vmatprep.subr.mxu0 0.0
    %2941 = vmatpush2.xpose.msra.mxu0 0.0
    %2942 = vmatprep.subr.mxu0 0.0
    %2943 = vmatpush2.xpose.msra.mxu0 0.0
    %2944 = vmatprep.subr.mxu0 0.0
    %2945 = vmatpush2.xpose.msra.mxu0 0.0
    %2946 = vmatprep.mubr.f32.mxu0 0.0
    %2947 = vmatmul.mubr.f32.gmra.mxu0 %v2880
    %v2948 = vpop.f32.mrf.mxu0
    %v2949 = vadd.f32 0.0, %v2948
    %v2950 = vpop.f32.mrf.mxu0
    %2951 = vdwg.mxu0
    %v2952 = vsel %vm2431, %v2949, -inf
    %2953 = vmax.xlane.f32.xlu0 %v2952
    %v2954 = vpop.xlane.xlu0 %2953
    %v2955 = vsub.f32 %v2949, %v2954
    %v2956 = vmul.f32 %v2955, 1.442695
    %v2957 = vpow.pop %v2956
    %v2958 = vsel %vm2431, %v2957, 0.0
    %2959 = vadd.xlane.f32.xlu0 %v2958
    %v2960 = vpop.xlane.xlu0 %2959
    %v2961 = vrcp.pop %v2960
    %v2962 = vmul.f32 %v2957, %v2961
    %v2963 = vadd.f32 %v2789, %v2962
    %2965 = vrot.lane.b32.xlu0 %v2877, 64
    %v2966 = vpop.permute.xlu0 %2965
    %v2968 = vmul.f32 %v2338, %v2966
    %v2970 = vrot.slane %v2962, 7
    %2972 = vrot.lane.b32.xlu0 %v2968, 64
    %v2973 = vpop.permute.xlu0 %2972
    %v2975 = vsel %vm2431, %v2970, 0
    %2977 = vmatprep.subr.mxu0 0.0
    %2978 = vmatpush1.msra.mxu0 0.0
    %2979 = vmatprep.subr.mxu0 0.0
    %2980 = vmatpush1.msra.mxu0 0.0
    %2981 = vmatprep.subr.mxu0 0.0
    %2982 = vmatpush1.msra.mxu0 0.0
    %2983 = vmatprep.subr.mxu0 0.0
    %2984 = vmatpush1.msra.mxu0 0.0
    %2985 = vmatprep.subr.mxu0 0.0
    %2986 = vmatpush1.msra.mxu0 0.0
    %2987 = vmatprep.subr.mxu0 0.0
    %2988 = vmatpush1.msra.mxu0 0.0
    %2989 = vmatprep.subr.mxu0 0.0
    %2990 = vmatpush1.msra.mxu0 0.0
    %2991 = vmatprep.subr.mxu0 0.0
    %2992 = vmatpush1.msra.mxu0 0.0
    %2993 = vmatprep.subr.mxu0 0.0
    %2994 = vmatpush1.msra.mxu0 0.0
    %2995 = vmatprep.subr.mxu0 0.0
    %2996 = vmatpush1.msra.mxu0 0.0
    %2997 = vmatprep.subr.mxu0 0.0
    %2998 = vmatpush1.msra.mxu0 0.0
    %2999 = vmatprep.subr.mxu0 0.0
    %3000 = vmatpush1.msra.mxu0 0.0
    %3001 = vmatprep.subr.mxu0 0.0
    %3002 = vmatpush1.msra.mxu0 0.0
    %3003 = vmatprep.subr.mxu0 0.0
    %3004 = vmatpush1.msra.mxu0 0.0
    %3005 = vmatprep.subr.mxu0 0.0
    %3006 = vmatpush1.msra.mxu0 0.0
    %3007 = vmatprep.subr.mxu0 0.0
    %3008 = vmatpush1.msra.mxu0 %v2973
    %3009 = vmatprep.subr.mxu0 0.0
    %3010 = vmatpush2.msra.mxu0 0.0
    %3011 = vmatprep.subr.mxu0 0.0
    %3012 = vmatpush2.msra.mxu0 0.0
    %3013 = vmatprep.subr.mxu0 0.0
    %3014 = vmatpush2.msra.mxu0 0.0
    %3015 = vmatprep.subr.mxu0 0.0
    %3016 = vmatpush2.msra.mxu0 0.0
    %3017 = vmatprep.subr.mxu0 0.0
    %3018 = vmatpush2.msra.mxu0 0.0
    %3019 = vmatprep.subr.mxu0 0.0
    %3020 = vmatpush2.msra.mxu0 0.0
    %3021 = vmatprep.subr.mxu0 0.0
    %3022 = vmatpush2.msra.mxu0 0.0
    %3023 = vmatprep.subr.mxu0 0.0
    %3024 = vmatpush2.msra.mxu0 0.0
    %3025 = vmatprep.subr.mxu0 0.0
    %3026 = vmatpush2.msra.mxu0 0.0
    %3027 = vmatprep.subr.mxu0 0.0
    %3028 = vmatpush2.msra.mxu0 0.0
    %3029 = vmatprep.subr.mxu0 0.0
    %3030 = vmatpush2.msra.mxu0 0.0
    %3031 = vmatprep.subr.mxu0 0.0
    %3032 = vmatpush2.msra.mxu0 0.0
    %3033 = vmatprep.subr.mxu0 0.0
    %3034 = vmatpush2.msra.mxu0 0.0
    %3035 = vmatprep.subr.mxu0 0.0
    %3036 = vmatpush2.msra.mxu0 0.0
    %3037 = vmatprep.subr.mxu0 0.0
    %3038 = vmatpush2.msra.mxu0 0.0
    %3039 = vmatprep.subr.mxu0 0.0
    %3040 = vmatpush2.msra.mxu0 0.0
    %3041 = vmatprep.mubr.f32.mxu0 0.0
    %3042 = vmatmul.mubr.f32.gmra.mxu0 %v2975
    %v3043 = vpop.f32.mrf.mxu0
    %v3044 = vadd.f32 0.0, %v3043
    %v3045 = vpop.f32.mrf.mxu0
    %3046 = vdwg.mxu0
    %v3047 = vadd.f32 %v2873, %v3044
    %v3048 = vmul.f32 %v2963, 0.25
    %v3049 = vmul.f32 %v2343, %v2351
    %3051 = vrot.lane.b32.xlu0 %v2343, 96
    %v3052 = vpop.permute.xlu0 %3051
    %v3054 = vsel %vm147, %v3049, 0
    %v3056 = vsel %vm147, %v3052, 0
    %3058 = vmatprep.subr.mxu0 0.0
    %3059 = vmatpush1.xpose.msra.mxu0 0.0
    %3060 = vmatprep.subr.mxu0 0.0
    %3061 = vmatpush1.xpose.msra.mxu0 0.0
    %3062 = vmatprep.subr.mxu0 0.0
    %3063 = vmatpush1.xpose.msra.mxu0 0.0
    %3064 = vmatprep.subr.mxu0 0.0
    %3065 = vmatpush1.xpose.msra.mxu0 0.0
    %3066 = vmatprep.subr.mxu0 0.0
    %3067 = vmatpush1.xpose.msra.mxu0 0.0
    %3068 = vmatprep.subr.mxu0 0.0
    %3069 = vmatpush1.xpose.msra.mxu0 0.0
    %3070 = vmatprep.subr.mxu0 0.0
    %3071 = vmatpush1.xpose.msra.mxu0 0.0
    %3072 = vmatprep.subr.mxu0 0.0
    %3073 = vmatpush1.xpose.msra.mxu0 0.0
    %3074 = vmatprep.subr.mxu0 0.0
    %3075 = vmatpush1.xpose.msra.mxu0 0.0
    %3076 = vmatprep.subr.mxu0 0.0
    %3077 = vmatpush1.xpose.msra.mxu0 0.0
    %3078 = vmatprep.subr.mxu0 0.0
    %3079 = vmatpush1.xpose.msra.mxu0 0.0
    %3080 = vmatprep.subr.mxu0 0.0
    %3081 = vmatpush1.xpose.msra.mxu0 0.0
    %3082 = vmatprep.subr.mxu0 0.0
    %3083 = vmatpush1.xpose.msra.mxu0 0.0
    %3084 = vmatprep.subr.mxu0 0.0
    %3085 = vmatpush1.xpose.msra.mxu0 0.0
    %3086 = vmatprep.subr.mxu0 0.0
    %3087 = vmatpush1.xpose.msra.mxu0 0.0
    %3088 = vmatprep.subr.mxu0 0.0
    %3089 = vmatpush1.xpose.msra.mxu0 %v3056
    %3090 = vmatprep.subr.mxu0 0.0
    %3091 = vmatpush2.xpose.msra.mxu0 0.0
    %3092 = vmatprep.subr.mxu0 0.0
    %3093 = vmatpush2.xpose.msra.mxu0 0.0
    %3094 = vmatprep.subr.mxu0 0.0
    %3095 = vmatpush2.xpose.msra.mxu0 0.0
    %3096 = vmatprep.subr.mxu0 0.0
    %3097 = vmatpush2.xpose.msra.mxu0 0.0
    %3098 = vmatprep.subr.mxu0 0.0
    %3099 = vmatpush2.xpose.msra.mxu0 0.0
    %3100 = vmatprep.subr.mxu0 0.0
    %3101 = vmatpush2.xpose.msra.mxu0 0.0
    %3102 = vmatprep.subr.mxu0 0.0
    %3103 = vmatpush2.xpose.msra.mxu0 0.0
    %3104 = vmatprep.subr.mxu0 0.0
    %3105 = vmatpush2.xpose.msra.mxu0 0.0
    %3106 = vmatprep.subr.mxu0 0.0
    %3107 = vmatpush2.xpose.msra.mxu0 0.0
    %3108 = vmatprep.subr.mxu0 0.0
    %3109 = vmatpush2.xpose.msra.mxu0 0.0
    %3110 = vmatprep.subr.mxu0 0.0
    %3111 = vmatpush2.xpose.msra.mxu0 0.0
    %3112 = vmatprep.subr.mxu0 0.0
    %3113 = vmatpush2.xpose.msra.mxu0 0.0
    %3114 = vmatprep.subr.mxu0 0.0
    %3115 = vmatpush2.xpose.msra.mxu0 0.0
    %3116 = vmatprep.subr.mxu0 0.0
    %3117 = vmatpush2.xpose.msra.mxu0 0.0
    %3118 = vmatprep.subr.mxu0 0.0
    %3119 = vmatpush2.xpose.msra.mxu0 0.0
    %3120 = vmatprep.subr.mxu0 0.0
    %3121 = vmatpush2.xpose.msra.mxu0 0.0
    %3122 = vmatprep.mubr.f32.mxu0 0.0
    %3123 = vmatmul.mubr.f32.gmra.mxu0 %v3054
    %v3124 = vpop.f32.mrf.mxu0
    %v3125 = vadd.f32 0.0, %v3124
    %v3126 = vpop.f32.mrf.mxu0
    %3127 = vdwg.mxu0
    %v3128 = vsel %vm2431, %v3125, -inf
    %3129 = vmax.xlane.f32.xlu0 %v3128
    %v3130 = vpop.xlane.xlu0 %3129
    %v3131 = vsub.f32 %v3125, %v3130
    %v3132 = vmul.f32 %v3131, 1.442695
    %v3133 = vpow.pop %v3132
    %v3134 = vsel %vm2431, %v3133, 0.0
    %3135 = vadd.xlane.f32.xlu0 %v3134
    %v3136 = vpop.xlane.xlu0 %3135
    %v3137 = vrcp.pop %v3136
    %v3138 = vmul.f32 %v3133, %v3137
    %v3139 = vadd.f32 %v3138, 0.0
    %v3140 = vmul.f32 %v2343, %v2446
    %v3141 = vmul.f32 %v2343, %v2452
    %v3143 = vsel %vm147, %v3141, 0
    %3145 = vmatprep.subr.mxu0 0.0
    %3146 = vmatpush1.xpose.msra.mxu0 0.0
    %3147 = vmatprep.subr.mxu0 0.0
    %3148 = vmatpush1.xpose.msra.mxu0 0.0
    %3149 = vmatprep.subr.mxu0 0.0
    %3150 = vmatpush1.xpose.msra.mxu0 0.0
    %3151 = vmatprep.subr.mxu0 0.0
    %3152 = vmatpush1.xpose.msra.mxu0 0.0
    %3153 = vmatprep.subr.mxu0 0.0
    %3154 = vmatpush1.xpose.msra.mxu0 0.0
    %3155 = vmatprep.subr.mxu0 0.0
    %3156 = vmatpush1.xpose.msra.mxu0 0.0
    %3157 = vmatprep.subr.mxu0 0.0
    %3158 = vmatpush1.xpose.msra.mxu0 0.0
    %3159 = vmatprep.subr.mxu0 0.0
    %3160 = vmatpush1.xpose.msra.mxu0 0.0
    %3161 = vmatprep.subr.mxu0 0.0
    %3162 = vmatpush1.xpose.msra.mxu0 0.0
    %3163 = vmatprep.subr.mxu0 0.0
    %3164 = vmatpush1.xpose.msra.mxu0 0.0
    %3165 = vmatprep.subr.mxu0 0.0
    %3166 = vmatpush1.xpose.msra.mxu0 0.0
    %3167 = vmatprep.subr.mxu0 0.0
    %3168 = vmatpush1.xpose.msra.mxu0 0.0
    %3169 = vmatprep.subr.mxu0 0.0
    %3170 = vmatpush1.xpose.msra.mxu0 0.0
    %3171 = vmatprep.subr.mxu0 0.0
    %3172 = vmatpush1.xpose.msra.mxu0 0.0
    %3173 = vmatprep.subr.mxu0 0.0
    %3174 = vmatpush1.xpose.msra.mxu0 0.0
    %3175 = vmatprep.subr.mxu0 0.0
    %3176 = vmatpush1.xpose.msra.mxu0 %v3056
    %3177 = vmatprep.subr.mxu0 0.0
    %3178 = vmatpush2.xpose.msra.mxu0 0.0
    %3179 = vmatprep.subr.mxu0 0.0
    %3180 = vmatpush2.xpose.msra.mxu0 0.0
    %3181 = vmatprep.subr.mxu0 0.0
    %3182 = vmatpush2.xpose.msra.mxu0 0.0
    %3183 = vmatprep.subr.mxu0 0.0
    %3184 = vmatpush2.xpose.msra.mxu0 0.0
    %3185 = vmatprep.subr.mxu0 0.0
    %3186 = vmatpush2.xpose.msra.mxu0 0.0
    %3187 = vmatprep.subr.mxu0 0.0
    %3188 = vmatpush2.xpose.msra.mxu0 0.0
    %3189 = vmatprep.subr.mxu0 0.0
    %3190 = vmatpush2.xpose.msra.mxu0 0.0
    %3191 = vmatprep.subr.mxu0 0.0
    %3192 = vmatpush2.xpose.msra.mxu0 0.0
    %3193 = vmatprep.subr.mxu0 0.0
    %3194 = vmatpush2.xpose.msra.mxu0 0.0
    %3195 = vmatprep.subr.mxu0 0.0
    %3196 = vmatpush2.xpose.msra.mxu0 0.0
    %3197 = vmatprep.subr.mxu0 0.0
    %3198 = vmatpush2.xpose.msra.mxu0 0.0
    %3199 = vmatprep.subr.mxu0 0.0
    %3200 = vmatpush2.xpose.msra.mxu0 0.0
    %3201 = vmatprep.subr.mxu0 0.0
    %3202 = vmatpush2.xpose.msra.mxu0 0.0
    %3203 = vmatprep.subr.mxu0 0.0
    %3204 = vmatpush2.xpose.msra.mxu0 0.0
    %3205 = vmatprep.subr.mxu0 0.0
    %3206 = vmatpush2.xpose.msra.mxu0 0.0
    %3207 = vmatprep.subr.mxu0 0.0
    %3208 = vmatpush2.xpose.msra.mxu0 0.0
    %3209 = vmatprep.mubr.f32.mxu0 0.0
    %3210 = vmatmul.mubr.f32.gmra.mxu0 %v3143
    %v3211 = vpop.f32.mrf.mxu0
    %v3212 = vadd.f32 0.0, %v3211
    %v3213 = vpop.f32.mrf.mxu0
    %3214 = vdwg.mxu0
    %v3215 = vsel %vm2431, %v3212, -inf
    %3216 = vmax.xlane.f32.xlu0 %v3215
    %v3217 = vpop.xlane.xlu0 %3216
    %v3218 = vsub.f32 %v3212, %v3217
    %v3219 = vmul.f32 %v3218, 1.442695
    %v3220 = vpow.pop %v3219
    %v3221 = vsel %vm2431, %v3220, 0.0
    %3222 = vadd.xlane.f32.xlu0 %v3221
    %v3223 = vpop.xlane.xlu0 %3222
    %v3224 = vrcp.pop %v3223
    %v3225 = vmul.f32 %v3220, %v3224
    %v3226 = vadd.f32 %v3139, %v3225
    %v3227 = vmul.f32 %v2343, %v2541
    %v3229 = vrot.slane %v3225, 7
    %3231 = vrot.lane.b32.xlu0 %v3227, 64
    %v3232 = vpop.permute.xlu0 %3231
    %v3234 = vsel %vm2431, %v3229, 0
    %3236 = vmatprep.subr.mxu0 0.0
    %3237 = vmatpush1.msra.mxu0 0.0
    %3238 = vmatprep.subr.mxu0 0.0
    %3239 = vmatpush1.msra.mxu0 0.0
    %3240 = vmatprep.subr.mxu0 0.0
    %3241 = vmatpush1.msra.mxu0 0.0
    %3242 = vmatprep.subr.mxu0 0.0
    %3243 = vmatpush1.msra.mxu0 0.0
    %3244 = vmatprep.subr.mxu0 0.0
    %3245 = vmatpush1.msra.mxu0 0.0
    %3246 = vmatprep.subr.mxu0 0.0
    %3247 = vmatpush1.msra.mxu0 0.0
    %3248 = vmatprep.subr.mxu0 0.0
    %3249 = vmatpush1.msra.mxu0 0.0
    %3250 = vmatprep.subr.mxu0 0.0
    %3251 = vmatpush1.msra.mxu0 0.0
    %3252 = vmatprep.subr.mxu0 0.0
    %3253 = vmatpush1.msra.mxu0 0.0
    %3254 = vmatprep.subr.mxu0 0.0
    %3255 = vmatpush1.msra.mxu0 0.0
    %3256 = vmatprep.subr.mxu0 0.0
    %3257 = vmatpush1.msra.mxu0 0.0
    %3258 = vmatprep.subr.mxu0 0.0
    %3259 = vmatpush1.msra.mxu0 0.0
    %3260 = vmatprep.subr.mxu0 0.0
    %3261 = vmatpush1.msra.mxu0 0.0
    %3262 = vmatprep.subr.mxu0 0.0
    %3263 = vmatpush1.msra.mxu0 0.0
    %3264 = vmatprep.subr.mxu0 0.0
    %3265 = vmatpush1.msra.mxu0 0.0
    %3266 = vmatprep.subr.mxu0 0.0
    %3267 = vmatpush1.msra.mxu0 %v3232
    %3268 = vmatprep.subr.mxu0 0.0
    %3269 = vmatpush2.msra.mxu0 0.0
    %3270 = vmatprep.subr.mxu0 0.0
    %3271 = vmatpush2.msra.mxu0 0.0
    %3272 = vmatprep.subr.mxu0 0.0
    %3273 = vmatpush2.msra.mxu0 0.0
    %3274 = vmatprep.subr.mxu0 0.0
    %3275 = vmatpush2.msra.mxu0 0.0
    %3276 = vmatprep.subr.mxu0 0.0
    %3277 = vmatpush2.msra.mxu0 0.0
    %3278 = vmatprep.subr.mxu0 0.0
    %3279 = vmatpush2.msra.mxu0 0.0
    %3280 = vmatprep.subr.mxu0 0.0
    %3281 = vmatpush2.msra.mxu0 0.0
    %3282 = vmatprep.subr.mxu0 0.0
    %3283 = vmatpush2.msra.mxu0 0.0
    %3284 = vmatprep.subr.mxu0 0.0
    %3285 = vmatpush2.msra.mxu0 0.0
    %3286 = vmatprep.subr.mxu0 0.0
    %3287 = vmatpush2.msra.mxu0 0.0
    %3288 = vmatprep.subr.mxu0 0.0
    %3289 = vmatpush2.msra.mxu0 0.0
    %3290 = vmatprep.subr.mxu0 0.0
    %3291 = vmatpush2.msra.mxu0 0.0
    %3292 = vmatprep.subr.mxu0 0.0
    %3293 = vmatpush2.msra.mxu0 0.0
    %3294 = vmatprep.subr.mxu0 0.0
    %3295 = vmatpush2.msra.mxu0 0.0
    %3296 = vmatprep.subr.mxu0 0.0
    %3297 = vmatpush2.msra.mxu0 0.0
    %3298 = vmatprep.subr.mxu0 0.0
    %3299 = vmatpush2.msra.mxu0 0.0
    %3300 = vmatprep.mubr.f32.mxu0 0.0
    %3301 = vmatmul.mubr.f32.gmra.mxu0 %v3234
    %v3302 = vpop.f32.mrf.mxu0
    %v3303 = vadd.f32 0.0, %v3302
    %v3304 = vpop.f32.mrf.mxu0
    %3305 = vdwg.mxu0
    %v3307 = vrot.slane %v3138, 7
    %3309 = vrot.lane.b32.xlu0 %v3140, 64
    %v3310 = vpop.permute.xlu0 %3309
    %v3312 = vsel %vm2431, %v3307, 0
    %3314 = vmatprep.subr.mxu0 0.0
    %3315 = vmatpush1.msra.mxu0 0.0
    %3316 = vmatprep.subr.mxu0 0.0
    %3317 = vmatpush1.msra.mxu0 0.0
    %3318 = vmatprep.subr.mxu0 0.0
    %3319 = vmatpush1.msra.mxu0 0.0
    %3320 = vmatprep.subr.mxu0 0.0
    %3321 = vmatpush1.msra.mxu0 0.0
    %3322 = vmatprep.subr.mxu0 0.0
    %3323 = vmatpush1.msra.mxu0 0.0
    %3324 = vmatprep.subr.mxu0 0.0
    %3325 = vmatpush1.msra.mxu0 0.0
    %3326 = vmatprep.subr.mxu0 0.0
    %3327 = vmatpush1.msra.mxu0 0.0
    %3328 = vmatprep.subr.mxu0 0.0
    %3329 = vmatpush1.msra.mxu0 0.0
    %3330 = vmatprep.subr.mxu0 0.0
    %3331 = vmatpush1.msra.mxu0 0.0
    %3332 = vmatprep.subr.mxu0 0.0
    %3333 = vmatpush1.msra.mxu0 0.0
    %3334 = vmatprep.subr.mxu0 0.0
    %3335 = vmatpush1.msra.mxu0 0.0
    %3336 = vmatprep.subr.mxu0 0.0
    %3337 = vmatpush1.msra.mxu0 0.0
    %3338 = vmatprep.subr.mxu0 0.0
    %3339 = vmatpush1.msra.mxu0 0.0
    %3340 = vmatprep.subr.mxu0 0.0
    %3341 = vmatpush1.msra.mxu0 0.0
    %3342 = vmatprep.subr.mxu0 0.0
    %3343 = vmatpush1.msra.mxu0 0.0
    %3344 = vmatprep.subr.mxu0 0.0
    %3345 = vmatpush1.msra.mxu0 %v3310
    %3346 = vmatprep.subr.mxu0 0.0
    %3347 = vmatpush2.msra.mxu0 0.0
    %3348 = vmatprep.subr.mxu0 0.0
    %3349 = vmatpush2.msra.mxu0 0.0
    %3350 = vmatprep.subr.mxu0 0.0
    %3351 = vmatpush2.msra.mxu0 0.0
    %3352 = vmatprep.subr.mxu0 0.0
    %3353 = vmatpush2.msra.mxu0 0.0
    %3354 = vmatprep.subr.mxu0 0.0
    %3355 = vmatpush2.msra.mxu0 0.0
    %3356 = vmatprep.subr.mxu0 0.0
    %3357 = vmatpush2.msra.mxu0 0.0
    %3358 = vmatprep.subr.mxu0 0.0
    %3359 = vmatpush2.msra.mxu0 0.0
    %3360 = vmatprep.subr.mxu0 0.0
    %3361 = vmatpush2.msra.mxu0 0.0
    %3362 = vmatprep.subr.mxu0 0.0
    %3363 = vmatpush2.msra.mxu0 0.0
    %3364 = vmatprep.subr.mxu0 0.0
    %3365 = vmatpush2.msra.mxu0 0.0
    %3366 = vmatprep.subr.mxu0 0.0
    %3367 = vmatpush2.msra.mxu0 0.0
    %3368 = vmatprep.subr.mxu0 0.0
    %3369 = vmatpush2.msra.mxu0 0.0
    %3370 = vmatprep.subr.mxu0 0.0
    %3371 = vmatpush2.msra.mxu0 0.0
    %3372 = vmatprep.subr.mxu0 0.0
    %3373 = vmatpush2.msra.mxu0 0.0
    %3374 = vmatprep.subr.mxu0 0.0
    %3375 = vmatpush2.msra.mxu0 0.0
    %3376 = vmatprep.subr.mxu0 0.0
    %3377 = vmatpush2.msra.mxu0 0.0
    %3378 = vmatprep.mubr.f32.mxu0 0.0
    %3379 = vmatmul.mubr.f32.gmra.mxu0 %v3312
    %v3380 = vpop.f32.mrf.mxu0
    %v3381 = vadd.f32 %v3303, %v3380
    %v3382 = vpop.f32.mrf.mxu0
    %3383 = vdwg.mxu0
    %v3384 = vmul.f32 %v2343, %v2703
    %v3386 = vsel %vm147, %v3384, 0
    %3388 = vmatprep.subr.mxu0 0.0
    %3389 = vmatpush1.xpose.msra.mxu0 0.0
    %3390 = vmatprep.subr.mxu0 0.0
    %3391 = vmatpush1.xpose.msra.mxu0 0.0
    %3392 = vmatprep.subr.mxu0 0.0
    %3393 = vmatpush1.xpose.msra.mxu0 0.0
    %3394 = vmatprep.subr.mxu0 0.0
    %3395 = vmatpush1.xpose.msra.mxu0 0.0
    %3396 = vmatprep.subr.mxu0 0.0
    %3397 = vmatpush1.xpose.msra.mxu0 0.0
    %3398 = vmatprep.subr.mxu0 0.0
    %3399 = vmatpush1.xpose.msra.mxu0 0.0
    %3400 = vmatprep.subr.mxu0 0.0
    %3401 = vmatpush1.xpose.msra.mxu0 0.0
    %3402 = vmatprep.subr.mxu0 0.0
    %3403 = vmatpush1.xpose.msra.mxu0 0.0
    %3404 = vmatprep.subr.mxu0 0.0
    %3405 = vmatpush1.xpose.msra.mxu0 0.0
    %3406 = vmatprep.subr.mxu0 0.0
    %3407 = vmatpush1.xpose.msra.mxu0 0.0
    %3408 = vmatprep.subr.mxu0 0.0
    %3409 = vmatpush1.xpose.msra.mxu0 0.0
    %3410 = vmatprep.subr.mxu0 0.0
    %3411 = vmatpush1.xpose.msra.mxu0 0.0
    %3412 = vmatprep.subr.mxu0 0.0
    %3413 = vmatpush1.xpose.msra.mxu0 0.0
    %3414 = vmatprep.subr.mxu0 0.0
    %3415 = vmatpush1.xpose.msra.mxu0 0.0
    %3416 = vmatprep.subr.mxu0 0.0
    %3417 = vmatpush1.xpose.msra.mxu0 0.0
    %3418 = vmatprep.subr.mxu0 0.0
    %3419 = vmatpush1.xpose.msra.mxu0 %v3056
    %3420 = vmatprep.subr.mxu0 0.0
    %3421 = vmatpush2.xpose.msra.mxu0 0.0
    %3422 = vmatprep.subr.mxu0 0.0
    %3423 = vmatpush2.xpose.msra.mxu0 0.0
    %3424 = vmatprep.subr.mxu0 0.0
    %3425 = vmatpush2.xpose.msra.mxu0 0.0
    %3426 = vmatprep.subr.mxu0 0.0
    %3427 = vmatpush2.xpose.msra.mxu0 0.0
    %3428 = vmatprep.subr.mxu0 0.0
    %3429 = vmatpush2.xpose.msra.mxu0 0.0
    %3430 = vmatprep.subr.mxu0 0.0
    %3431 = vmatpush2.xpose.msra.mxu0 0.0
    %3432 = vmatprep.subr.mxu0 0.0
    %3433 = vmatpush2.xpose.msra.mxu0 0.0
    %3434 = vmatprep.subr.mxu0 0.0
    %3435 = vmatpush2.xpose.msra.mxu0 0.0
    %3436 = vmatprep.subr.mxu0 0.0
    %3437 = vmatpush2.xpose.msra.mxu0 0.0
    %3438 = vmatprep.subr.mxu0 0.0
    %3439 = vmatpush2.xpose.msra.mxu0 0.0
    %3440 = vmatprep.subr.mxu0 0.0
    %3441 = vmatpush2.xpose.msra.mxu0 0.0
    %3442 = vmatprep.subr.mxu0 0.0
    %3443 = vmatpush2.xpose.msra.mxu0 0.0
    %3444 = vmatprep.subr.mxu0 0.0
    %3445 = vmatpush2.xpose.msra.mxu0 0.0
    %3446 = vmatprep.subr.mxu0 0.0
    %3447 = vmatpush2.xpose.msra.mxu0 0.0
    %3448 = vmatprep.subr.mxu0 0.0
    %3449 = vmatpush2.xpose.msra.mxu0 0.0
    %3450 = vmatprep.subr.mxu0 0.0
    %3451 = vmatpush2.xpose.msra.mxu0 0.0
    %3452 = vmatprep.mubr.f32.mxu0 0.0
    %3453 = vmatmul.mubr.f32.gmra.mxu0 %v3386
    %v3454 = vpop.f32.mrf.mxu0
    %v3455 = vadd.f32 0.0, %v3454
    %v3456 = vpop.f32.mrf.mxu0
    %3457 = vdwg.mxu0
    %v3458 = vsel %vm2431, %v3455, -inf
    %3459 = vmax.xlane.f32.xlu0 %v3458
    %v3460 = vpop.xlane.xlu0 %3459
    %v3461 = vsub.f32 %v3455, %v3460
    %v3462 = vmul.f32 %v3461, 1.442695
    %v3463 = vpow.pop %v3462
    %v3464 = vsel %vm2431, %v3463, 0.0
    %3465 = vadd.xlane.f32.xlu0 %v3464
    %v3466 = vpop.xlane.xlu0 %3465
    %v3467 = vrcp.pop %v3466
    %v3468 = vmul.f32 %v3463, %v3467
    %v3469 = vadd.f32 %v3226, %v3468
    %v3470 = vmul.f32 %v2343, %v2792
    %v3472 = vrot.slane %v3468, 7
    %3474 = vrot.lane.b32.xlu0 %v3470, 64
    %v3475 = vpop.permute.xlu0 %3474
    %v3477 = vsel %vm2431, %v3472, 0
    %3479 = vmatprep.subr.mxu0 0.0
    %3480 = vmatpush1.msra.mxu0 0.0
    %3481 = vmatprep.subr.mxu0 0.0
    %3482 = vmatpush1.msra.mxu0 0.0
    %3483 = vmatprep.subr.mxu0 0.0
    %3484 = vmatpush1.msra.mxu0 0.0
    %3485 = vmatprep.subr.mxu0 0.0
    %3486 = vmatpush1.msra.mxu0 0.0
    %3487 = vmatprep.subr.mxu0 0.0
    %3488 = vmatpush1.msra.mxu0 0.0
    %3489 = vmatprep.subr.mxu0 0.0
    %3490 = vmatpush1.msra.mxu0 0.0
    %3491 = vmatprep.subr.mxu0 0.0
    %3492 = vmatpush1.msra.mxu0 0.0
    %3493 = vmatprep.subr.mxu0 0.0
    %3494 = vmatpush1.msra.mxu0 0.0
    %3495 = vmatprep.subr.mxu0 0.0
    %3496 = vmatpush1.msra.mxu0 0.0
    %3497 = vmatprep.subr.mxu0 0.0
    %3498 = vmatpush1.msra.mxu0 0.0
    %3499 = vmatprep.subr.mxu0 0.0
    %3500 = vmatpush1.msra.mxu0 0.0
    %3501 = vmatprep.subr.mxu0 0.0
    %3502 = vmatpush1.msra.mxu0 0.0
    %3503 = vmatprep.subr.mxu0 0.0
    %3504 = vmatpush1.msra.mxu0 0.0
    %3505 = vmatprep.subr.mxu0 0.0
    %3506 = vmatpush1.msra.mxu0 0.0
    %3507 = vmatprep.subr.mxu0 0.0
    %3508 = vmatpush1.msra.mxu0 0.0
    %3509 = vmatprep.subr.mxu0 0.0
    %3510 = vmatpush1.msra.mxu0 %v3475
    %3511 = vmatprep.subr.mxu0 0.0
    %3512 = vmatpush2.msra.mxu0 0.0
    %3513 = vmatprep.subr.mxu0 0.0
    %3514 = vmatpush2.msra.mxu0 0.0
    %3515 = vmatprep.subr.mxu0 0.0
    %3516 = vmatpush2.msra.mxu0 0.0
    %3517 = vmatprep.subr.mxu0 0.0
    %3518 = vmatpush2.msra.mxu0 0.0
    %3519 = vmatprep.subr.mxu0 0.0
    %3520 = vmatpush2.msra.mxu0 0.0
    %3521 = vmatprep.subr.mxu0 0.0
    %3522 = vmatpush2.msra.mxu0 0.0
    %3523 = vmatprep.subr.mxu0 0.0
    %3524 = vmatpush2.msra.mxu0 0.0
    %3525 = vmatprep.subr.mxu0 0.0
    %3526 = vmatpush2.msra.mxu0 0.0
    %3527 = vmatprep.subr.mxu0 0.0
    %3528 = vmatpush2.msra.mxu0 0.0
    %3529 = vmatprep.subr.mxu0 0.0
    %3530 = vmatpush2.msra.mxu0 0.0
    %3531 = vmatprep.subr.mxu0 0.0
    %3532 = vmatpush2.msra.mxu0 0.0
    %3533 = vmatprep.subr.mxu0 0.0
    %3534 = vmatpush2.msra.mxu0 0.0
    %3535 = vmatprep.subr.mxu0 0.0
    %3536 = vmatpush2.msra.mxu0 0.0
    %3537 = vmatprep.subr.mxu0 0.0
    %3538 = vmatpush2.msra.mxu0 0.0
    %3539 = vmatprep.subr.mxu0 0.0
    %3540 = vmatpush2.msra.mxu0 0.0
    %3541 = vmatprep.subr.mxu0 0.0
    %3542 = vmatpush2.msra.mxu0 0.0
    %3543 = vmatprep.mubr.f32.mxu0 0.0
    %3544 = vmatmul.mubr.f32.gmra.mxu0 %v3477
    %v3545 = vpop.f32.mrf.mxu0
    %v3546 = vadd.f32 0.0, %v3545
    %v3547 = vpop.f32.mrf.mxu0
    %3548 = vdwg.mxu0
    %v3549 = vadd.f32 %v3381, %v3546
    %v3550 = vmul.f32 %v2343, %v2877
    %v3552 = vsel %vm147, %v3550, 0
    %3554 = vmatprep.subr.mxu0 0.0
    %3555 = vmatpush1.xpose.msra.mxu0 0.0
    %3556 = vmatprep.subr.mxu0 0.0
    %3557 = vmatpush1.xpose.msra.mxu0 0.0
    %3558 = vmatprep.subr.mxu0 0.0
    %3559 = vmatpush1.xpose.msra.mxu0 0.0
    %3560 = vmatprep.subr.mxu0 0.0
    %3561 = vmatpush1.xpose.msra.mxu0 0.0
    %3562 = vmatprep.subr.mxu0 0.0
    %3563 = vmatpush1.xpose.msra.mxu0 0.0
    %3564 = vmatprep.subr.mxu0 0.0
    %3565 = vmatpush1.xpose.msra.mxu0 0.0
    %3566 = vmatprep.subr.mxu0 0.0
    %3567 = vmatpush1.xpose.msra.mxu0 0.0
    %3568 = vmatprep.subr.mxu0 0.0
    %3569 = vmatpush1.xpose.msra.mxu0 0.0
    %3570 = vmatprep.subr.mxu0 0.0
    %3571 = vmatpush1.xpose.msra.mxu0 0.0
    %3572 = vmatprep.subr.mxu0 0.0
    %3573 = vmatpush1.xpose.msra.mxu0 0.0
    %3574 = vmatprep.subr.mxu0 0.0
    %3575 = vmatpush1.xpose.msra.mxu0 0.0
    %3576 = vmatprep.subr.mxu0 0.0
    %3577 = vmatpush1.xpose.msra.mxu0 0.0
    %3578 = vmatprep.subr.mxu0 0.0
    %3579 = vmatpush1.xpose.msra.mxu0 0.0
    %3580 = vmatprep.subr.mxu0 0.0
    %3581 = vmatpush1.xpose.msra.mxu0 0.0
    %3582 = vmatprep.subr.mxu0 0.0
    %3583 = vmatpush1.xpose.msra.mxu0 0.0
    %3584 = vmatprep.subr.mxu0 0.0
    %3585 = vmatpush1.xpose.msra.mxu0 %v3056
    %3586 = vmatprep.subr.mxu0 0.0
    %3587 = vmatpush2.xpose.msra.mxu0 0.0
    %3588 = vmatprep.subr.mxu0 0.0
    %3589 = vmatpush2.xpose.msra.mxu0 0.0
    %3590 = vmatprep.subr.mxu0 0.0
    %3591 = vmatpush2.xpose.msra.mxu0 0.0
    %3592 = vmatprep.subr.mxu0 0.0
    %3593 = vmatpush2.xpose.msra.mxu0 0.0
    %3594 = vmatprep.subr.mxu0 0.0
    %3595 = vmatpush2.xpose.msra.mxu0 0.0
    %3596 = vmatprep.subr.mxu0 0.0
    %3597 = vmatpush2.xpose.msra.mxu0 0.0
    %3598 = vmatprep.subr.mxu0 0.0
    %3599 = vmatpush2.xpose.msra.mxu0 0.0
    %3600 = vmatprep.subr.mxu0 0.0
    %3601 = vmatpush2.xpose.msra.mxu0 0.0
    %3602 = vmatprep.subr.mxu0 0.0
    %3603 = vmatpush2.xpose.msra.mxu0 0.0
    %3604 = vmatprep.subr.mxu0 0.0
    %3605 = vmatpush2.xpose.msra.mxu0 0.0
    %3606 = vmatprep.subr.mxu0 0.0
    %3607 = vmatpush2.xpose.msra.mxu0 0.0
    %3608 = vmatprep.subr.mxu0 0.0
    %3609 = vmatpush2.xpose.msra.mxu0 0.0
    %3610 = vmatprep.subr.mxu0 0.0
    %3611 = vmatpush2.xpose.msra.mxu0 0.0
    %3612 = vmatprep.subr.mxu0 0.0
    %3613 = vmatpush2.xpose.msra.mxu0 0.0
    %3614 = vmatprep.subr.mxu0 0.0
    %3615 = vmatpush2.xpose.msra.mxu0 0.0
    %3616 = vmatprep.subr.mxu0 0.0
    %3617 = vmatpush2.xpose.msra.mxu0 0.0
    %3618 = vmatprep.mubr.f32.mxu0 0.0
    %3619 = vmatmul.mubr.f32.gmra.mxu0 %v3552
    %v3620 = vpop.f32.mrf.mxu0
    %v3621 = vadd.f32 0.0, %v3620
    %v3622 = vpop.f32.mrf.mxu0
    %3623 = vdwg.mxu0
    %v3624 = vsel %vm2431, %v3621, -inf
    %3625 = vmax.xlane.f32.xlu0 %v3624
    %v3626 = vpop.xlane.xlu0 %3625
    %v3627 = vsub.f32 %v3621, %v3626
    %v3628 = vmul.f32 %v3627, 1.442695
    %v3629 = vpow.pop %v3628
    %v3630 = vsel %vm2431, %v3629, 0.0
    %3631 = vadd.xlane.f32.xlu0 %v3630
    %v3632 = vpop.xlane.xlu0 %3631
    %v3633 = vrcp.pop %v3632
    %v3634 = vmul.f32 %v3629, %v3633
    %v3635 = vadd.f32 %v3469, %v3634
    %v3636 = vmul.f32 %v2343, %v2966
    %v3638 = vrot.slane %v3634, 7
    %3640 = vrot.lane.b32.xlu0 %v3636, 64
    %v3641 = vpop.permute.xlu0 %3640
    %v3643 = vsel %vm2431, %v3638, 0
    %3645 = vmatprep.subr.mxu0 0.0
    %3646 = vmatpush1.msra.mxu0 0.0
    %3647 = vmatprep.subr.mxu0 0.0
    %3648 = vmatpush1.msra.mxu0 0.0
    %3649 = vmatprep.subr.mxu0 0.0
    %3650 = vmatpush1.msra.mxu0 0.0
    %3651 = vmatprep.subr.mxu0 0.0
    %3652 = vmatpush1.msra.mxu0 0.0
    %3653 = vmatprep.subr.mxu0 0.0
    %3654 = vmatpush1.msra.mxu0 0.0
    %3655 = vmatprep.subr.mxu0 0.0
    %3656 = vmatpush1.msra.mxu0 0.0
    %3657 = vmatprep.subr.mxu0 0.0
    %3658 = vmatpush1.msra.mxu0 0.0
    %3659 = vmatprep.subr.mxu0 0.0
    %3660 = vmatpush1.msra.mxu0 0.0
    %3661 = vmatprep.subr.mxu0 0.0
    %3662 = vmatpush1.msra.mxu0 0.0
    %3663 = vmatprep.subr.mxu0 0.0
    %3664 = vmatpush1.msra.mxu0 0.0
    %3665 = vmatprep.subr.mxu0 0.0
    %3666 = vmatpush1.msra.mxu0 0.0
    %3667 = vmatprep.subr.mxu0 0.0
    %3668 = vmatpush1.msra.mxu0 0.0
    %3669 = vmatprep.subr.mxu0 0.0
    %3670 = vmatpush1.msra.mxu0 0.0
    %3671 = vmatprep.subr.mxu0 0.0
    %3672 = vmatpush1.msra.mxu0 0.0
    %3673 = vmatprep.subr.mxu0 0.0
    %3674 = vmatpush1.msra.mxu0 0.0
    %3675 = vmatprep.subr.mxu0 0.0
    %3676 = vmatpush1.msra.mxu0 %v3641
    %3677 = vmatprep.subr.mxu0 0.0
    %3678 = vmatpush2.msra.mxu0 0.0
    %3679 = vmatprep.subr.mxu0 0.0
    %3680 = vmatpush2.msra.mxu0 0.0
    %3681 = vmatprep.subr.mxu0 0.0
    %3682 = vmatpush2.msra.mxu0 0.0
    %3683 = vmatprep.subr.mxu0 0.0
    %3684 = vmatpush2.msra.mxu0 0.0
    %3685 = vmatprep.subr.mxu0 0.0
    %3686 = vmatpush2.msra.mxu0 0.0
    %3687 = vmatprep.subr.mxu0 0.0
    %3688 = vmatpush2.msra.mxu0 0.0
    %3689 = vmatprep.subr.mxu0 0.0
    %3690 = vmatpush2.msra.mxu0 0.0
    %3691 = vmatprep.subr.mxu0 0.0
    %3692 = vmatpush2.msra.mxu0 0.0
    %3693 = vmatprep.subr.mxu0 0.0
    %3694 = vmatpush2.msra.mxu0 0.0
    %3695 = vmatprep.subr.mxu0 0.0
    %3696 = vmatpush2.msra.mxu0 0.0
    %3697 = vmatprep.subr.mxu0 0.0
    %3698 = vmatpush2.msra.mxu0 0.0
    %3699 = vmatprep.subr.mxu0 0.0
    %3700 = vmatpush2.msra.mxu0 0.0
    %3701 = vmatprep.subr.mxu0 0.0
    %3702 = vmatpush2.msra.mxu0 0.0
    %3703 = vmatprep.subr.mxu0 0.0
    %3704 = vmatpush2.msra.mxu0 0.0
    %3705 = vmatprep.subr.mxu0 0.0
    %3706 = vmatpush2.msra.mxu0 0.0
    %3707 = vmatprep.subr.mxu0 0.0
    %3708 = vmatpush2.msra.mxu0 0.0
    %3709 = vmatprep.mubr.f32.mxu0 0.0
    %3710 = vmatmul.mubr.f32.gmra.mxu0 %v3643
    %v3711 = vpop.f32.mrf.mxu0
    %v3712 = vadd.f32 0.0, %v3711
    %v3713 = vpop.f32.mrf.mxu0
    %3714 = vdwg.mxu0
    %v3715 = vadd.f32 %v3549, %v3712
    %v3716 = vmul.f32 %v3635, 0.25
    %3717 = vst.msk [vmem:[#allocation4] sm:$0xff] %vm2431, %v3048
    %3718 = vst.msk [vmem:[#allocation4 + $0x8] sm:$0xff] %vm2431, %v3716
    %v3720 = vrot.slane %v3715, 7
    %vm3722 = vcmask 1040384
    %v3723 = vsel %vm3722, %v3047, %v3720
    %v3724 = vlaneseq
    %v3725 = vshrl.u32 %v3724, 7
    %v3726 = vsub.s32 0, %v3725
    %v3727 = vrot.slane %v52, %v3726
    %v3729 = vsel %vm147, %v3723, 0
    %3731 = vmatprep.subr.mxu0 0.0
    %3732 = vmatpush1.msra.mxu0 0.0
    %3733 = vmatprep.subr.mxu0 0.0
    %3734 = vmatpush1.msra.mxu0 0.0
    %3735 = vmatprep.subr.mxu0 0.0
    %3736 = vmatpush1.msra.mxu0 0.0
    %3737 = vmatprep.subr.mxu0 0.0
    %3738 = vmatpush1.msra.mxu0 0.0
    %3739 = vmatprep.subr.mxu0 0.0
    %3740 = vmatpush1.msra.mxu0 0.0
    %3741 = vmatprep.subr.mxu0 0.0
    %3742 = vmatpush1.msra.mxu0 0.0
    %3743 = vmatprep.subr.mxu0 0.0
    %3744 = vmatpush1.msra.mxu0 0.0
    %3745 = vmatprep.subr.mxu0 0.0
    %3746 = vmatpush1.msra.mxu0 0.0
    %3747 = vmatprep.subr.mxu0 0.0
    %3748 = vmatpush1.msra.mxu0 0.0
    %3749 = vmatprep.subr.mxu0 0.0
    %3750 = vmatpush1.msra.mxu0 0.0
    %3751 = vmatprep.subr.mxu0 0.0
    %3752 = vmatpush1.msra.mxu0 0.0
    %3753 = vmatprep.subr.mxu0 0.0
    %3754 = vmatpush1.msra.mxu0 0.0
    %3755 = vmatprep.subr.mxu0 0.0
    %3756 = vmatpush1.msra.mxu0 %v43
    %3757 = vmatprep.subr.mxu0 0.0
    %3758 = vmatpush1.msra.mxu0 %v42
    %3759 = vmatprep.subr.mxu0 0.0
    %3760 = vmatpush1.msra.mxu0 %v41
    %3761 = vmatprep.subr.mxu0 0.0
    %3762 = vmatpush1.msra.mxu0 %v40
    %3763 = vmatprep.subr.mxu0 0.0
    %3764 = vmatpush2.msra.mxu0 0.0
    %3765 = vmatprep.subr.mxu0 0.0
    %3766 = vmatpush2.msra.mxu0 0.0
    %3767 = vmatprep.subr.mxu0 0.0
    %3768 = vmatpush2.msra.mxu0 0.0
    %3769 = vmatprep.subr.mxu0 0.0
    %3770 = vmatpush2.msra.mxu0 0.0
    %3771 = vmatprep.subr.mxu0 0.0
    %3772 = vmatpush2.msra.mxu0 0.0
    %3773 = vmatprep.subr.mxu0 0.0
    %3774 = vmatpush2.msra.mxu0 0.0
    %3775 = vmatprep.subr.mxu0 0.0
    %3776 = vmatpush2.msra.mxu0 0.0
    %3777 = vmatprep.subr.mxu0 0.0
    %3778 = vmatpush2.msra.mxu0 0.0
    %3779 = vmatprep.subr.mxu0 0.0
    %3780 = vmatpush2.msra.mxu0 0.0
    %3781 = vmatprep.subr.mxu0 0.0
    %3782 = vmatpush2.msra.mxu0 0.0
    %3783 = vmatprep.subr.mxu0 0.0
    %3784 = vmatpush2.msra.mxu0 0.0
    %3785 = vmatprep.subr.mxu0 0.0
    %3786 = vmatpush2.msra.mxu0 0.0
    %3787 = vmatprep.subr.mxu0 0.0
    %3788 = vmatpush2.msra.mxu0 0.0
    %3789 = vmatprep.subr.mxu0 0.0
    %3790 = vmatpush2.msra.mxu0 0.0
    %3791 = vmatprep.subr.mxu0 0.0
    %3792 = vmatpush2.msra.mxu0 0.0
    %3793 = vmatprep.subr.mxu0 0.0
    %3794 = vmatpush2.msra.mxu0 0.0
    %3795 = vmatprep.mubr.f32.mxu0 0.0
    %3796 = vmatmul.mubr.f32.gmra.mxu0 %v3729
    %v3797 = vpop.f32.mrf.mxu0
    %v3798 = vadd.f32 %v3727, %v3797
    %v3799 = vpop.f32.mrf.mxu0
    %3800 = vdwg.mxu0
    %v3801 = vlaneseq
    %v3802 = vshrl.u32 %v3801, 7
    %v3803 = vsub.s32 0, %v3802
    %v3804 = vrot.slane %v53, %v3803
    %v3806 = vsel %vm147, %v3798, 0
    %3808 = vmatprep.subr.mxu0 0.0
    %3809 = vmatpush1.msra.mxu0 0.0
    %3810 = vmatprep.subr.mxu0 0.0
    %3811 = vmatpush1.msra.mxu0 0.0
    %3812 = vmatprep.subr.mxu0 0.0
    %3813 = vmatpush1.msra.mxu0 0.0
    %3814 = vmatprep.subr.mxu0 0.0
    %3815 = vmatpush1.msra.mxu0 0.0
    %3816 = vmatprep.subr.mxu0 0.0
    %3817 = vmatpush1.msra.mxu0 0.0
    %3818 = vmatprep.subr.mxu0 0.0
    %3819 = vmatpush1.msra.mxu0 0.0
    %3820 = vmatprep.subr.mxu0 0.0
    %3821 = vmatpush1.msra.mxu0 0.0
    %3822 = vmatprep.subr.mxu0 0.0
    %3823 = vmatpush1.msra.mxu0 0.0
    %3824 = vmatprep.subr.mxu0 0.0
    %3825 = vmatpush1.msra.mxu0 0.0
    %3826 = vmatprep.subr.mxu0 0.0
    %3827 = vmatpush1.msra.mxu0 0.0
    %3828 = vmatprep.subr.mxu0 0.0
    %3829 = vmatpush1.msra.mxu0 0.0
    %3830 = vmatprep.subr.mxu0 0.0
    %3831 = vmatpush1.msra.mxu0 0.0
    %3832 = vmatprep.subr.mxu0 0.0
    %3833 = vmatpush1.msra.mxu0 %v47
    %3834 = vmatprep.subr.mxu0 0.0
    %3835 = vmatpush1.msra.mxu0 %v46
    %3836 = vmatprep.subr.mxu0 0.0
    %3837 = vmatpush1.msra.mxu0 %v45
    %3838 = vmatprep.subr.mxu0 0.0
    %3839 = vmatpush1.msra.mxu0 %v44
    %3840 = vmatprep.subr.mxu0 0.0
    %3841 = vmatpush2.msra.mxu0 0.0
    %3842 = vmatprep.subr.mxu0 0.0
    %3843 = vmatpush2.msra.mxu0 0.0
    %3844 = vmatprep.subr.mxu0 0.0
    %3845 = vmatpush2.msra.mxu0 0.0
    %3846 = vmatprep.subr.mxu0 0.0
    %3847 = vmatpush2.msra.mxu0 0.0
    %3848 = vmatprep.subr.mxu0 0.0
    %3849 = vmatpush2.msra.mxu0 0.0
    %3850 = vmatprep.subr.mxu0 0.0
    %3851 = vmatpush2.msra.mxu0 0.0
    %3852 = vmatprep.subr.mxu0 0.0
    %3853 = vmatpush2.msra.mxu0 0.0
    %3854 = vmatprep.subr.mxu0 0.0
    %3855 = vmatpush2.msra.mxu0 0.0
    %3856 = vmatprep.subr.mxu0 0.0
    %3857 = vmatpush2.msra.mxu0 0.0
    %3858 = vmatprep.subr.mxu0 0.0
    %3859 = vmatpush2.msra.mxu0 0.0
    %3860 = vmatprep.subr.mxu0 0.0
    %3861 = vmatpush2.msra.mxu0 0.0
    %3862 = vmatprep.subr.mxu0 0.0
    %3863 = vmatpush2.msra.mxu0 0.0
    %3864 = vmatprep.subr.mxu0 0.0
    %3865 = vmatpush2.msra.mxu0 0.0
    %3866 = vmatprep.subr.mxu0 0.0
    %3867 = vmatpush2.msra.mxu0 0.0
    %3868 = vmatprep.subr.mxu0 0.0
    %3869 = vmatpush2.msra.mxu0 0.0
    %3870 = vmatprep.subr.mxu0 0.0
    %3871 = vmatpush2.msra.mxu0 0.0
    %3872 = vmatprep.mubr.f32.mxu0 0.0
    %3873 = vmatmul.mubr.f32.gmra.mxu0 %v3806
    %v3874 = vpop.f32.mrf.mxu0
    %v3875 = vadd.f32 %v3804, %v3874
    %v3876 = vpop.f32.mrf.mxu0
    %3877 = vdwg.mxu0
    %v3878 = vmax.f32 %v3875, 0.0
    %v3879 = vlaneseq
    %v3880 = vshrl.u32 %v3879, 7
    %v3881 = vsub.s32 0, %v3880
    %v3882 = vrot.slane %v54, %v3881
    %v3884 = vsel %vm147, %v3878, 0
    %3886 = vmatprep.subr.mxu0 0.0
    %3887 = vmatpush1.msra.mxu0 0.0
    %3888 = vmatprep.subr.mxu0 0.0
    %3889 = vmatpush1.msra.mxu0 0.0
    %3890 = vmatprep.subr.mxu0 0.0
    %3891 = vmatpush1.msra.mxu0 0.0
    %3892 = vmatprep.subr.mxu0 0.0
    %3893 = vmatpush1.msra.mxu0 0.0
    %3894 = vmatprep.subr.mxu0 0.0
    %3895 = vmatpush1.msra.mxu0 0.0
    %3896 = vmatprep.subr.mxu0 0.0
    %3897 = vmatpush1.msra.mxu0 0.0
    %3898 = vmatprep.subr.mxu0 0.0
    %3899 = vmatpush1.msra.mxu0 0.0
    %3900 = vmatprep.subr.mxu0 0.0
    %3901 = vmatpush1.msra.mxu0 0.0
    %3902 = vmatprep.subr.mxu0 0.0
    %3903 = vmatpush1.msra.mxu0 0.0
    %3904 = vmatprep.subr.mxu0 0.0
    %3905 = vmatpush1.msra.mxu0 0.0
    %3906 = vmatprep.subr.mxu0 0.0
    %3907 = vmatpush1.msra.mxu0 0.0
    %3908 = vmatprep.subr.mxu0 0.0
    %3909 = vmatpush1.msra.mxu0 0.0
    %3910 = vmatprep.subr.mxu0 0.0
    %3911 = vmatpush1.msra.mxu0 %v51
    %3912 = vmatprep.subr.mxu0 0.0
    %3913 = vmatpush1.msra.mxu0 %v50
    %3914 = vmatprep.subr.mxu0 0.0
    %3915 = vmatpush1.msra.mxu0 %v49
    %3916 = vmatprep.subr.mxu0 0.0
    %3917 = vmatpush1.msra.mxu0 %v48
    %3918 = vmatprep.subr.mxu0 0.0
    %3919 = vmatpush2.msra.mxu0 0.0
    %3920 = vmatprep.subr.mxu0 0.0
    %3921 = vmatpush2.msra.mxu0 0.0
    %3922 = vmatprep.subr.mxu0 0.0
    %3923 = vmatpush2.msra.mxu0 0.0
    %3924 = vmatprep.subr.mxu0 0.0
    %3925 = vmatpush2.msra.mxu0 0.0
    %3926 = vmatprep.subr.mxu0 0.0
    %3927 = vmatpush2.msra.mxu0 0.0
    %3928 = vmatprep.subr.mxu0 0.0
    %3929 = vmatpush2.msra.mxu0 0.0
    %3930 = vmatprep.subr.mxu0 0.0
    %3931 = vmatpush2.msra.mxu0 0.0
    %3932 = vmatprep.subr.mxu0 0.0
    %3933 = vmatpush2.msra.mxu0 0.0
    %3934 = vmatprep.subr.mxu0 0.0
    %3935 = vmatpush2.msra.mxu0 0.0
    %3936 = vmatprep.subr.mxu0 0.0
    %3937 = vmatpush2.msra.mxu0 0.0
    %3938 = vmatprep.subr.mxu0 0.0
    %3939 = vmatpush2.msra.mxu0 0.0
    %3940 = vmatprep.subr.mxu0 0.0
    %3941 = vmatpush2.msra.mxu0 0.0
    %3942 = vmatprep.subr.mxu0 0.0
    %3943 = vmatpush2.msra.mxu0 0.0
    %3944 = vmatprep.subr.mxu0 0.0
    %3945 = vmatpush2.msra.mxu0 0.0
    %3946 = vmatprep.subr.mxu0 0.0
    %3947 = vmatpush2.msra.mxu0 0.0
    %3948 = vmatprep.subr.mxu0 0.0
    %3949 = vmatpush2.msra.mxu0 0.0
    %3950 = vmatprep.mubr.f32.mxu0 0.0
    %3951 = vmatmul.mubr.f32.gmra.mxu0 %v3884
    %v3952 = vpop.f32.mrf.mxu0
    %v3953 = vadd.f32 %v3882, %v3952
    %v3954 = vpop.f32.mrf.mxu0
    %3955 = vdwg.mxu0
    %vm3956 = vcmask 1024
    %3957 = vst.msk [vmem:[%s3] sm:$0x3] %vm3956, %v3953
    // Predicated region
    $region14: #{forward.1} parent=1 // pred_check
      _
    $region15: #{forward.1} parent=1 // pred_check_branch
      %3959 = sbr.rel (0) target = $region17
    $region16: #{forward.1} parent=1 // pred_region
      _
    $region17: #{forward.1} parent=1 // pred_fallthru
      _
    // Predicated region
    $region18: #{forward.1} parent=1 // pred_check
      _
    $region19: #{forward.1} parent=1 // pred_check_branch
      %3961 = sbr.rel (0) target = $region21
    $region20: #{forward.1} parent=1 // pred_region
      %s3963 = ssub.s32 256, 256
      %3964 = vsyncadd [#allocation5], %s3963
      %s3965 = sshll.u32 [#allocation4], 4
      %s3966 = int_to_ptr.vmem [resolvable:$true] %s3965
      %3971 = dma.vmem_to_hbm [thread:$0]  %s3966, 256, %s4, [#allocation5], 128, 128, 8
    $region21: #{forward.1} parent=1 // pred_fallthru
      _
    // Predicated region
    $region22: #{forward.1} parent=1 // pred_check
      _
    $region23: #{forward.1} parent=1 // pred_check_branch
      %3973 = sbr.rel (0) target = $region25
    $region24: #{forward.1} parent=1 // pred_region
      _
    $region25: #{forward.1} parent=1 // pred_fallthru
      _
    // Predicated region
    $region26: #{forward.1} parent=1 // pred_check
      _
    $region27: #{forward.1} parent=1 // pred_check_branch
      %3975 = sbr.rel (0) target = $region29
    $region28: #{forward.1} parent=1 // pred_region
      %3976 = dma.done [#allocation5], 256
    $region29: #{forward.1} parent=1 // pred_fallthru
      _
    %3977 = vsyncpa [#allocation5], 1

</llo_original>
